<compile_context>
chip_gen: v7x
topology: tpu7x:2x2x1
jax: 0.10.0
libtpu: 0.0.40
codegen_flags: <defaults>
</compile_context>

<pallas_src>
import functools

import jax
import jax.numpy as jnp
import numpy as np
from jax.experimental import pallas as pl
from jax.experimental.pallas import tpu as pltpu

EPS = 1e-5
LANE = 128


def _round_up(x, m):
    return (x + m - 1) // m * m


# ---------------------------------------------------------------------------
# VMEM budgeting / tile selection
# ---------------------------------------------------------------------------
def _vmem_budget():
    """~75% of the physical per-core VMEM (64 MiB v7x, 128 MiB v5e/v6e)."""
    try:
        cap = int(pltpu.get_tpu_info().vmem_capacity_bytes)
    except Exception:
        cap = 64 * 1024 * 1024  # conservative fallback (v7x-sized)
    return max(int(cap * 0.75), 32 * 1024 * 1024)


def _vmem_estimate(TH, W, Cinp, Cp, Cep):
    """Rough per-tile VMEM footprint (double-buffered IO + scratch + temps)."""
    f32, bf16 = 4, 2
    halo = TH + 2
    x_io = 2 * halo * W * Cinp * f32            # main + 2 halo-row x blocks, 2 buffers
    out_io = 2 * TH * W * Cep * f32             # output tile, 2 buffers
    y1_s = halo * W * Cp * bf16                 # bf16 conv1 scratch
    z_tmp = 2 * halo * W * 3 * Cp * bf16        # im2col value + shifted intermediates
    mm_tmp = TH * W * (2 * Cp * f32 + Cep * f32 + Cinp * bf16 + Cp * bf16)
    w_io = 2 * (Cinp * Cp + 9 * Cp * Cp + Cp * Cep) * bf16
    return int(1.25 * (x_io + out_io + y1_s + z_tmp + mm_tmp + w_io))


def _pick_block_h(H, W, Cinp, Cp, Cep, budget, max_rows=4096):
    """Largest divisor of H with TH*W <= max_rows fitting the VMEM budget."""
    best = 1
    for d in range(1, H + 1):
        if H % d:
            continue
        if d * W > max_rows:
            continue
        if _vmem_estimate(d, W, Cinp, Cp, Cep) <= budget:
            best = d
    return best


# ---------------------------------------------------------------------------
# Fused kernel: conv1(1x1)+bn+relu -> conv2(3x3)+bn+relu -> conv3(1x1)+bn+res+relu
# ---------------------------------------------------------------------------
def _make_fused_bottleneck_kernel(H, W, TH, Cinp, Cp, Cep):
    def kernel(x_ref, xt_ref, xb_ref,
               w1_ref, s1_ref, b1_ref,
               w2_ref, s2_ref, b2_ref,
               w3_ref, s3_ref, b3_ref,
               o_ref, y1_ref):
        # x_ref : (TH, W, Cinp)  main rows of batch n (residual + conv1 input)
        # xt_ref: (1, W, Cinp)   image row row0-1 (clamped at top border)
        # xb_ref: (1, W, Cinp)   image row row0+TH (clamped at bottom border)
        # o_ref : (TH, W, Cep)   output row tile
        # y1_ref: (TH+2, W, Cp)  bf16 VMEM scratch: conv1 output + vertical halo
        h = pl.program_id(1)
        nh = pl.num_programs(1)

        w1 = w1_ref[...]                                     # (Cinp, Cp) bf16

        def conv1_bn_relu(x3d, nrows):
            xs = x3d.reshape(nrows * W, Cinp).astype(jnp.bfloat16)
            y = jnp.dot(xs, w1, preferred_element_type=jnp.float32)
            y = jnp.maximum(y * s1_ref[...] + b1_ref[...], 0.0)
            return y.astype(jnp.bfloat16).reshape(nrows, W, Cp)

        # ---- stage 1: 1x1 conv + bn1 + relu, into bf16 VMEM scratch ---------
        x_main = x_ref[...]                                  # (TH, W, Cinp)
        y1_ref[pl.ds(1, TH), :, :] = conv1_bn_relu(x_main, TH)

        # top halo row (image row row0-1, or zero pad of conv2's input)
        @pl.when(h > 0)
        def _():
            y1_ref[pl.ds(0, 1), :, :] = conv1_bn_relu(xt_ref[...], 1)

        @pl.when(h == 0)
        def _():
            y1_ref[pl.ds(0, 1), :, :] = jnp.zeros((1, W, Cp), jnp.bfloat16)

        # bottom halo row (image row row0+TH, or zero pad)
        @pl.when(h < nh - 1)
        def _():
            y1_ref[pl.ds(TH + 1, 1), :, :] = conv1_bn_relu(xb_ref[...], 1)

        @pl.when(h == nh - 1)
        def _():
            y1_ref[pl.ds(TH + 1, 1), :, :] = jnp.zeros((1, W, Cp), jnp.bfloat16)

        # ---- stage 2: 3x3 conv (pad=1) + bn2 + relu --------------------------
        # im2col along width: z[r, w, kw*Cp:(kw+1)*Cp] = y1[r, w+kw-1, :]
        # (zero-padded at the image's left/right borders), then 3 matmuls with
        # K = 3*Cp (one per kh) instead of 9 with K = Cp.
        y1 = y1_ref[...]                                     # (TH+2, W, Cp) bf16
        zc = jnp.zeros((TH + 2, 1, Cp), jnp.bfloat16)
        z = jnp.concatenate(
            [jnp.concatenate([zc, y1[:, :W - 1, :]], axis=1),   # kw=0 -> w-1
             y1,                                                # kw=1 -> w
             jnp.concatenate([y1[:, 1:, :], zc], axis=1)],      # kw=2 -> w+1
            axis=2)                                             # (TH+2, W, 3*Cp)

        acc = jnp.dot(z[0:TH].reshape(TH * W, 3 * Cp), w2_ref[0],
                      preferred_element_type=jnp.float32)
        acc = acc + jnp.dot(z[1:TH + 1].reshape(TH * W, 3 * Cp), w2_ref[1],
                            preferred_element_type=jnp.float32)
        acc = acc + jnp.dot(z[2:TH + 2].reshape(TH * W, 3 * Cp), w2_ref[2],
                            preferred_element_type=jnp.float32)
        y2 = jnp.maximum(acc * s2_ref[...] + b2_ref[...], 0.0).astype(jnp.bfloat16)

        # ---- stage 3: 1x1 conv + bn3 + identity residual + relu --------------
        y3 = jnp.dot(y2, w3_ref[...], preferred_element_type=jnp.float32)
        res = x_main.reshape(TH * W, Cinp).astype(jnp.float32)  # Cinp == Cep
        y3 = jnp.maximum(y3 * s3_ref[...] + b3_ref[...] + res, 0.0)
        o_ref[...] = y3.reshape(TH, W, Cep).astype(o_ref.dtype)

    return kernel


# ---------------------------------------------------------------------------
# Wrapper
# ---------------------------------------------------------------------------
def bottleneck_forward(x, params, *, block_h=None):
    """Fused Bottleneck forward. x: (N, H, W, Cin) NHWC, float32 or bfloat16."""
    N, H, W, Cin = x.shape
    C = params["w1"].shape[1]
    Ce = params["w3"].shape[1]
    assert Cin == Ce, "identity residual requires in_channel == out_channel*4"

    Cp = _round_up(C, LANE)
    Cep = _round_up(Ce, LANE)
    Cinp = _round_up(Cin, LANE)
    assert Cinp == Cep  # since Cin == Ce

    # Channel padding (lane-dense MXU/store shapes).  Real ResNet-152 channel
    # counts (64..2048) are already multiples of 128, so this is a no-op there.
    x_k = x if Cinp == Cin else jnp.pad(x, ((0, 0), (0, 0), (0, 0), (0, Cinp - Cin)))

    w1 = jnp.pad(params["w1"], ((0, Cinp - Cin), (0, Cp - C))).astype(jnp.bfloat16)
    w2 = jnp.pad(params["w2"], ((0, 0), (0, 0), (0, Cp - C), (0, Cp - C))).astype(jnp.bfloat16)
    w2 = w2.reshape(3, 3 * Cp, Cp)          # (kh, kw*Cin, Cout): kw folded into K
    w3 = jnp.pad(params["w3"], ((0, Cp - C), (0, Cep - Ce))).astype(jnp.bfloat16)
    s1 = jnp.pad(params["s1"], (0, Cp - C)).reshape(1, Cp)
    b1 = jnp.pad(params["b1"], (0, Cp - C)).reshape(1, Cp)
    s2 = jnp.pad(params["s2"], (0, Cp - C)).reshape(1, Cp)
    b2 = jnp.pad(params["b2"], (0, Cp - C)).reshape(1, Cp)
    s3 = jnp.pad(params["s3"], (0, Cep - Ce)).reshape(1, Cep)
    b3 = jnp.pad(params["b3"], (0, Cep - Ce)).reshape(1, Cep)

    budget = _vmem_budget()
    TH = _pick_block_h(H, W, Cinp, Cp, Cep, budget) if block_h is None else block_h
    assert H % TH == 0

    kernel = _make_fused_bottleneck_kernel(H, W, TH, Cinp, Cp, Cep)

    # x is passed three times: the main TH-row block, plus two single-row halo
    # blocks whose H block-index (block size 1 => element row index) is clamped
    # at the image borders (the fetched row is unused there; the y1 halo row is
    # zeroed in-kernel, since conv2's pad=1 applies to conv1's OUTPUT).
    out_p = pl.pallas_call(
        kernel,
        out_shape=jax.ShapeDtypeStruct((N, H, W, Cep), x.dtype),
        grid=(N, H // TH),
        in_specs=[
            pl.BlockSpec((None, TH, W, Cinp), lambda n, h: (n, h, 0, 0)),      # x main
            pl.BlockSpec((None, 1, W, Cinp),
                         lambda n, h: (n, jnp.maximum(h * TH - 1, 0), 0, 0)),  # top halo row
            pl.BlockSpec((None, 1, W, Cinp),
                         lambda n, h: (n, jnp.minimum((h + 1) * TH, H - 1), 0, 0)),  # bottom halo row
            pl.BlockSpec((Cinp, Cp), lambda n, h: (0, 0)),                     # w1
            pl.BlockSpec((1, Cp), lambda n, h: (0, 0)),                        # s1
            pl.BlockSpec((1, Cp), lambda n, h: (0, 0)),                        # b1
            pl.BlockSpec((3, 3 * Cp, Cp), lambda n, h: (0, 0, 0)),             # w2
            pl.BlockSpec((1, Cp), lambda n, h: (0, 0)),                        # s2
            pl.BlockSpec((1, Cp), lambda n, h: (0, 0)),                        # b2
            pl.BlockSpec((Cp, Cep), lambda n, h: (0, 0)),                      # w3
            pl.BlockSpec((1, Cep), lambda n, h: (0, 0)),                       # s3
            pl.BlockSpec((1, Cep), lambda n, h: (0, 0)),                       # b3
        ],
        out_specs=pl.BlockSpec((None, TH, W, Cep), lambda n, h: (n, h, 0, 0)),
        scratch_shapes=[pltpu.VMEM((TH + 2, W, Cp), jnp.bfloat16)],
        compiler_params=pltpu.CompilerParams(
            dimension_semantics=("parallel", "parallel"),
            vmem_limit_bytes=budget,
        ),
    )(x_k, x_k, x_k, w1, s1, b1, w2, s2, b2, w3, s3, b3)

    if Cep != Ce:
        out_p = out_p[..., :Ce]
    return out_p


def bottleneck_forward_nchw(x_nchw, params):
    """PyTorch-layout (NCHW) interface; prefer the NHWC entry point in a full net."""
    y = bottleneck_forward(jnp.transpose(x_nchw, (0, 2, 3, 1)), params)
    return jnp.transpose(y, (0, 3, 1, 2))


# ---------------------------------------------------------------------------
# Parameters (deterministic, synthetic) + folded inference-mode BN
# ---------------------------------------------------------------------------
def fold_bn(gamma, beta, mean, var):
    scale = gamma / jnp.sqrt(var + EPS)
    bias = beta - mean * scale
    return scale, bias


def init_params(key, in_channel, out_channel):
    expansion = 4
    C, Cin, Ce = out_channel, in_channel, out_channel * expansion
    kw1, kw2, kw3, kbn1, kbn2, kbn3 = jax.random.split(key, 6)

    # conv weights in torch layout (O, I, kh, kw)
    w1_t = 0.1 * jax.random.normal(kw1, (C, Cin, 1, 1), jnp.float32)
    w2_t = 0.1 * jax.random.normal(kw2, (C, C, 3, 3), jnp.float32)
    w3_t = 0.1 * jax.random.normal(kw3, (Ce, C, 1, 1), jnp.float32)

    def bn_params(k, c):
        kg, kb, km, kv = jax.random.split(k, 4)
        gamma = 1.0 + 0.1 * jax.random.normal(kg, (c,), jnp.float32)
        beta = 0.1 * jax.random.normal(kb, (c,), jnp.float32)
        mean = 0.1 * jax.random.normal(km, (c,), jnp.float32)
        var = 1.0 + 0.1 * jax.random.uniform(kv, (c,), jnp.float32)
        return gamma, beta, mean, var

    s1, b1 = fold_bn(*bn_params(kbn1, C))
    s2, b2 = fold_bn(*bn_params(kbn2, C))
    s3, b3 = fold_bn(*bn_params(kbn3, Ce))

    return {
        "w1": jnp.transpose(w1_t[:, :, 0, 0], (1, 0)),  # (Cin, C)
        "w2": jnp.transpose(w2_t, (2, 3, 1, 0)),        # (3, 3, C, C) HWIO
        "w3": jnp.transpose(w3_t[:, :, 0, 0], (1, 0)),  # (C, 4C)
        "s1": s1, "b1": b1, "s2": s2, "b2": b2, "s3": s3, "b3": b3,
    }


# ---------------------------------------------------------------------------
# Pure-JAX reference (NHWC) for correctness check
# ---------------------------------------------------------------------------
def bottleneck_ref(x, params):
    dn = ("NHWC", "HWIO", "NHWC")
    Cin = x.shape[-1]
    C = params["w1"].shape[1]
    Ce = params["w3"].shape[1]
    w1 = params["w1"].reshape(1, 1, Cin, C)
    w3 = params["w3"].reshape(1, 1, C, Ce)

    y = jax.lax.conv_general_dilated(x, w1, (1, 1), "VALID", dimension_numbers=dn)
    y = jnp.maximum(y * params["s1"] + params["b1"], 0.0)
    y = jax.lax.conv_general_dilated(y, params["w2"], (1, 1), ((1, 1), (1, 1)),
                                     dimension_numbers=dn)
    y = jnp.maximum(y * params["s2"] + params["b2"], 0.0)
    y = jax.lax.conv_general_dilated(y, w3, (1, 1), "VALID", dimension_numbers=dn)
    y = jnp.maximum(y * params["s3"] + params["b3"] + x, 0.0)
    return y


# ---------------------------------------------------------------------------
if __name__ == "__main__":
    key = jax.random.PRNGKey(0)
    k_x, k_p = jax.random.split(key)

    # Bottleneck(in_channel=16, out_channel=4): expansion 4 -> identity residual OK.
    N, H, W = 2, 16, 16
    out_channel = 4
    in_channel = out_channel * 4

    params = init_params(k_p, in_channel, out_channel)
    # NHWC activations (channels on the TPU lane dim); bottleneck_forward_nchw
    # provides the PyTorch NCHW interface.
    x = jax.random.normal(k_x, (N, H, W, in_channel), jnp.float32)

    ref = bottleneck_ref(x, params)

    # 1) Auto-tiled config (VMEM-budget-derived TH; single row tile at this size).
    out = jax.block_until_ready(jax.jit(bottleneck_forward)(x, params))
    assert out.shape == (N, H, W, out_channel * 4)
    np.testing.assert_allclose(np.asarray(out), np.asarray(ref), rtol=2e-2, atol=2e-2)

    # 2) Multi-row-tile config: exercises interior and border halo paths.
    out4 = jax.block_until_ready(
        jax.jit(functools.partial(bottleneck_forward, block_h=4))(x, params))
    np.testing.assert_allclose(np.asarray(out4), np.asarray(ref), rtol=2e-2, atol=2e-2)

    print("KERNEL_OK")
</pallas_src>

<mosaic_0001>
module attributes {stable_mosaic.version = 11 : i64} {
  func.func @kernel(%arg0: i32, %arg1: i32, %arg2: memref<1x16x16x128xf32, #tpu.memory_space<vmem>>, %arg3: memref<1x1x16x128xf32, #tpu.memory_space<vmem>>, %arg4: memref<1x1x16x128xf32, #tpu.memory_space<vmem>>, %arg5: memref<128x128xbf16, #tpu.memory_space<vmem>>, %arg6: memref<1x128xf32, #tpu.memory_space<vmem>>, %arg7: memref<1x128xf32, #tpu.memory_space<vmem>>, %arg8: memref<3x384x128xbf16, #tpu.memory_space<vmem>>, %arg9: memref<1x128xf32, #tpu.memory_space<vmem>>, %arg10: memref<1x128xf32, #tpu.memory_space<vmem>>, %arg11: memref<128x128xbf16, #tpu.memory_space<vmem>>, %arg12: memref<1x128xf32, #tpu.memory_space<vmem>>, %arg13: memref<1x128xf32, #tpu.memory_space<vmem>>, %arg14: memref<1x16x16x128xf32, #tpu.memory_space<vmem>>, %arg15: memref<18x16x128xbf16, #tpu.memory_space<vmem>>) attributes {dimension_semantics = [#tpu.dimension_semantics<parallel>, #tpu.dimension_semantics<parallel>], iteration_bounds = array<i64: 2, 1>, scalar_prefetch = 0 : i64, scratch_operands = 1 : i64, tpu.core_type = #tpu.core_type<tc>, window_params = [{transform_indices = @transform_0, window_bounds = array<i64: 1, 16, 16, 128>}, {transform_indices = @transform_1, window_bounds = array<i64: 1, 1, 16, 128>}, {transform_indices = @transform_2, window_bounds = array<i64: 1, 1, 16, 128>}, {pipeline_mode = #tpu.pipeline_mode<synchronous>, transform_indices = @transform_3, window_bounds = array<i64: 128, 128>}, {pipeline_mode = #tpu.pipeline_mode<synchronous>, transform_indices = @transform_4, window_bounds = array<i64: 1, 128>}, {pipeline_mode = #tpu.pipeline_mode<synchronous>, transform_indices = @transform_5, window_bounds = array<i64: 1, 128>}, {pipeline_mode = #tpu.pipeline_mode<synchronous>, transform_indices = @transform_6, window_bounds = array<i64: 3, 384, 128>}, {pipeline_mode = #tpu.pipeline_mode<synchronous>, transform_indices = @transform_7, window_bounds = array<i64: 1, 128>}, {pipeline_mode = #tpu.pipeline_mode<synchronous>, transform_indices = @transform_8, window_bounds = array<i64: 1, 128>}, {pipeline_mode = #tpu.pipeline_mode<synchronous>, transform_indices = @transform_9, window_bounds = array<i64: 128, 128>}, {pipeline_mode = #tpu.pipeline_mode<synchronous>, transform_indices = @transform_10, window_bounds = array<i64: 1, 128>}, {pipeline_mode = #tpu.pipeline_mode<synchronous>, transform_indices = @transform_11, window_bounds = array<i64: 1, 128>}, {transform_indices = @transform_12, window_bounds = array<i64: 1, 16, 16, 128>}]} {
    %c0 = arith.constant 0 : index
    %c0_0 = arith.constant 0 : index
    %0 = vector.load %arg5[%c0, %c0_0] : memref<128x128xbf16, #tpu.memory_space<vmem>>, vector<128x128xbf16>
    %c0_1 = arith.constant 0 : index
    %c0_2 = arith.constant 0 : index
    %c0_3 = arith.constant 0 : index
    %c0_4 = arith.constant 0 : index
    %1 = vector.load %arg2[%c0_1, %c0_2, %c0_3, %c0_4] : memref<1x16x16x128xf32, #tpu.memory_space<vmem>>, vector<1x16x16x128xf32>
    %2 = vector.shape_cast %1 : vector<1x16x16x128xf32> to vector<16x16x128xf32>
    %3 = vector.shape_cast %2 : vector<16x16x128xf32> to vector<256x128xf32>
    %4 = arith.truncf %3 : vector<256x128xf32> to vector<256x128xbf16>
    %cst = arith.constant dense<0.000000e+00> : vector<256x128xf32>
    %5 = tpu.matmul %4, %0, %cst {dimension_numbers = #tpu.dot_dimension_numbers<[1], [0], [0], [1], [0, 0, 1, 1], [], []>} : vector<256x128xbf16>, vector<128x128xbf16>, vector<256x128xf32> -> vector<256x128xf32>
    %c0_5 = arith.constant 0 : index
    %c0_6 = arith.constant 0 : index
    %6 = vector.load %arg6[%c0_5, %c0_6] : memref<1x128xf32, #tpu.memory_space<vmem>>, vector<1x128xf32>
    %7 = vector.broadcast %6 : vector<1x128xf32> to vector<256x128xf32>
    %8 = arith.mulf %5, %7 : vector<256x128xf32>
    %c0_7 = arith.constant 0 : index
    %c0_8 = arith.constant 0 : index
    %9 = vector.load %arg7[%c0_7, %c0_8] : memref<1x128xf32, #tpu.memory_space<vmem>>, vector<1x128xf32>
    %10 = vector.broadcast %9 : vector<1x128xf32> to vector<256x128xf32>
    %11 = arith.addf %8, %10 : vector<256x128xf32>
    %cst_9 = arith.constant 0.000000e+00 : f32
    %12 = vector.broadcast %cst_9 : f32 to vector<256x128xf32>
    %13 = arith.maximumf %11, %12 : vector<256x128xf32>
    %14 = arith.truncf %13 : vector<256x128xf32> to vector<256x128xbf16>
    %15 = vector.shape_cast %14 : vector<256x128xbf16> to vector<16x16x128xbf16>
    %c1 = arith.constant 1 : index
    %c0_10 = arith.constant 0 : index
    %c0_11 = arith.constant 0 : index
    %16 = vector.load %arg15[%c1, %c0_10, %c0_11] : memref<18x16x128xbf16, #tpu.memory_space<vmem>>, vector<16x16x128xbf16>
    tpu.vector_store %arg15[%c1, %c0_10, %c0_11], %15 {strides = array<i32>} : memref<18x16x128xbf16, #tpu.memory_space<vmem>>, vector<16x16x128xbf16>,
    %c0_i32 = arith.constant 0 : i32
    %17 = arith.cmpi sgt, %arg1, %c0_i32 : i32
    %18 = arith.extui %17 : i1 to i32
    %c0_i32_12 = arith.constant 0 : i32
    %19 = arith.cmpi ne, %18, %c0_i32_12 : i32
    scf.if %19 {
      %c0_51 = arith.constant 0 : index
      %c0_52 = arith.constant 0 : index
      %c0_53 = arith.constant 0 : index
      %c0_54 = arith.constant 0 : index
      %78 = vector.load %arg3[%c0_51, %c0_52, %c0_53, %c0_54] : memref<1x1x16x128xf32, #tpu.memory_space<vmem>>, vector<1x1x16x128xf32>
      %79 = vector.shape_cast %78 : vector<1x1x16x128xf32> to vector<1x16x128xf32>
      %80 = vector.shape_cast %79 : vector<1x16x128xf32> to vector<16x128xf32>
      %81 = arith.truncf %80 : vector<16x128xf32> to vector<16x128xbf16>
      %cst_55 = arith.constant dense<0.000000e+00> : vector<16x128xf32>
      %82 = tpu.matmul %81, %0, %cst_55 {dimension_numbers = #tpu.dot_dimension_numbers<[1], [0], [0], [1], [0, 0, 1, 1], [], []>} : vector<16x128xbf16>, vector<128x128xbf16>, vector<16x128xf32> -> vector<16x128xf32>
      %c0_56 = arith.constant 0 : index
      %c0_57 = arith.constant 0 : index
      %83 = vector.load %arg6[%c0_56, %c0_57] : memref<1x128xf32, #tpu.memory_space<vmem>>, vector<1x128xf32>
      %84 = vector.broadcast %83 : vector<1x128xf32> to vector<16x128xf32>
      %85 = arith.mulf %82, %84 : vector<16x128xf32>
      %c0_58 = arith.constant 0 : index
      %c0_59 = arith.constant 0 : index
      %86 = vector.load %arg7[%c0_58, %c0_59] : memref<1x128xf32, #tpu.memory_space<vmem>>, vector<1x128xf32>
      %87 = vector.broadcast %86 : vector<1x128xf32> to vector<16x128xf32>
      %88 = arith.addf %85, %87 : vector<16x128xf32>
      %cst_60 = arith.constant 0.000000e+00 : f32
      %89 = vector.broadcast %cst_60 : f32 to vector<16x128xf32>
      %90 = arith.maximumf %88, %89 : vector<16x128xf32>
      %91 = arith.truncf %90 : vector<16x128xf32> to vector<16x128xbf16>
      %92 = vector.shape_cast %91 : vector<16x128xbf16> to vector<1x16x128xbf16>
      %c0_61 = arith.constant 0 : index
      %c0_62 = arith.constant 0 : index
      %c0_63 = arith.constant 0 : index
      %93 = vector.load %arg15[%c0_61, %c0_62, %c0_63] : memref<18x16x128xbf16, #tpu.memory_space<vmem>>, vector<1x16x128xbf16>
      tpu.vector_store %arg15[%c0_61, %c0_62, %c0_63], %92 {strides = array<i32>} : memref<18x16x128xbf16, #tpu.memory_space<vmem>>, vector<1x16x128xbf16>,
    } else {
    }
    %c0_i32_13 = arith.constant 0 : i32
    %20 = arith.cmpi eq, %arg1, %c0_i32_13 : i32
    %21 = arith.extui %20 : i1 to i32
    %c0_i32_14 = arith.constant 0 : i32
    %22 = arith.cmpi ne, %21, %c0_i32_14 : i32
    scf.if %22 {
      %cst_51 = arith.constant 0.000000e+00 : bf16
      %78 = vector.broadcast %cst_51 : bf16 to vector<1x16x128xbf16>
      %c0_52 = arith.constant 0 : index
      %c0_53 = arith.constant 0 : index
      %c0_54 = arith.constant 0 : index
      %79 = vector.load %arg15[%c0_52, %c0_53, %c0_54] : memref<18x16x128xbf16, #tpu.memory_space<vmem>>, vector<1x16x128xbf16>
      tpu.vector_store %arg15[%c0_52, %c0_53, %c0_54], %78 {strides = array<i32>} : memref<18x16x128xbf16, #tpu.memory_space<vmem>>, vector<1x16x128xbf16>,
    } else {
    }
    %c0_i32_15 = arith.constant 0 : i32
    %23 = arith.cmpi slt, %arg1, %c0_i32_15 : i32
    %24 = arith.extui %23 : i1 to i32
    %c0_i32_16 = arith.constant 0 : i32
    %25 = arith.cmpi ne, %24, %c0_i32_16 : i32
    scf.if %25 {
      %c0_51 = arith.constant 0 : index
      %c0_52 = arith.constant 0 : index
      %c0_53 = arith.constant 0 : index
      %c0_54 = arith.constant 0 : index
      %78 = vector.load %arg4[%c0_51, %c0_52, %c0_53, %c0_54] : memref<1x1x16x128xf32, #tpu.memory_space<vmem>>, vector<1x1x16x128xf32>
      %79 = vector.shape_cast %78 : vector<1x1x16x128xf32> to vector<1x16x128xf32>
      %80 = vector.shape_cast %79 : vector<1x16x128xf32> to vector<16x128xf32>
      %81 = arith.truncf %80 : vector<16x128xf32> to vector<16x128xbf16>
      %cst_55 = arith.constant dense<0.000000e+00> : vector<16x128xf32>
      %82 = tpu.matmul %81, %0, %cst_55 {dimension_numbers = #tpu.dot_dimension_numbers<[1], [0], [0], [1], [0, 0, 1, 1], [], []>} : vector<16x128xbf16>, vector<128x128xbf16>, vector<16x128xf32> -> vector<16x128xf32>
      %c0_56 = arith.constant 0 : index
      %c0_57 = arith.constant 0 : index
      %83 = vector.load %arg6[%c0_56, %c0_57] : memref<1x128xf32, #tpu.memory_space<vmem>>, vector<1x128xf32>
      %84 = vector.broadcast %83 : vector<1x128xf32> to vector<16x128xf32>
      %85 = arith.mulf %82, %84 : vector<16x128xf32>
      %c0_58 = arith.constant 0 : index
      %c0_59 = arith.constant 0 : index
      %86 = vector.load %arg7[%c0_58, %c0_59] : memref<1x128xf32, #tpu.memory_space<vmem>>, vector<1x128xf32>
      %87 = vector.broadcast %86 : vector<1x128xf32> to vector<16x128xf32>
      %88 = arith.addf %85, %87 : vector<16x128xf32>
      %cst_60 = arith.constant 0.000000e+00 : f32
      %89 = vector.broadcast %cst_60 : f32 to vector<16x128xf32>
      %90 = arith.maximumf %88, %89 : vector<16x128xf32>
      %91 = arith.truncf %90 : vector<16x128xf32> to vector<16x128xbf16>
      %92 = vector.shape_cast %91 : vector<16x128xbf16> to vector<1x16x128xbf16>
      %c17 = arith.constant 17 : index
      %c0_61 = arith.constant 0 : index
      %c0_62 = arith.constant 0 : index
      %93 = vector.load %arg15[%c17, %c0_61, %c0_62] : memref<18x16x128xbf16, #tpu.memory_space<vmem>>, vector<1x16x128xbf16>
      tpu.vector_store %arg15[%c17, %c0_61, %c0_62], %92 {strides = array<i32>} : memref<18x16x128xbf16, #tpu.memory_space<vmem>>, vector<1x16x128xbf16>,
    } else {
    }
    %c0_i32_17 = arith.constant 0 : i32
    %26 = arith.cmpi eq, %arg1, %c0_i32_17 : i32
    %27 = arith.extui %26 : i1 to i32
    %c0_i32_18 = arith.constant 0 : i32
    %28 = arith.cmpi ne, %27, %c0_i32_18 : i32
    scf.if %28 {
      %cst_51 = arith.constant 0.000000e+00 : bf16
      %78 = vector.broadcast %cst_51 : bf16 to vector<1x16x128xbf16>
      %c17 = arith.constant 17 : index
      %c0_52 = arith.constant 0 : index
      %c0_53 = arith.constant 0 : index
      %79 = vector.load %arg15[%c17, %c0_52, %c0_53] : memref<18x16x128xbf16, #tpu.memory_space<vmem>>, vector<1x16x128xbf16>
      tpu.vector_store %arg15[%c17, %c0_52, %c0_53], %78 {strides = array<i32>} : memref<18x16x128xbf16, #tpu.memory_space<vmem>>, vector<1x16x128xbf16>,
    } else {
    }
    %c0_19 = arith.constant 0 : index
    %c0_20 = arith.constant 0 : index
    %c0_21 = arith.constant 0 : index
    %29 = vector.load %arg15[%c0_19, %c0_20, %c0_21] : memref<18x16x128xbf16, #tpu.memory_space<vmem>>, vector<18x16x128xbf16>
    %cst_22 = arith.constant 0.000000e+00 : bf16
    %30 = vector.broadcast %cst_22 : bf16 to vector<18x1x128xbf16>
    %31 = vector.extract_strided_slice %29 {offsets = [0, 0, 0], sizes = [18, 15, 128], strides = [1, 1, 1]} : vector<18x16x128xbf16> to vector<18x15x128xbf16>
    %32 = tpu.concatenate %30, %31 in 1 : vector<18x1x128xbf16>, vector<18x15x128xbf16> -> vector<18x16x128xbf16>
    %33 = vector.extract_strided_slice %29 {offsets = [0, 1, 0], sizes = [18, 15, 128], strides = [1, 1, 1]} : vector<18x16x128xbf16> to vector<18x15x128xbf16>
    %34 = tpu.concatenate %33, %30 in 1 : vector<18x15x128xbf16>, vector<18x1x128xbf16> -> vector<18x16x128xbf16>
    %35 = tpu.concatenate %32, %29, %34 in 2 : vector<18x16x128xbf16>, vector<18x16x128xbf16>, vector<18x16x128xbf16> -> vector<18x16x384xbf16>
    %36 = vector.extract_strided_slice %35 {offsets = [0, 0, 0], sizes = [16, 16, 384], strides = [1, 1, 1]} : vector<18x16x384xbf16> to vector<16x16x384xbf16>
    %37 = vector.shape_cast %36 : vector<16x16x384xbf16> to vector<256x384xbf16>
    %c0_23 = arith.constant 0 : index
    %c0_24 = arith.constant 0 : index
    %c0_25 = arith.constant 0 : index
    %38 = vector.load %arg8[%c0_23, %c0_24, %c0_25] : memref<3x384x128xbf16, #tpu.memory_space<vmem>>, vector<1x384x128xbf16>
    %39 = vector.shape_cast %38 : vector<1x384x128xbf16> to vector<384x128xbf16>
    %cst_26 = arith.constant dense<0.000000e+00> : vector<256x128xf32>
    %40 = tpu.matmul %37, %39, %cst_26 {dimension_numbers = #tpu.dot_dimension_numbers<[1], [0], [0], [1], [0, 0, 1, 1], [], []>} : vector<256x384xbf16>, vector<384x128xbf16>, vector<256x128xf32> -> vector<256x128xf32>
    %41 = vector.extract_strided_slice %35 {offsets = [1, 0, 0], sizes = [16, 16, 384], strides = [1, 1, 1]} : vector<18x16x384xbf16> to vector<16x16x384xbf16>
    %42 = vector.shape_cast %41 : vector<16x16x384xbf16> to vector<256x384xbf16>
    %c1_27 = arith.constant 1 : index
    %c0_28 = arith.constant 0 : index
    %c0_29 = arith.constant 0 : index
    %43 = vector.load %arg8[%c1_27, %c0_28, %c0_29] : memref<3x384x128xbf16, #tpu.memory_space<vmem>>, vector<1x384x128xbf16>
    %44 = vector.shape_cast %43 : vector<1x384x128xbf16> to vector<384x128xbf16>
    %cst_30 = arith.constant dense<0.000000e+00> : vector<256x128xf32>
    %45 = tpu.matmul %42, %44, %cst_30 {dimension_numbers = #tpu.dot_dimension_numbers<[1], [0], [0], [1], [0, 0, 1, 1], [], []>} : vector<256x384xbf16>, vector<384x128xbf16>, vector<256x128xf32> -> vector<256x128xf32>
    %46 = arith.addf %40, %45 : vector<256x128xf32>
    %47 = vector.extract_strided_slice %35 {offsets = [2, 0, 0], sizes = [16, 16, 384], strides = [1, 1, 1]} : vector<18x16x384xbf16> to vector<16x16x384xbf16>
    %48 = vector.shape_cast %47 : vector<16x16x384xbf16> to vector<256x384xbf16>
    %c2 = arith.constant 2 : index
    %c0_31 = arith.constant 0 : index
    %c0_32 = arith.constant 0 : index
    %49 = vector.load %arg8[%c2, %c0_31, %c0_32] : memref<3x384x128xbf16, #tpu.memory_space<vmem>>, vector<1x384x128xbf16>
    %50 = vector.shape_cast %49 : vector<1x384x128xbf16> to vector<384x128xbf16>
    %cst_33 = arith.constant dense<0.000000e+00> : vector<256x128xf32>
    %51 = tpu.matmul %48, %50, %cst_33 {dimension_numbers = #tpu.dot_dimension_numbers<[1], [0], [0], [1], [0, 0, 1, 1], [], []>} : vector<256x384xbf16>, vector<384x128xbf16>, vector<256x128xf32> -> vector<256x128xf32>
    %52 = arith.addf %46, %51 : vector<256x128xf32>
    %c0_34 = arith.constant 0 : index
    %c0_35 = arith.constant 0 : index
    %53 = vector.load %arg9[%c0_34, %c0_35] : memref<1x128xf32, #tpu.memory_space<vmem>>, vector<1x128xf32>
    %54 = vector.broadcast %53 : vector<1x128xf32> to vector<256x128xf32>
    %55 = arith.mulf %52, %54 : vector<256x128xf32>
    %c0_36 = arith.constant 0 : index
    %c0_37 = arith.constant 0 : index
    %56 = vector.load %arg10[%c0_36, %c0_37] : memref<1x128xf32, #tpu.memory_space<vmem>>, vector<1x128xf32>
    %57 = vector.broadcast %56 : vector<1x128xf32> to vector<256x128xf32>
    %58 = arith.addf %55, %57 : vector<256x128xf32>
    %cst_38 = arith.constant 0.000000e+00 : f32
    %59 = vector.broadcast %cst_38 : f32 to vector<256x128xf32>
    %60 = arith.maximumf %58, %59 : vector<256x128xf32>
    %61 = arith.truncf %60 : vector<256x128xf32> to vector<256x128xbf16>
    %c0_39 = arith.constant 0 : index
    %c0_40 = arith.constant 0 : index
    %62 = vector.load %arg11[%c0_39, %c0_40] : memref<128x128xbf16, #tpu.memory_space<vmem>>, vector<128x128xbf16>
    %cst_41 = arith.constant dense<0.000000e+00> : vector<256x128xf32>
    %63 = tpu.matmul %61, %62, %cst_41 {dimension_numbers = #tpu.dot_dimension_numbers<[1], [0], [0], [1], [0, 0, 1, 1], [], []>} : vector<256x128xbf16>, vector<128x128xbf16>, vector<256x128xf32> -> vector<256x128xf32>
    %64 = vector.shape_cast %2 : vector<16x16x128xf32> to vector<256x128xf32>
    %c0_42 = arith.constant 0 : index
    %c0_43 = arith.constant 0 : index
    %65 = vector.load %arg12[%c0_42, %c0_43] : memref<1x128xf32, #tpu.memory_space<vmem>>, vector<1x128xf32>
    %66 = vector.broadcast %65 : vector<1x128xf32> to vector<256x128xf32>
    %67 = arith.mulf %63, %66 : vector<256x128xf32>
    %c0_44 = arith.constant 0 : index
    %c0_45 = arith.constant 0 : index
    %68 = vector.load %arg13[%c0_44, %c0_45] : memref<1x128xf32, #tpu.memory_space<vmem>>, vector<1x128xf32>
    %69 = vector.broadcast %68 : vector<1x128xf32> to vector<256x128xf32>
    %70 = arith.addf %67, %69 : vector<256x128xf32>
    %71 = arith.addf %70, %64 : vector<256x128xf32>
    %cst_46 = arith.constant 0.000000e+00 : f32
    %72 = vector.broadcast %cst_46 : f32 to vector<256x128xf32>
    %73 = arith.maximumf %71, %72 : vector<256x128xf32>
    %74 = vector.shape_cast %73 : vector<256x128xf32> to vector<16x16x128xf32>
    %c0_47 = arith.constant 0 : index
    %c0_48 = arith.constant 0 : index
    %c0_49 = arith.constant 0 : index
    %c0_50 = arith.constant 0 : index
    %75 = vector.load %arg14[%c0_47, %c0_48, %c0_49, %c0_50] : memref<1x16x16x128xf32, #tpu.memory_space<vmem>>, vector<1x16x16x128xf32>
    %76 = vector.shape_cast %75 : vector<1x16x16x128xf32> to vector<16x16x128xf32>
    %77 = vector.shape_cast %74 : vector<16x16x128xf32> to vector<1x16x16x128xf32>
    tpu.vector_store %arg14[%c0_47, %c0_48, %c0_49, %c0_50], %77 {strides = array<i32>} : memref<1x16x16x128xf32, #tpu.memory_space<vmem>>, vector<1x16x16x128xf32>,
    return
  }
  func.func @transform_0(%arg0: i32, %arg1: i32) -> (i32, i32, i32, i32) {
    %c0_i32 = arith.constant 0 : i32
    %c0_i32_0 = arith.constant 0 : i32
    %c0_i32_1 = arith.constant 0 : i32
    return %arg0, %arg1, %c0_i32, %c0_i32_0 : i32, i32, i32, i32
  }
  func.func @transform_1(%arg0: i32, %arg1: i32) -> (i32, i32, i32, i32) {
    %c16_i32 = arith.constant 16 : i32
    %0 = arith.muli %arg1, %c16_i32 : i32
    %c1_i32 = arith.constant 1 : i32
    %1 = arith.subi %0, %c1_i32 : i32
    %c0_i32 = arith.constant 0 : i32
    %2 = arith.maxsi %1, %c0_i32 : i32
    %c0_i32_0 = arith.constant 0 : i32
    %c0_i32_1 = arith.constant 0 : i32
    %c0_i32_2 = arith.constant 0 : i32
    return %arg0, %2, %c0_i32_0, %c0_i32_1 : i32, i32, i32, i32
  }
  func.func @transform_2(%arg0: i32, %arg1: i32) -> (i32, i32, i32, i32) {
    %c1_i32 = arith.constant 1 : i32
    %0 = arith.addi %arg1, %c1_i32 : i32
    %c16_i32 = arith.constant 16 : i32
    %1 = arith.muli %0, %c16_i32 : i32
    %c15_i32 = arith.constant 15 : i32
    %2 = arith.minsi %1, %c15_i32 : i32
    %c0_i32 = arith.constant 0 : i32
    %c0_i32_0 = arith.constant 0 : i32
    %c0_i32_1 = arith.constant 0 : i32
    return %arg0, %2, %c0_i32, %c0_i32_0 : i32, i32, i32, i32
  }
  func.func @transform_3(%arg0: i32, %arg1: i32) -> (i32, i32) {
    %c0_i32 = arith.constant 0 : i32
    %c0_i32_0 = arith.constant 0 : i32
    %c0_i32_1 = arith.constant 0 : i32
    return %c0_i32, %c0_i32_0 : i32, i32
  }
  func.func @transform_4(%arg0: i32, %arg1: i32) -> (i32, i32) {
    %c0_i32 = arith.constant 0 : i32
    %c0_i32_0 = arith.constant 0 : i32
    %c0_i32_1 = arith.constant 0 : i32
    return %c0_i32, %c0_i32_0 : i32, i32
  }
  func.func @transform_5(%arg0: i32, %arg1: i32) -> (i32, i32) {
    %c0_i32 = arith.constant 0 : i32
    %c0_i32_0 = arith.constant 0 : i32
    %c0_i32_1 = arith.constant 0 : i32
    return %c0_i32, %c0_i32_0 : i32, i32
  }
  func.func @transform_6(%arg0: i32, %arg1: i32) -> (i32, i32, i32) {
    %c0_i32 = arith.constant 0 : i32
    %c0_i32_0 = arith.constant 0 : i32
    %c0_i32_1 = arith.constant 0 : i32
    %c0_i32_2 = arith.constant 0 : i32
    return %c0_i32, %c0_i32_0, %c0_i32_1 : i32, i32, i32
  }
  func.func @transform_7(%arg0: i32, %arg1: i32) -> (i32, i32) {
    %c0_i32 = arith.constant 0 : i32
    %c0_i32_0 = arith.constant 0 : i32
    %c0_i32_1 = arith.constant 0 : i32
    return %c0_i32, %c0_i32_0 : i32, i32
  }
  func.func @transform_8(%arg0: i32, %arg1: i32) -> (i32, i32) {
    %c0_i32 = arith.constant 0 : i32
    %c0_i32_0 = arith.constant 0 : i32
    %c0_i32_1 = arith.constant 0 : i32
    return %c0_i32, %c0_i32_0 : i32, i32
  }
  func.func @transform_9(%arg0: i32, %arg1: i32) -> (i32, i32) {
    %c0_i32 = arith.constant 0 : i32
    %c0_i32_0 = arith.constant 0 : i32
    %c0_i32_1 = arith.constant 0 : i32
    return %c0_i32, %c0_i32_0 : i32, i32
  }
  func.func @transform_10(%arg0: i32, %arg1: i32) -> (i32, i32) {
    %c0_i32 = arith.constant 0 : i32
    %c0_i32_0 = arith.constant 0 : i32
    %c0_i32_1 = arith.constant 0 : i32
    return %c0_i32, %c0_i32_0 : i32, i32
  }
  func.func @transform_11(%arg0: i32, %arg1: i32) -> (i32, i32) {
    %c0_i32 = arith.constant 0 : i32
    %c0_i32_0 = arith.constant 0 : i32
    %c0_i32_1 = arith.constant 0 : i32
    return %c0_i32, %c0_i32_0 : i32, i32
  }
  func.func @transform_12(%arg0: i32, %arg1: i32) -> (i32, i32, i32, i32) {
    %c0_i32 = arith.constant 0 : i32
    %c0_i32_0 = arith.constant 0 : i32
    %c0_i32_1 = arith.constant 0 : i32
    return %arg0, %arg1, %c0_i32, %c0_i32_0 : i32, i32, i32, i32
  }
}

</mosaic_0001>

<llo_original>
// kernel: bottleneck_forward.1
$region0: #{bottleneck_forward.1}
  #allocation0 [shape = 'u32[]', space=smem, size = 0x4, offset = 0x4, fixed_abs, tag = 'smem constant byte address 0x4 - core index']
  #allocation1 [shape = 'u32[144,128]{1,0:T(1,128)}', space=vmem, size = 0x12000, scoped, tag = 'internal scratch']
  #allocation2 [shape = 'bf16[18,16,128]{2,1,0:T(16,128)(2,1)}', space=vmem, size = 0x12000, scoped, tag = 'scratch operand']
  %s0 = inlined_call_operand.vmem [shape: f32[2,16,16,128], index: 0, kind: input, shape index: {}, may-alias: {0,1,2}]
  %s1 = inlined_call_operand.vmem [shape: f32[2,16,16,128], index: 1, kind: input, shape index: {}, may-alias: {0,1,2}]
  %s2 = inlined_call_operand.vmem [shape: f32[2,16,16,128], index: 2, kind: input, shape index: {}, may-alias: {0,1,2}]
  %s3 = inlined_call_operand.vmem [shape: bf16[128,128], index: 3, kind: input, shape index: {}]
  %s4 = inlined_call_operand.vmem [shape: f32[1,128], index: 4, kind: input, shape index: {}]
  %s5 = inlined_call_operand.vmem [shape: f32[1,128], index: 5, kind: input, shape index: {}]
  %s6 = inlined_call_operand.vmem [shape: bf16[3,384,128], index: 6, kind: input, shape index: {}]
  %s7 = inlined_call_operand.vmem [shape: f32[1,128], index: 7, kind: input, shape index: {}]
  %s8 = inlined_call_operand.vmem [shape: f32[1,128], index: 8, kind: input, shape index: {}]
  %s9 = inlined_call_operand.vmem [shape: bf16[128,128], index: 9, kind: input, shape index: {}]
  %s10 = inlined_call_operand.vmem [shape: f32[1,128], index: 10, kind: input, shape index: {}]
  %s11 = inlined_call_operand.vmem [shape: f32[1,128], index: 11, kind: input, shape index: {}]
  %s12 = inlined_call_operand.hbm [shape: f32[2,16,16,128], index: 12, kind: output, shape index: {}]
  %s13 = sld [smem:[#allocation0]]
  $region97: #{bottleneck_forward.1} parent=0
    _
  %s15 = ssub.s32 1, %s13
  %s16 = scalar_select 0, %s15, %s13
  $region1: #{bottleneck_forward.1} parent=0
    #allocation3 [shape = 'u8[262144]{0}', space=vmem, size = 0x40000, scoped, tag = 'output window, operand 0']
    #allocation4 [shape = 's32[2]{0}', space=sflag, size = 0x8, scoped, tag = 'scoped memory for bottleneck_forward.1']
    %17 = vsyncpa [#allocation4], 0
    %s18 = scalar_lea.sflag [#allocation4], 1
    %19 = vsyncpa %s18, 0
    loop: start=0, step=1, limit=4
    $region2: #{bottleneck_forward.1} parent=1 // loop_pre_header
      _
    $region3: #{bottleneck_forward.1} parent=1 // loop_header
      %s21 = sphi 0, %s25
      %p22 = scmp.ge.s32.totalorder %s21, 4
      %s28 = sphi 0, %s40
      %s29 = sphi 0, %s36
      %s30 = sphi 0, %s28
      %s31 = sphi 0, %s29
      %s32 = sphi 0, %s30
      %s33 = sphi 0, %s31
      %s45 = sphi 0, %s47
      %s48 = sphi 0, %s45
      %s49 = sphi 0, %s48
      %s65 = sphi 0, %s49
      %s81 = sphi 0, %s83
      %s84 = sphi 0, %s81
      %s85 = sphi 0, %s84
      %s101 = sphi 0, %s85
      %s117 = sphi 0, %s119
      %s120 = sphi 0, %s117
      %s121 = sphi 0, %s120
      %s137 = sphi 0, %s121
      %s141 = sphi 0, %s141
      %s143 = sphi 0, %s141
      %s144 = sphi 0, %s143
      %s158 = sphi 0, %s144
      %s162 = sphi 0, %s162
      %s164 = sphi 0, %s162
      %s165 = sphi 0, %s164
      %s179 = sphi 0, %s165
      %s183 = sphi 0, %s183
      %s185 = sphi 0, %s183
      %s186 = sphi 0, %s185
      %s200 = sphi 0, %s186
      %s204 = sphi 0, %s204
      %s206 = sphi 0, %s204
      %s207 = sphi 0, %s206
      %s221 = sphi 0, %s207
      %s225 = sphi 0, %s225
      %s227 = sphi 0, %s225
      %s228 = sphi 0, %s227
      %s242 = sphi 0, %s228
      %s246 = sphi 0, %s246
      %s248 = sphi 0, %s246
      %s249 = sphi 0, %s248
      %s263 = sphi 0, %s249
      %s267 = sphi 0, %s267
      %s269 = sphi 0, %s267
      %s270 = sphi 0, %s269
      %s284 = sphi 0, %s270
      %s288 = sphi 0, %s288
      %s290 = sphi 0, %s288
      %s291 = sphi 0, %s290
      %s305 = sphi 0, %s291
      %s309 = sphi 0, %s309
      %s311 = sphi 0, %s309
      %s312 = sphi 0, %s311
      %s326 = sphi 0, %s312
      %s334 = sphi 0, %s336
      %s337 = sphi 0, %s334
      %s338 = sphi 0, %s337
      %s354 = sphi 0, %s338
    $region4: #{bottleneck_forward.1} parent=1 // loop_header_branch
      %24 = sbr.rel (%p22) target = $region8
    $region5: #{bottleneck_forward.1} parent=1 // loop_body
      %s26 = ssub.s32 %s21, 1
      %s27 = ssub.s32 %s21, 2
      %s34 = sadd.s32 1, %s29
      %p35 = scmp.ge.s32.totalorder %s34, 1
      %s36 = scalar_select %p35, 0, %s34
      %s37 = sadd.s32 1, %s28
      %s38 = scalar_select %p35, %s37, %s28
      %p39 = scmp.ge.s32.totalorder %s38, 2
      %s40 = scalar_select %p39, 0, %s38
      %s41 = ssub.s32 %s28, %s40
      %s42 = ssub.s32 %s29, %s36
      %s43 = sor.u32 %s41, %s42
      %p44 = scmp.eq.s32.totalorder %s43, 0
      %s46 = sadd.s32 %s45, 1
      %s47 = scalar_select %p44, %s45, %s46
      %p50 = pneg %p44
      %p51 = scmp.eq.s32.totalorder %s21, 1
      %p52 = por %p50, %p51
      %p53 = scmp.ne.s32.totalorder %s45, %s48
      %p54 = scmp.eq.s32.totalorder %s21, 0
      %p55 = por %p53, %p54
      %p56 = scmp.ne.s32.totalorder %s45, %s48
      %p57 = scmp.eq.s32.totalorder %s26, 1
      %p58 = por %p56, %p57
      %p59 = scmp.ne.s32.totalorder %s48, %s49
      %p60 = scmp.eq.s32.totalorder %s26, 0
      %p61 = por %p59, %p60
      %p62 = scmp.ne.s32.totalorder %s48, %s49
      %p63 = scmp.eq.s32.totalorder %s27, 1
      %p64 = por %p62, %p63
      %p66 = scmp.ne.s32.totalorder %s49, %s65
      %p67 = scmp.eq.s32.totalorder %s27, 0
      %p68 = por %p66, %p67
      %s69 = smul.u32 %s29, 16
      %s70 = ssub.s32 %s69, 1
      %p71 = scmp.gt.s32.totalorder %s70, 0
      %s72 = scalar_select %p71, %s70, 0
      %s73 = smul.u32 %s36, 16
      %s74 = ssub.s32 %s73, 1
      %p75 = scmp.gt.s32.totalorder %s74, 0
      %s76 = scalar_select %p75, %s74, 0
      %s77 = ssub.s32 %s28, %s40
      %s78 = ssub.s32 %s72, %s76
      %s79 = sor.u32 %s77, %s78
      %p80 = scmp.eq.s32.totalorder %s79, 0
      %s82 = sadd.s32 %s81, 1
      %s83 = scalar_select %p80, %s81, %s82
      %p86 = pneg %p80
      %p87 = scmp.eq.s32.totalorder %s21, 1
      %p88 = por %p86, %p87
      %p89 = scmp.ne.s32.totalorder %s81, %s84
      %p90 = scmp.eq.s32.totalorder %s21, 0
      %p91 = por %p89, %p90
      %p92 = scmp.ne.s32.totalorder %s81, %s84
      %p93 = scmp.eq.s32.totalorder %s26, 1
      %p94 = por %p92, %p93
      %p95 = scmp.ne.s32.totalorder %s84, %s85
      %p96 = scmp.eq.s32.totalorder %s26, 0
      %p97 = por %p95, %p96
      %p98 = scmp.ne.s32.totalorder %s84, %s85
      %p99 = scmp.eq.s32.totalorder %s27, 1
      %p100 = por %p98, %p99
      %p102 = scmp.ne.s32.totalorder %s85, %s101
      %p103 = scmp.eq.s32.totalorder %s27, 0
      %p104 = por %p102, %p103
      %s105 = sadd.s32 %s29, 1
      %s106 = smul.u32 %s105, 16
      %p107 = scmp.lt.s32.totalorder %s106, 15
      %s108 = scalar_select %p107, %s106, 15
      %s109 = sadd.s32 %s36, 1
      %s110 = smul.u32 %s109, 16
      %p111 = scmp.lt.s32.totalorder %s110, 15
      %s112 = scalar_select %p111, %s110, 15
      %s113 = ssub.s32 %s28, %s40
      %s114 = ssub.s32 %s108, %s112
      %s115 = sor.u32 %s113, %s114
      %p116 = scmp.eq.s32.totalorder %s115, 0
      %s118 = sadd.s32 %s117, 1
      %s119 = scalar_select %p116, %s117, %s118
      %p122 = pneg %p116
      %p123 = scmp.eq.s32.totalorder %s21, 1
      %p124 = por %p122, %p123
      %p125 = scmp.ne.s32.totalorder %s117, %s120
      %p126 = scmp.eq.s32.totalorder %s21, 0
      %p127 = por %p125, %p126
      %p128 = scmp.ne.s32.totalorder %s117, %s120
      %p129 = scmp.eq.s32.totalorder %s26, 1
      %p130 = por %p128, %p129
      %p131 = scmp.ne.s32.totalorder %s120, %s121
      %p132 = scmp.eq.s32.totalorder %s26, 0
      %p133 = por %p131, %p132
      %p134 = scmp.ne.s32.totalorder %s120, %s121
      %p135 = scmp.eq.s32.totalorder %s27, 1
      %p136 = por %p134, %p135
      %p138 = scmp.ne.s32.totalorder %s121, %s137
      %p139 = scmp.eq.s32.totalorder %s27, 0
      %p140 = por %p138, %p139
      %s142 = sadd.s32 %s141, 1
      %p145 = scmp.eq.s32.totalorder %s21, 1
      %p146 = scmp.ne.s32.totalorder %s141, %s143
      %p147 = scmp.eq.s32.totalorder %s21, 0
      %p148 = por %p146, %p147
      %p149 = scmp.ne.s32.totalorder %s141, %s143
      %p150 = scmp.eq.s32.totalorder %s26, 1
      %p151 = por %p149, %p150
      %p152 = scmp.ne.s32.totalorder %s143, %s144
      %p153 = scmp.eq.s32.totalorder %s26, 0
      %p154 = por %p152, %p153
      %p155 = scmp.ne.s32.totalorder %s143, %s144
      %p156 = scmp.eq.s32.totalorder %s27, 1
      %p157 = por %p155, %p156
      %p159 = scmp.ne.s32.totalorder %s144, %s158
      %p160 = scmp.eq.s32.totalorder %s27, 0
      %p161 = por %p159, %p160
      %s163 = sadd.s32 %s162, 1
      %p166 = scmp.eq.s32.totalorder %s21, 1
      %p167 = scmp.ne.s32.totalorder %s162, %s164
      %p168 = scmp.eq.s32.totalorder %s21, 0
      %p169 = por %p167, %p168
      %p170 = scmp.ne.s32.totalorder %s162, %s164
      %p171 = scmp.eq.s32.totalorder %s26, 1
      %p172 = por %p170, %p171
      %p173 = scmp.ne.s32.totalorder %s164, %s165
      %p174 = scmp.eq.s32.totalorder %s26, 0
      %p175 = por %p173, %p174
      %p176 = scmp.ne.s32.totalorder %s164, %s165
      %p177 = scmp.eq.s32.totalorder %s27, 1
      %p178 = por %p176, %p177
      %p180 = scmp.ne.s32.totalorder %s165, %s179
      %p181 = scmp.eq.s32.totalorder %s27, 0
      %p182 = por %p180, %p181
      %s184 = sadd.s32 %s183, 1
      %p187 = scmp.eq.s32.totalorder %s21, 1
      %p188 = scmp.ne.s32.totalorder %s183, %s185
      %p189 = scmp.eq.s32.totalorder %s21, 0
      %p190 = por %p188, %p189
      %p191 = scmp.ne.s32.totalorder %s183, %s185
      %p192 = scmp.eq.s32.totalorder %s26, 1
      %p193 = por %p191, %p192
      %p194 = scmp.ne.s32.totalorder %s185, %s186
      %p195 = scmp.eq.s32.totalorder %s26, 0
      %p196 = por %p194, %p195
      %p197 = scmp.ne.s32.totalorder %s185, %s186
      %p198 = scmp.eq.s32.totalorder %s27, 1
      %p199 = por %p197, %p198
      %p201 = scmp.ne.s32.totalorder %s186, %s200
      %p202 = scmp.eq.s32.totalorder %s27, 0
      %p203 = por %p201, %p202
      %s205 = sadd.s32 %s204, 1
      %p208 = scmp.eq.s32.totalorder %s21, 1
      %p209 = scmp.ne.s32.totalorder %s204, %s206
      %p210 = scmp.eq.s32.totalorder %s21, 0
      %p211 = por %p209, %p210
      %p212 = scmp.ne.s32.totalorder %s204, %s206
      %p213 = scmp.eq.s32.totalorder %s26, 1
      %p214 = por %p212, %p213
      %p215 = scmp.ne.s32.totalorder %s206, %s207
      %p216 = scmp.eq.s32.totalorder %s26, 0
      %p217 = por %p215, %p216
      %p218 = scmp.ne.s32.totalorder %s206, %s207
      %p219 = scmp.eq.s32.totalorder %s27, 1
      %p220 = por %p218, %p219
      %p222 = scmp.ne.s32.totalorder %s207, %s221
      %p223 = scmp.eq.s32.totalorder %s27, 0
      %p224 = por %p222, %p223
      %s226 = sadd.s32 %s225, 1
      %p229 = scmp.eq.s32.totalorder %s21, 1
      %p230 = scmp.ne.s32.totalorder %s225, %s227
      %p231 = scmp.eq.s32.totalorder %s21, 0
      %p232 = por %p230, %p231
      %p233 = scmp.ne.s32.totalorder %s225, %s227
      %p234 = scmp.eq.s32.totalorder %s26, 1
      %p235 = por %p233, %p234
      %p236 = scmp.ne.s32.totalorder %s227, %s228
      %p237 = scmp.eq.s32.totalorder %s26, 0
      %p238 = por %p236, %p237
      %p239 = scmp.ne.s32.totalorder %s227, %s228
      %p240 = scmp.eq.s32.totalorder %s27, 1
      %p241 = por %p239, %p240
      %p243 = scmp.ne.s32.totalorder %s228, %s242
      %p244 = scmp.eq.s32.totalorder %s27, 0
      %p245 = por %p243, %p244
      %s247 = sadd.s32 %s246, 1
      %p250 = scmp.eq.s32.totalorder %s21, 1
      %p251 = scmp.ne.s32.totalorder %s246, %s248
      %p252 = scmp.eq.s32.totalorder %s21, 0
      %p253 = por %p251, %p252
      %p254 = scmp.ne.s32.totalorder %s246, %s248
      %p255 = scmp.eq.s32.totalorder %s26, 1
      %p256 = por %p254, %p255
      %p257 = scmp.ne.s32.totalorder %s248, %s249
      %p258 = scmp.eq.s32.totalorder %s26, 0
      %p259 = por %p257, %p258
      %p260 = scmp.ne.s32.totalorder %s248, %s249
      %p261 = scmp.eq.s32.totalorder %s27, 1
      %p262 = por %p260, %p261
      %p264 = scmp.ne.s32.totalorder %s249, %s263
      %p265 = scmp.eq.s32.totalorder %s27, 0
      %p266 = por %p264, %p265
      %s268 = sadd.s32 %s267, 1
      %p271 = scmp.eq.s32.totalorder %s21, 1
      %p272 = scmp.ne.s32.totalorder %s267, %s269
      %p273 = scmp.eq.s32.totalorder %s21, 0
      %p274 = por %p272, %p273
      %p275 = scmp.ne.s32.totalorder %s267, %s269
      %p276 = scmp.eq.s32.totalorder %s26, 1
      %p277 = por %p275, %p276
      %p278 = scmp.ne.s32.totalorder %s269, %s270
      %p279 = scmp.eq.s32.totalorder %s26, 0
      %p280 = por %p278, %p279
      %p281 = scmp.ne.s32.totalorder %s269, %s270
      %p282 = scmp.eq.s32.totalorder %s27, 1
      %p283 = por %p281, %p282
      %p285 = scmp.ne.s32.totalorder %s270, %s284
      %p286 = scmp.eq.s32.totalorder %s27, 0
      %p287 = por %p285, %p286
      %s289 = sadd.s32 %s288, 1
      %p292 = scmp.eq.s32.totalorder %s21, 1
      %p293 = scmp.ne.s32.totalorder %s288, %s290
      %p294 = scmp.eq.s32.totalorder %s21, 0
      %p295 = por %p293, %p294
      %p296 = scmp.ne.s32.totalorder %s288, %s290
      %p297 = scmp.eq.s32.totalorder %s26, 1
      %p298 = por %p296, %p297
      %p299 = scmp.ne.s32.totalorder %s290, %s291
      %p300 = scmp.eq.s32.totalorder %s26, 0
      %p301 = por %p299, %p300
      %p302 = scmp.ne.s32.totalorder %s290, %s291
      %p303 = scmp.eq.s32.totalorder %s27, 1
      %p304 = por %p302, %p303
      %p306 = scmp.ne.s32.totalorder %s291, %s305
      %p307 = scmp.eq.s32.totalorder %s27, 0
      %p308 = por %p306, %p307
      %s310 = sadd.s32 %s309, 1
      %p313 = scmp.eq.s32.totalorder %s21, 1
      %p314 = scmp.ne.s32.totalorder %s309, %s311
      %p315 = scmp.eq.s32.totalorder %s21, 0
      %p316 = por %p314, %p315
      %p317 = scmp.ne.s32.totalorder %s309, %s311
      %p318 = scmp.eq.s32.totalorder %s26, 1
      %p319 = por %p317, %p318
      %p320 = scmp.ne.s32.totalorder %s311, %s312
      %p321 = scmp.eq.s32.totalorder %s26, 0
      %p322 = por %p320, %p321
      %p323 = scmp.ne.s32.totalorder %s311, %s312
      %p324 = scmp.eq.s32.totalorder %s27, 1
      %p325 = por %p323, %p324
      %p327 = scmp.ne.s32.totalorder %s312, %s326
      %p328 = scmp.eq.s32.totalorder %s27, 0
      %p329 = por %p327, %p328
      %s330 = ssub.s32 %s28, %s40
      %s331 = ssub.s32 %s29, %s36
      %s332 = sor.u32 %s330, %s331
      %p333 = scmp.eq.s32.totalorder %s332, 0
      %s335 = sadd.s32 %s334, 1
      %s336 = scalar_select %p333, %s334, %s335
      %p339 = pneg %p333
      %p340 = scmp.eq.s32.totalorder %s21, 1
      %p341 = por %p339, %p340
      %p342 = scmp.ne.s32.totalorder %s334, %s337
      %p343 = scmp.eq.s32.totalorder %s21, 0
      %p344 = por %p342, %p343
      %p345 = scmp.ne.s32.totalorder %s334, %s337
      %p346 = scmp.eq.s32.totalorder %s26, 1
      %p347 = por %p345, %p346
      %p348 = scmp.ne.s32.totalorder %s337, %s338
      %p349 = scmp.eq.s32.totalorder %s26, 0
      %p350 = por %p348, %p349
      %p351 = scmp.ne.s32.totalorder %s337, %s338
      %p352 = scmp.eq.s32.totalorder %s27, 1
      %p353 = por %p351, %p352
      %p355 = scmp.ne.s32.totalorder %s338, %s354
      %p356 = scmp.eq.s32.totalorder %s27, 0
      %p357 = por %p355, %p356
      %p358 = scmp.le.s32.totalorder 1, %s21
      %p359 = scmp.lt.s32.totalorder %s21, 3
      %p360 = pnand %p358, %p359
      %p361 = pneg %p360
      // Predicated region
      $region9: #{bottleneck_forward.1} parent=5 // pred_check
        _
      $region10: #{bottleneck_forward.1} parent=5 // pred_check_branch
        %363 = sbr.rel (%p360) target = $region12
      $region11: #{bottleneck_forward.1} parent=5 // pred_region
        %s364 = ssub.s32 %s21, 1
        // Predicated region
        $region13: #{bottleneck_forward.1} parent=11 // pred_check
          %p365 = pneg %p154
        $region14: #{bottleneck_forward.1} parent=11 // pred_check_branch
          %367 = sbr.rel (%p365) target = $region16
        $region15: #{bottleneck_forward.1} parent=11 // pred_region
          _
        $region16: #{bottleneck_forward.1} parent=11 // pred_fallthru
          _
        // Predicated region
        $region17: #{bottleneck_forward.1} parent=11 // pred_check
          %p368 = pneg %p175
        $region18: #{bottleneck_forward.1} parent=11 // pred_check_branch
          %370 = sbr.rel (%p368) target = $region20
        $region19: #{bottleneck_forward.1} parent=11 // pred_region
          _
        $region20: #{bottleneck_forward.1} parent=11 // pred_fallthru
          _
        // Predicated region
        $region21: #{bottleneck_forward.1} parent=11 // pred_check
          %p371 = pneg %p196
        $region22: #{bottleneck_forward.1} parent=11 // pred_check_branch
          %373 = sbr.rel (%p371) target = $region24
        $region23: #{bottleneck_forward.1} parent=11 // pred_region
          _
        $region24: #{bottleneck_forward.1} parent=11 // pred_fallthru
          _
        // Predicated region
        $region25: #{bottleneck_forward.1} parent=11 // pred_check
          %p374 = pneg %p217
        $region26: #{bottleneck_forward.1} parent=11 // pred_check_branch
          %376 = sbr.rel (%p374) target = $region28
        $region27: #{bottleneck_forward.1} parent=11 // pred_region
          _
        $region28: #{bottleneck_forward.1} parent=11 // pred_fallthru
          _
        // Predicated region
        $region29: #{bottleneck_forward.1} parent=11 // pred_check
          %p377 = pneg %p238
        $region30: #{bottleneck_forward.1} parent=11 // pred_check_branch
          %379 = sbr.rel (%p377) target = $region32
        $region31: #{bottleneck_forward.1} parent=11 // pred_region
          _
        $region32: #{bottleneck_forward.1} parent=11 // pred_fallthru
          _
        // Predicated region
        $region33: #{bottleneck_forward.1} parent=11 // pred_check
          %p380 = pneg %p259
        $region34: #{bottleneck_forward.1} parent=11 // pred_check_branch
          %382 = sbr.rel (%p380) target = $region36
        $region35: #{bottleneck_forward.1} parent=11 // pred_region
          _
        $region36: #{bottleneck_forward.1} parent=11 // pred_fallthru
          _
        // Predicated region
        $region37: #{bottleneck_forward.1} parent=11 // pred_check
          %p383 = pneg %p280
        $region38: #{bottleneck_forward.1} parent=11 // pred_check_branch
          %385 = sbr.rel (%p383) target = $region40
        $region39: #{bottleneck_forward.1} parent=11 // pred_region
          _
        $region40: #{bottleneck_forward.1} parent=11 // pred_fallthru
          _
        // Predicated region
        $region41: #{bottleneck_forward.1} parent=11 // pred_check
          %p386 = pneg %p301
        $region42: #{bottleneck_forward.1} parent=11 // pred_check_branch
          %388 = sbr.rel (%p386) target = $region44
        $region43: #{bottleneck_forward.1} parent=11 // pred_region
          _
        $region44: #{bottleneck_forward.1} parent=11 // pred_fallthru
          _
        // Predicated region
        $region45: #{bottleneck_forward.1} parent=11 // pred_check
          %p389 = pneg %p322
        $region46: #{bottleneck_forward.1} parent=11 // pred_check_branch
          %391 = sbr.rel (%p389) target = $region48
        $region47: #{bottleneck_forward.1} parent=11 // pred_region
          _
        $region48: #{bottleneck_forward.1} parent=11 // pred_fallthru
          _
      $region12: #{bottleneck_forward.1} parent=5 // pred_fallthru
        _
      %p392 = scmp.lt.s32.totalorder %s21, 2
      // Predicated region
      $region49: #{bottleneck_forward.1} parent=5 // pred_check
        %p393 = pneg %p392
      $region50: #{bottleneck_forward.1} parent=5 // pred_check_branch
        %395 = sbr.rel (%p393) target = $region52
      $region51: #{bottleneck_forward.1} parent=5 // pred_region
        // Predicated region
        $region53: #{bottleneck_forward.1} parent=51 // pred_check
          %p396 = pneg %p55
        $region54: #{bottleneck_forward.1} parent=51 // pred_check_branch
          %398 = sbr.rel (%p396) target = $region56
        $region55: #{bottleneck_forward.1} parent=51 // pred_region
          %s399 = smul.u32 16, %s29
          %p400 = scmp.lt.s32.totalorder %s28, 1
          %s401 = scalar_select %p400, %s28, 1
          %p402 = scmp.lt.s32.totalorder %s399, 15
          %s403 = scalar_select %p402, %s399, 15
          %s404 = smul.addr %s403, 2
          %s405 = smul.addr %s401, 32
          %s406 = sadd.s32 %s404, %s405
          %s407 = smul.addr %s406, 8
          %s408 = scalar_lea.vmem %s0, %s407
          %s409 = smul.u32 16, %s29
        $region56: #{bottleneck_forward.1} parent=51 // pred_fallthru
          _
        // Predicated region
        $region57: #{bottleneck_forward.1} parent=51 // pred_check
          %p410 = pneg %p91
        $region58: #{bottleneck_forward.1} parent=51 // pred_check_branch
          %412 = sbr.rel (%p410) target = $region60
        $region59: #{bottleneck_forward.1} parent=51 // pred_region
          %s413 = smul.u32 %s29, 16
          %s414 = ssub.s32 %s413, 1
          %p415 = scmp.gt.s32.totalorder %s414, 0
          %s416 = scalar_select %p415, %s414, 0
          %p417 = scmp.lt.s32.totalorder %s28, 1
          %s418 = scalar_select %p417, %s28, 1
          %p419 = scmp.lt.s32.totalorder %s416, 15
          %s420 = scalar_select %p419, %s416, 15
          %s421 = smul.addr %s420, 2
          %s422 = smul.addr %s418, 32
          %s423 = sadd.s32 %s421, %s422
          %s424 = smul.addr %s423, 8
          %s425 = scalar_lea.vmem %s1, %s424
          %s426 = smul.u32 %s29, 16
          %s427 = ssub.s32 %s426, 1
          %p428 = scmp.gt.s32.totalorder %s427, 0
          %s429 = scalar_select %p428, %s427, 0
        $region60: #{bottleneck_forward.1} parent=51 // pred_fallthru
          _
        // Predicated region
        $region61: #{bottleneck_forward.1} parent=51 // pred_check
          %p430 = pneg %p127
        $region62: #{bottleneck_forward.1} parent=51 // pred_check_branch
          %432 = sbr.rel (%p430) target = $region64
        $region63: #{bottleneck_forward.1} parent=51 // pred_region
          %s433 = sadd.s32 %s29, 1
          %s434 = smul.u32 %s433, 16
          %p435 = scmp.lt.s32.totalorder %s434, 15
          %s436 = scalar_select %p435, %s434, 15
          %p437 = scmp.lt.s32.totalorder %s28, 1
          %s438 = scalar_select %p437, %s28, 1
          %p439 = scmp.lt.s32.totalorder %s436, 15
          %s440 = scalar_select %p439, %s436, 15
          %s441 = smul.addr %s440, 2
          %s442 = smul.addr %s438, 32
          %s443 = sadd.s32 %s441, %s442
          %s444 = smul.addr %s443, 8
          %s445 = scalar_lea.vmem %s2, %s444
          %s446 = sadd.s32 %s29, 1
          %s447 = smul.u32 %s446, 16
          %p448 = scmp.lt.s32.totalorder %s447, 15
          %s449 = scalar_select %p448, %s447, 15
        $region64: #{bottleneck_forward.1} parent=51 // pred_fallthru
          _
      $region52: #{bottleneck_forward.1} parent=5 // pred_fallthru
        _
      %p450 = scmp.le.s32.totalorder 1, %s21
      %p451 = scmp.lt.s32.totalorder %s21, 3
      %p452 = pnand %p450, %p451
      %p453 = pneg %p452
      // Predicated region
      $region65: #{bottleneck_forward.1} parent=5 // pred_check
        _
      $region66: #{bottleneck_forward.1} parent=5 // pred_check_branch
        %455 = sbr.rel (%p452) target = $region68
      $region67: #{bottleneck_forward.1} parent=5 // pred_region
        %s456 = ssub.s32 %s21, 1
        %s457 = smul.u32 16, %s31
        %p458 = scmp.lt.s32.totalorder %s30, 1
        %s459 = scalar_select %p458, %s30, 1
        %p460 = scmp.lt.s32.totalorder %s457, 15
        %s461 = scalar_select %p460, %s457, 15
        %s462 = smul.addr %s461, 2
        %s463 = smul.addr %s459, 32
        %s464 = sadd.s32 %s462, %s463
        %s465 = smul.addr %s464, 8
        %s466 = scalar_lea.vmem %s0, %s465
        %p467 = pneg %p61
        %p468 = pneg %p58
        %s469 = smul.u32 %s31, 16
        %s470 = ssub.s32 %s469, 1
        %p471 = scmp.gt.s32.totalorder %s470, 0
        %s472 = scalar_select %p471, %s470, 0
        %p473 = scmp.lt.s32.totalorder %s30, 1
        %s474 = scalar_select %p473, %s30, 1
        %p475 = scmp.lt.s32.totalorder %s472, 15
        %s476 = scalar_select %p475, %s472, 15
        %s477 = smul.addr %s476, 2
        %s478 = smul.addr %s474, 32
        %s479 = sadd.s32 %s477, %s478
        %s480 = smul.addr %s479, 8
        %s481 = scalar_lea.vmem %s1, %s480
        %p482 = pneg %p97
        %p483 = pneg %p94
        %s484 = sadd.s32 %s31, 1
        %s485 = smul.u32 %s484, 16
        %p486 = scmp.lt.s32.totalorder %s485, 15
        %s487 = scalar_select %p486, %s485, 15
        %p488 = scmp.lt.s32.totalorder %s30, 1
        %s489 = scalar_select %p488, %s30, 1
        %p490 = scmp.lt.s32.totalorder %s487, 15
        %s491 = scalar_select %p490, %s487, 15
        %s492 = smul.addr %s491, 2
        %s493 = smul.addr %s489, 32
        %s494 = sadd.s32 %s492, %s493
        %s495 = smul.addr %s494, 8
        %s496 = scalar_lea.vmem %s2, %s495
        %p497 = pneg %p133
        %p498 = pneg %p130
        %p499 = pneg %p154
        %p500 = pneg %p151
        %p501 = pneg %p175
        %p502 = pneg %p172
        %p503 = pneg %p196
        %p504 = pneg %p193
        %p505 = pneg %p217
        %p506 = pneg %p214
        %p507 = pneg %p238
        %p508 = pneg %p235
        %p509 = pneg %p259
        %p510 = pneg %p256
        %p511 = pneg %p280
        %p512 = pneg %p277
        %p513 = pneg %p301
        %p514 = pneg %p298
        %p515 = pneg %p322
        %p516 = pneg %p319
        %p517 = pneg %p350
        %p518 = pneg %p347
        %s519 = sand.u32 %s337, 1
        %s520 = scalar_lea.sflag [#allocation4], %s519
        %s521 = sand.u32 %s337, 1
        %s522 = smul.addr %s521, 256
        %s523 = scalar_lea.vmem [#allocation3], %s522
        %s524 = smul.u32 16, %s31
        %p525 = scmp.lt.s32.totalorder %s30, 1
        %s526 = scalar_select %p525, %s30, 1
        %p527 = scmp.lt.s32.totalorder %s524, 15
        %s528 = scalar_select %p527, %s524, 15
        %s529 = smul.addr %s528, 2
        %s530 = smul.addr %s526, 32
        %s531 = sadd.s32 %s529, %s530
        %s532 = smul.addr %s531, 8
        %s533 = scalar_lea.vmem %s0, %s532
        %s534 = smul.u32 16, %s31
        %s535 = smul.u32 %s31, 16
        %s536 = ssub.s32 %s535, 1
        %p537 = scmp.gt.s32.totalorder %s536, 0
        %s538 = scalar_select %p537, %s536, 0
        %p539 = scmp.lt.s32.totalorder %s30, 1
        %s540 = scalar_select %p539, %s30, 1
        %p541 = scmp.lt.s32.totalorder %s538, 15
        %s542 = scalar_select %p541, %s538, 15
        %s543 = smul.addr %s542, 2
        %s544 = smul.addr %s540, 32
        %s545 = sadd.s32 %s543, %s544
        %s546 = smul.addr %s545, 8
        %s547 = scalar_lea.vmem %s1, %s546
        %s548 = smul.u32 %s31, 16
        %s549 = ssub.s32 %s548, 1
        %p550 = scmp.gt.s32.totalorder %s549, 0
        %s551 = scalar_select %p550, %s549, 0
        %s552 = sadd.s32 %s31, 1
        %s553 = smul.u32 %s552, 16
        %p554 = scmp.lt.s32.totalorder %s553, 15
        %s555 = scalar_select %p554, %s553, 15
        %p556 = scmp.lt.s32.totalorder %s30, 1
        %s557 = scalar_select %p556, %s30, 1
        %p558 = scmp.lt.s32.totalorder %s555, 15
        %s559 = scalar_select %p558, %s555, 15
        %s560 = smul.addr %s559, 2
        %s561 = smul.addr %s557, 32
        %s562 = sadd.s32 %s560, %s561
        %s563 = smul.addr %s562, 8
        %s564 = scalar_lea.vmem %s2, %s563
        %s565 = sadd.s32 %s31, 1
        %s566 = smul.u32 %s565, 16
        %p567 = scmp.lt.s32.totalorder %s566, 15
        %s568 = scalar_select %p567, %s566, 15
        %s569 = smul.u32 16, %s31
        %v571 = vld [vmem:[%s3] sm:$0xf]
        %v572 = vld [vmem:[%s3 + $0x4] sm:$0xf]
        %v573 = vld [vmem:[%s3 + $0x8] sm:$0xf]
        %v574 = vld [vmem:[%s3 + $0xc] sm:$0xf]
        %v575 = vld [vmem:[%s3 + $0x10] sm:$0xf]
        %v576 = vld [vmem:[%s3 + $0x14] sm:$0xf]
        %v577 = vld [vmem:[%s3 + $0x18] sm:$0xf]
        %v578 = vld [vmem:[%s3 + $0x1c] sm:$0xf]
        %v579 = vld [vmem:[%s3 + $0x20] sm:$0xf]
        %v580 = vld [vmem:[%s3 + $0x24] sm:$0xf]
        %v581 = vld [vmem:[%s3 + $0x28] sm:$0xf]
        %v582 = vld [vmem:[%s3 + $0x2c] sm:$0xf]
        %v583 = vld [vmem:[%s3 + $0x30] sm:$0xf]
        %v584 = vld [vmem:[%s3 + $0x34] sm:$0xf]
        %v585 = vld [vmem:[%s3 + $0x38] sm:$0xf]
        %v586 = vld [vmem:[%s3 + $0x3c] sm:$0xf]
        %v587 = vld [vmem:[%s533] sm:$0xff]
        %v588 = vld [vmem:[%s533 + $0x8] sm:$0xff]
        %v589 = vld [vmem:[%s533 + $0x10] sm:$0xff]
        %v590 = vld [vmem:[%s533 + $0x18] sm:$0xff]
        %v591 = vld [vmem:[%s533 + $0x20] sm:$0xff]
        %v592 = vld [vmem:[%s533 + $0x28] sm:$0xff]
        %v593 = vld [vmem:[%s533 + $0x30] sm:$0xff]
        %v594 = vld [vmem:[%s533 + $0x38] sm:$0xff]
        %v595 = vld [vmem:[%s533 + $0x40] sm:$0xff]
        %v596 = vld [vmem:[%s533 + $0x48] sm:$0xff]
        %v597 = vld [vmem:[%s533 + $0x50] sm:$0xff]
        %v598 = vld [vmem:[%s533 + $0x58] sm:$0xff]
        %v599 = vld [vmem:[%s533 + $0x60] sm:$0xff]
        %v600 = vld [vmem:[%s533 + $0x68] sm:$0xff]
        %v601 = vld [vmem:[%s533 + $0x70] sm:$0xff]
        %v602 = vld [vmem:[%s533 + $0x78] sm:$0xff]
        %v603 = vld [vmem:[%s533 + $0x80] sm:$0xff]
        %v604 = vld [vmem:[%s533 + $0x88] sm:$0xff]
        %v605 = vld [vmem:[%s533 + $0x90] sm:$0xff]
        %v606 = vld [vmem:[%s533 + $0x98] sm:$0xff]
        %v607 = vld [vmem:[%s533 + $0xa0] sm:$0xff]
        %v608 = vld [vmem:[%s533 + $0xa8] sm:$0xff]
        %v609 = vld [vmem:[%s533 + $0xb0] sm:$0xff]
        %v610 = vld [vmem:[%s533 + $0xb8] sm:$0xff]
        %v611 = vld [vmem:[%s533 + $0xc0] sm:$0xff]
        %v612 = vld [vmem:[%s533 + $0xc8] sm:$0xff]
        %v613 = vld [vmem:[%s533 + $0xd0] sm:$0xff]
        %v614 = vld [vmem:[%s533 + $0xd8] sm:$0xff]
        %v615 = vld [vmem:[%s533 + $0xe0] sm:$0xff]
        %v616 = vld [vmem:[%s533 + $0xe8] sm:$0xff]
        %v617 = vld [vmem:[%s533 + $0xf0] sm:$0xff]
        %v618 = vld [vmem:[%s533 + $0xf8] sm:$0xff]
        %v619 = vpack.c.bf16 %v588, %v587
        %v620 = vpack.c.bf16 %v590, %v589
        %v621 = vpack.c.bf16 %v592, %v591
        %v622 = vpack.c.bf16 %v594, %v593
        %v623 = vpack.c.bf16 %v596, %v595
        %v624 = vpack.c.bf16 %v598, %v597
        %v625 = vpack.c.bf16 %v600, %v599
        %v626 = vpack.c.bf16 %v602, %v601
        %v627 = vpack.c.bf16 %v604, %v603
        %v628 = vpack.c.bf16 %v606, %v605
        %v629 = vpack.c.bf16 %v608, %v607
        %v630 = vpack.c.bf16 %v610, %v609
        %v631 = vpack.c.bf16 %v612, %v611
        %v632 = vpack.c.bf16 %v614, %v613
        %v633 = vpack.c.bf16 %v616, %v615
        %v634 = vpack.c.bf16 %v618, %v617
        %v651 = vunpack.c.l.b16 %v571
        %v652 = vunpack.c.l.b16 %v572
        %v653 = vunpack.c.l.b16 %v573
        %v654 = vunpack.c.l.b16 %v574
        %v655 = vunpack.c.l.b16 %v575
        %v656 = vunpack.c.l.b16 %v576
        %v657 = vunpack.c.l.b16 %v577
        %v658 = vunpack.c.l.b16 %v578
        %v659 = vunpack.c.l.b16 %v579
        %v660 = vunpack.c.l.b16 %v580
        %v661 = vunpack.c.l.b16 %v581
        %v662 = vunpack.c.l.b16 %v582
        %v663 = vunpack.c.l.b16 %v583
        %v664 = vunpack.c.l.b16 %v584
        %v665 = vunpack.c.l.b16 %v585
        %v666 = vunpack.c.l.b16 %v586
        %v667 = vpack.c.b16 %v652, %v651
        %v668 = vpack.c.b16 %v654, %v653
        %v669 = vpack.c.b16 %v656, %v655
        %v670 = vpack.c.b16 %v658, %v657
        %v671 = vpack.c.b16 %v660, %v659
        %v672 = vpack.c.b16 %v662, %v661
        %v673 = vpack.c.b16 %v664, %v663
        %v674 = vpack.c.b16 %v666, %v665
        %683 = vmatprep.subr.bf16.mxu0 0
        %684 = vmatpush1.bf16.msra.mxu0 %v667
        %685 = vmatprep.subr.bf16.mxu0 0
        %686 = vmatpush1.bf16.msra.mxu0 %v668
        %687 = vmatprep.subr.bf16.mxu0 0
        %688 = vmatpush1.bf16.msra.mxu0 %v669
        %689 = vmatprep.subr.bf16.mxu0 0
        %690 = vmatpush1.bf16.msra.mxu0 %v670
        %691 = vmatprep.subr.bf16.mxu0 0
        %692 = vmatpush1.bf16.msra.mxu0 %v671
        %693 = vmatprep.subr.bf16.mxu0 0
        %694 = vmatpush1.bf16.msra.mxu0 %v672
        %695 = vmatprep.subr.bf16.mxu0 0
        %696 = vmatpush1.bf16.msra.mxu0 %v673
        %697 = vmatprep.subr.bf16.mxu0 0
        %698 = vmatpush1.bf16.msra.mxu0 %v674
        %699 = vmatprep.subr.bf16.mxu0 0
        %700 = vmatpush1.bf16.msra.mxu0 0
        %701 = vmatprep.subr.bf16.mxu0 0
        %702 = vmatpush1.bf16.msra.mxu0 0
        %703 = vmatprep.subr.bf16.mxu0 0
        %704 = vmatpush1.bf16.msra.mxu0 0
        %705 = vmatprep.subr.bf16.mxu0 0
        %706 = vmatpush1.bf16.msra.mxu0 0
        %707 = vmatprep.subr.bf16.mxu0 0
        %708 = vmatpush1.bf16.msra.mxu0 0
        %709 = vmatprep.subr.bf16.mxu0 0
        %710 = vmatpush1.bf16.msra.mxu0 0
        %711 = vmatprep.subr.bf16.mxu0 0
        %712 = vmatpush1.bf16.msra.mxu0 0
        %713 = vmatprep.subr.bf16.mxu0 0
        %714 = vmatpush1.bf16.msra.mxu0 0
        %715 = vmatprep.mubr.bf16.mxu0 0
        %716 = vmatmul.mubr.bf16.gmra.mrb[0].mxu0 %v619
        %v717 = vpop.f32.mrb[0].mxu0
        %v718 = vadd.f32 0.0, %v717
        %v719 = vpop.f32.mrb[0].mxu0
        %v720 = vpop.f32.mrb[0].mxu0
        %v721 = vadd.f32 0.0, %v720
        %v722 = vpop.f32.mrb[0].mxu0
        %723 = vmatprep.mubr.bf16.mxu0 0
        %724 = vmatmul.mubr.bf16.gmra.mrb[0].mxu0 %v620
        %v725 = vpop.f32.mrb[0].mxu0
        %v726 = vadd.f32 0.0, %v725
        %v727 = vpop.f32.mrb[0].mxu0
        %v728 = vpop.f32.mrb[0].mxu0
        %v729 = vadd.f32 0.0, %v728
        %v730 = vpop.f32.mrb[0].mxu0
        %731 = vmatprep.mubr.bf16.mxu0 0
        %732 = vmatmul.mubr.bf16.gmra.mrb[0].mxu0 %v621
        %v733 = vpop.f32.mrb[0].mxu0
        %v734 = vadd.f32 0.0, %v733
        %v735 = vpop.f32.mrb[0].mxu0
        %v736 = vpop.f32.mrb[0].mxu0
        %v737 = vadd.f32 0.0, %v736
        %v738 = vpop.f32.mrb[0].mxu0
        %739 = vmatprep.mubr.bf16.mxu0 0
        %740 = vmatmul.mubr.bf16.gmra.mrb[0].mxu0 %v622
        %v741 = vpop.f32.mrb[0].mxu0
        %v742 = vadd.f32 0.0, %v741
        %v743 = vpop.f32.mrb[0].mxu0
        %v744 = vpop.f32.mrb[0].mxu0
        %v745 = vadd.f32 0.0, %v744
        %v746 = vpop.f32.mrb[0].mxu0
        %747 = vmatprep.mubr.bf16.mxu0 0
        %748 = vmatmul.mubr.bf16.gmra.mrb[0].mxu0 %v623
        %v749 = vpop.f32.mrb[0].mxu0
        %v750 = vadd.f32 0.0, %v749
        %v751 = vpop.f32.mrb[0].mxu0
        %v752 = vpop.f32.mrb[0].mxu0
        %v753 = vadd.f32 0.0, %v752
        %v754 = vpop.f32.mrb[0].mxu0
        %755 = vmatprep.mubr.bf16.mxu0 0
        %756 = vmatmul.mubr.bf16.gmra.mrb[0].mxu0 %v624
        %v757 = vpop.f32.mrb[0].mxu0
        %v758 = vadd.f32 0.0, %v757
        %v759 = vpop.f32.mrb[0].mxu0
        %v760 = vpop.f32.mrb[0].mxu0
        %v761 = vadd.f32 0.0, %v760
        %v762 = vpop.f32.mrb[0].mxu0
        %763 = vmatprep.mubr.bf16.mxu0 0
        %764 = vmatmul.mubr.bf16.gmra.mrb[0].mxu0 %v625
        %v765 = vpop.f32.mrb[0].mxu0
        %v766 = vadd.f32 0.0, %v765
        %v767 = vpop.f32.mrb[0].mxu0
        %v768 = vpop.f32.mrb[0].mxu0
        %v769 = vadd.f32 0.0, %v768
        %v770 = vpop.f32.mrb[0].mxu0
        %771 = vmatprep.mubr.bf16.mxu0 0
        %772 = vmatmul.mubr.bf16.gmra.mrb[0].mxu0 %v626
        %v773 = vpop.f32.mrb[0].mxu0
        %v774 = vadd.f32 0.0, %v773
        %v775 = vpop.f32.mrb[0].mxu0
        %v776 = vpop.f32.mrb[0].mxu0
        %v777 = vadd.f32 0.0, %v776
        %v778 = vpop.f32.mrb[0].mxu0
        %779 = vmatprep.mubr.bf16.mxu0 0
        %780 = vmatmul.mubr.bf16.gmra.mrb[0].mxu0 %v627
        %v781 = vpop.f32.mrb[0].mxu0
        %v782 = vadd.f32 0.0, %v781
        %v783 = vpop.f32.mrb[0].mxu0
        %v784 = vpop.f32.mrb[0].mxu0
        %v785 = vadd.f32 0.0, %v784
        %v786 = vpop.f32.mrb[0].mxu0
        %787 = vmatprep.mubr.bf16.mxu0 0
        %788 = vmatmul.mubr.bf16.gmra.mrb[0].mxu0 %v628
        %v789 = vpop.f32.mrb[0].mxu0
        %v790 = vadd.f32 0.0, %v789
        %v791 = vpop.f32.mrb[0].mxu0
        %v792 = vpop.f32.mrb[0].mxu0
        %v793 = vadd.f32 0.0, %v792
        %v794 = vpop.f32.mrb[0].mxu0
        %795 = vmatprep.mubr.bf16.mxu0 0
        %796 = vmatmul.mubr.bf16.gmra.mrb[0].mxu0 %v629
        %v797 = vpop.f32.mrb[0].mxu0
        %v798 = vadd.f32 0.0, %v797
        %v799 = vpop.f32.mrb[0].mxu0
        %v800 = vpop.f32.mrb[0].mxu0
        %v801 = vadd.f32 0.0, %v800
        %v802 = vpop.f32.mrb[0].mxu0
        %803 = vmatprep.mubr.bf16.mxu0 0
        %804 = vmatmul.mubr.bf16.gmra.mrb[0].mxu0 %v630
        %v805 = vpop.f32.mrb[0].mxu0
        %v806 = vadd.f32 0.0, %v805
        %v807 = vpop.f32.mrb[0].mxu0
        %v808 = vpop.f32.mrb[0].mxu0
        %v809 = vadd.f32 0.0, %v808
        %v810 = vpop.f32.mrb[0].mxu0
        %811 = vmatprep.mubr.bf16.mxu0 0
        %812 = vmatmul.mubr.bf16.gmra.mrb[0].mxu0 %v631
        %v813 = vpop.f32.mrb[0].mxu0
        %v814 = vadd.f32 0.0, %v813
        %v815 = vpop.f32.mrb[0].mxu0
        %v816 = vpop.f32.mrb[0].mxu0
        %v817 = vadd.f32 0.0, %v816
        %v818 = vpop.f32.mrb[0].mxu0
        %819 = vmatprep.mubr.bf16.mxu0 0
        %820 = vmatmul.mubr.bf16.gmra.mrb[0].mxu0 %v632
        %v821 = vpop.f32.mrb[0].mxu0
        %v822 = vadd.f32 0.0, %v821
        %v823 = vpop.f32.mrb[0].mxu0
        %v824 = vpop.f32.mrb[0].mxu0
        %v825 = vadd.f32 0.0, %v824
        %v826 = vpop.f32.mrb[0].mxu0
        %827 = vmatprep.mubr.bf16.mxu0 0
        %828 = vmatmul.mubr.bf16.gmra.mrb[0].mxu0 %v633
        %v829 = vpop.f32.mrb[0].mxu0
        %v830 = vadd.f32 0.0, %v829
        %v831 = vpop.f32.mrb[0].mxu0
        %v832 = vpop.f32.mrb[0].mxu0
        %v833 = vadd.f32 0.0, %v832
        %v834 = vpop.f32.mrb[0].mxu0
        %835 = vmatprep.mubr.bf16.mxu0 0
        %836 = vmatmul.mubr.bf16.gmra.mrb[0].mxu0 %v634
        %v837 = vpop.f32.mrb[0].mxu0
        %v838 = vadd.f32 0.0, %v837
        %v839 = vpop.f32.mrb[0].mxu0
        %v840 = vpop.f32.mrb[0].mxu0
        %v841 = vadd.f32 0.0, %v840
        %v842 = vpop.f32.mrb[0].mxu0
        %843 = vdwg.mxu0
        %v844 = vld [vmem:[%s4] sm:$0x1]
        %v846 = vlaneseq
        %v847 = vshrl.u32 %v846, 7
        %v848 = vsub.s32 0, %v847
        %v849 = vrot.slane %v844, %v848
        %v851 = vmul.f32 %v718, %v849
        %v852 = vmul.f32 %v721, %v849
        %v853 = vmul.f32 %v726, %v849
        %v854 = vmul.f32 %v729, %v849
        %v855 = vmul.f32 %v734, %v849
        %v856 = vmul.f32 %v737, %v849
        %v857 = vmul.f32 %v742, %v849
        %v858 = vmul.f32 %v745, %v849
        %v859 = vmul.f32 %v750, %v849
        %v860 = vmul.f32 %v753, %v849
        %v861 = vmul.f32 %v758, %v849
        %v862 = vmul.f32 %v761, %v849
        %v863 = vmul.f32 %v766, %v849
        %v864 = vmul.f32 %v769, %v849
        %v865 = vmul.f32 %v774, %v849
        %v866 = vmul.f32 %v777, %v849
        %v867 = vmul.f32 %v782, %v849
        %v868 = vmul.f32 %v785, %v849
        %v869 = vmul.f32 %v790, %v849
        %v870 = vmul.f32 %v793, %v849
        %v871 = vmul.f32 %v798, %v849
        %v872 = vmul.f32 %v801, %v849
        %v873 = vmul.f32 %v806, %v849
        %v874 = vmul.f32 %v809, %v849
        %v875 = vmul.f32 %v814, %v849
        %v876 = vmul.f32 %v817, %v849
        %v877 = vmul.f32 %v822, %v849
        %v878 = vmul.f32 %v825, %v849
        %v879 = vmul.f32 %v830, %v849
        %v880 = vmul.f32 %v833, %v849
        %v881 = vmul.f32 %v838, %v849
        %v882 = vmul.f32 %v841, %v849
        %v883 = vld [vmem:[%s5] sm:$0x1]
        %v885 = vlaneseq
        %v886 = vshrl.u32 %v885, 7
        %v887 = vsub.s32 0, %v886
        %v888 = vrot.slane %v883, %v887
        %v890 = vadd.f32 %v851, %v888
        %v891 = vadd.f32 %v852, %v888
        %v892 = vadd.f32 %v853, %v888
        %v893 = vadd.f32 %v854, %v888
        %v894 = vadd.f32 %v855, %v888
        %v895 = vadd.f32 %v856, %v888
        %v896 = vadd.f32 %v857, %v888
        %v897 = vadd.f32 %v858, %v888
        %v898 = vadd.f32 %v859, %v888
        %v899 = vadd.f32 %v860, %v888
        %v900 = vadd.f32 %v861, %v888
        %v901 = vadd.f32 %v862, %v888
        %v902 = vadd.f32 %v863, %v888
        %v903 = vadd.f32 %v864, %v888
        %v904 = vadd.f32 %v865, %v888
        %v905 = vadd.f32 %v866, %v888
        %v906 = vadd.f32 %v867, %v888
        %v907 = vadd.f32 %v868, %v888
        %v908 = vadd.f32 %v869, %v888
        %v909 = vadd.f32 %v870, %v888
        %v910 = vadd.f32 %v871, %v888
        %v911 = vadd.f32 %v872, %v888
        %v912 = vadd.f32 %v873, %v888
        %v913 = vadd.f32 %v874, %v888
        %v914 = vadd.f32 %v875, %v888
        %v915 = vadd.f32 %v876, %v888
        %v916 = vadd.f32 %v877, %v888
        %v917 = vadd.f32 %v878, %v888
        %v918 = vadd.f32 %v879, %v888
        %v919 = vadd.f32 %v880, %v888
        %v920 = vadd.f32 %v881, %v888
        %v921 = vadd.f32 %v882, %v888
        %v922 = vmax.f32 %v890, 0.0
        %v923 = vmax.f32 %v891, 0.0
        %v924 = vmax.f32 %v892, 0.0
        %v925 = vmax.f32 %v893, 0.0
        %v926 = vmax.f32 %v894, 0.0
        %v927 = vmax.f32 %v895, 0.0
        %v928 = vmax.f32 %v896, 0.0
        %v929 = vmax.f32 %v897, 0.0
        %v930 = vmax.f32 %v898, 0.0
        %v931 = vmax.f32 %v899, 0.0
        %v932 = vmax.f32 %v900, 0.0
        %v933 = vmax.f32 %v901, 0.0
        %v934 = vmax.f32 %v902, 0.0
        %v935 = vmax.f32 %v903, 0.0
        %v936 = vmax.f32 %v904, 0.0
        %v937 = vmax.f32 %v905, 0.0
        %v938 = vmax.f32 %v906, 0.0
        %v939 = vmax.f32 %v907, 0.0
        %v940 = vmax.f32 %v908, 0.0
        %v941 = vmax.f32 %v909, 0.0
        %v942 = vmax.f32 %v910, 0.0
        %v943 = vmax.f32 %v911, 0.0
        %v944 = vmax.f32 %v912, 0.0
        %v945 = vmax.f32 %v913, 0.0
        %v946 = vmax.f32 %v914, 0.0
        %v947 = vmax.f32 %v915, 0.0
        %v948 = vmax.f32 %v916, 0.0
        %v949 = vmax.f32 %v917, 0.0
        %v950 = vmax.f32 %v918, 0.0
        %v951 = vmax.f32 %v919, 0.0
        %v952 = vmax.f32 %v920, 0.0
        %v953 = vmax.f32 %v921, 0.0
        %v954 = vpack.c.bf16 %v923, %v922
        %v955 = vpack.c.bf16 %v925, %v924
        %v956 = vpack.c.bf16 %v927, %v926
        %v957 = vpack.c.bf16 %v929, %v928
        %v958 = vpack.c.bf16 %v931, %v930
        %v959 = vpack.c.bf16 %v933, %v932
        %v960 = vpack.c.bf16 %v935, %v934
        %v961 = vpack.c.bf16 %v937, %v936
        %v962 = vpack.c.bf16 %v939, %v938
        %v963 = vpack.c.bf16 %v941, %v940
        %v964 = vpack.c.bf16 %v943, %v942
        %v965 = vpack.c.bf16 %v945, %v944
        %v966 = vpack.c.bf16 %v947, %v946
        %v967 = vpack.c.bf16 %v949, %v948
        %v968 = vpack.c.bf16 %v951, %v950
        %v969 = vpack.c.bf16 %v953, %v952
        %s970 = scalar_lea.vmem [#allocation2], 8
        %971 = vst [vmem:[%s970] sm:$0xff] %v954
        %972 = vst [vmem:[%s970 + $0x8] sm:$0xff] %v955
        %973 = vst [vmem:[%s970 + $0x10] sm:$0xff] %v956
        %974 = vst [vmem:[%s970 + $0x18] sm:$0xff] %v957
        %975 = vst [vmem:[%s970 + $0x20] sm:$0xff] %v958
        %976 = vst [vmem:[%s970 + $0x28] sm:$0xff] %v959
        %977 = vst [vmem:[%s970 + $0x30] sm:$0xff] %v960
        %978 = vst [vmem:[%s970 + $0x38] sm:$0xff] %v961
        %979 = vst [vmem:[%s970 + $0x40] sm:$0xff] %v962
        %980 = vst [vmem:[%s970 + $0x48] sm:$0xff] %v963
        %981 = vst [vmem:[%s970 + $0x50] sm:$0xff] %v964
        %982 = vst [vmem:[%s970 + $0x58] sm:$0xff] %v965
        %983 = vst [vmem:[%s970 + $0x60] sm:$0xff] %v966
        %984 = vst [vmem:[%s970 + $0x68] sm:$0xff] %v967
        %985 = vst [vmem:[%s970 + $0x70] sm:$0xff] %v968
        %986 = vst [vmem:[%s970 + $0x78] sm:$0xff] %v969
        %p987 = scmp.gt.s32.totalorder %s31, 0
        // Predicated region
        $region69: #{bottleneck_forward.1} parent=67 // pred_check
          %p988 = pneg %p987
        $region70: #{bottleneck_forward.1} parent=67 // pred_check_branch
          %990 = sbr.rel (%p988) target = $region72
        $region71: #{bottleneck_forward.1} parent=67 // pred_region
          %v991 = vld [vmem:[%s547] sm:$0xff]
          %v992 = vld [vmem:[%s547 + $0x8] sm:$0xff]
          %v993 = vpack.c.bf16 %v992, %v991
          %994 = vmatprep.subr.bf16.mxu0 0
          %995 = vmatpush1.bf16.msra.mxu0 %v667
          %996 = vmatprep.subr.bf16.mxu0 0
          %997 = vmatpush1.bf16.msra.mxu0 %v668
          %998 = vmatprep.subr.bf16.mxu0 0
          %999 = vmatpush1.bf16.msra.mxu0 %v669
          %1000 = vmatprep.subr.bf16.mxu0 0
          %1001 = vmatpush1.bf16.msra.mxu0 %v670
          %1002 = vmatprep.subr.bf16.mxu0 0
          %1003 = vmatpush1.bf16.msra.mxu0 %v671
          %1004 = vmatprep.subr.bf16.mxu0 0
          %1005 = vmatpush1.bf16.msra.mxu0 %v672
          %1006 = vmatprep.subr.bf16.mxu0 0
          %1007 = vmatpush1.bf16.msra.mxu0 %v673
          %1008 = vmatprep.subr.bf16.mxu0 0
          %1009 = vmatpush1.bf16.msra.mxu0 %v674
          %1010 = vmatprep.subr.bf16.mxu0 0
          %1011 = vmatpush1.bf16.msra.mxu0 0
          %1012 = vmatprep.subr.bf16.mxu0 0
          %1013 = vmatpush1.bf16.msra.mxu0 0
          %1014 = vmatprep.subr.bf16.mxu0 0
          %1015 = vmatpush1.bf16.msra.mxu0 0
          %1016 = vmatprep.subr.bf16.mxu0 0
          %1017 = vmatpush1.bf16.msra.mxu0 0
          %1018 = vmatprep.subr.bf16.mxu0 0
          %1019 = vmatpush1.bf16.msra.mxu0 0
          %1020 = vmatprep.subr.bf16.mxu0 0
          %1021 = vmatpush1.bf16.msra.mxu0 0
          %1022 = vmatprep.subr.bf16.mxu0 0
          %1023 = vmatpush1.bf16.msra.mxu0 0
          %1024 = vmatprep.subr.bf16.mxu0 0
          %1025 = vmatpush1.bf16.msra.mxu0 0
          %1026 = vmatprep.mubr.bf16.mxu0 0
          %1027 = vmatmul.mubr.bf16.gmra.mrb[0].mxu0 %v993
          %v1028 = vpop.f32.mrb[0].mxu0
          %v1029 = vadd.f32 0.0, %v1028
          %v1030 = vpop.f32.mrb[0].mxu0
          %v1031 = vpop.f32.mrb[0].mxu0
          %v1032 = vadd.f32 0.0, %v1031
          %v1033 = vpop.f32.mrb[0].mxu0
          %1034 = vdwg.mxu0
          %v1035 = vld [vmem:[%s4] sm:$0x1]
          %v1037 = vlaneseq
          %v1038 = vshrl.u32 %v1037, 7
          %v1039 = vsub.s32 0, %v1038
          %v1040 = vrot.slane %v1035, %v1039
          %v1042 = vmul.f32 %v1029, %v1040
          %v1043 = vmul.f32 %v1032, %v1040
          %v1044 = vld [vmem:[%s5] sm:$0x1]
          %v1046 = vlaneseq
          %v1047 = vshrl.u32 %v1046, 7
          %v1048 = vsub.s32 0, %v1047
          %v1049 = vrot.slane %v1044, %v1048
          %v1051 = vadd.f32 %v1042, %v1049
          %v1052 = vadd.f32 %v1043, %v1049
          %v1053 = vmax.f32 %v1051, 0.0
          %v1054 = vmax.f32 %v1052, 0.0
          %v1055 = vpack.c.bf16 %v1054, %v1053
          %1056 = vst [vmem:[#allocation2] sm:$0xff] %v1055
        $region72: #{bottleneck_forward.1} parent=67 // pred_fallthru
          _
        %p1057 = scmp.eq.s32.totalorder %s31, 0
        // Predicated region
        $region73: #{bottleneck_forward.1} parent=67 // pred_check
          %p1058 = pneg %p1057
        $region74: #{bottleneck_forward.1} parent=67 // pred_check_branch
          %1060 = sbr.rel (%p1058) target = $region76
        $region75: #{bottleneck_forward.1} parent=67 // pred_region
          %1061 = vst [vmem:[#allocation2] sm:$0xff] 0
        $region76: #{bottleneck_forward.1} parent=67 // pred_fallthru
          _
        %p1062 = scmp.lt.s32.totalorder %s31, 0
        // Predicated region
        $region77: #{bottleneck_forward.1} parent=67 // pred_check
          %p1063 = pneg %p1062
        $region78: #{bottleneck_forward.1} parent=67 // pred_check_branch
          %1065 = sbr.rel (%p1063) target = $region80
        $region79: #{bottleneck_forward.1} parent=67 // pred_region
          %v1066 = vld [vmem:[%s564] sm:$0xff]
          %v1067 = vld [vmem:[%s564 + $0x8] sm:$0xff]
          %v1068 = vpack.c.bf16 %v1067, %v1066
          %1069 = vmatprep.subr.bf16.mxu0 0
          %1070 = vmatpush1.bf16.msra.mxu0 %v667
          %1071 = vmatprep.subr.bf16.mxu0 0
          %1072 = vmatpush1.bf16.msra.mxu0 %v668
          %1073 = vmatprep.subr.bf16.mxu0 0
          %1074 = vmatpush1.bf16.msra.mxu0 %v669
          %1075 = vmatprep.subr.bf16.mxu0 0
          %1076 = vmatpush1.bf16.msra.mxu0 %v670
          %1077 = vmatprep.subr.bf16.mxu0 0
          %1078 = vmatpush1.bf16.msra.mxu0 %v671
          %1079 = vmatprep.subr.bf16.mxu0 0
          %1080 = vmatpush1.bf16.msra.mxu0 %v672
          %1081 = vmatprep.subr.bf16.mxu0 0
          %1082 = vmatpush1.bf16.msra.mxu0 %v673
          %1083 = vmatprep.subr.bf16.mxu0 0
          %1084 = vmatpush1.bf16.msra.mxu0 %v674
          %1085 = vmatprep.subr.bf16.mxu0 0
          %1086 = vmatpush1.bf16.msra.mxu0 0
          %1087 = vmatprep.subr.bf16.mxu0 0
          %1088 = vmatpush1.bf16.msra.mxu0 0
          %1089 = vmatprep.subr.bf16.mxu0 0
          %1090 = vmatpush1.bf16.msra.mxu0 0
          %1091 = vmatprep.subr.bf16.mxu0 0
          %1092 = vmatpush1.bf16.msra.mxu0 0
          %1093 = vmatprep.subr.bf16.mxu0 0
          %1094 = vmatpush1.bf16.msra.mxu0 0
          %1095 = vmatprep.subr.bf16.mxu0 0
          %1096 = vmatpush1.bf16.msra.mxu0 0
          %1097 = vmatprep.subr.bf16.mxu0 0
          %1098 = vmatpush1.bf16.msra.mxu0 0
          %1099 = vmatprep.subr.bf16.mxu0 0
          %1100 = vmatpush1.bf16.msra.mxu0 0
          %1101 = vmatprep.mubr.bf16.mxu0 0
          %1102 = vmatmul.mubr.bf16.gmra.mrb[0].mxu0 %v1068
          %v1103 = vpop.f32.mrb[0].mxu0
          %v1104 = vadd.f32 0.0, %v1103
          %v1105 = vpop.f32.mrb[0].mxu0
          %v1106 = vpop.f32.mrb[0].mxu0
          %v1107 = vadd.f32 0.0, %v1106
          %v1108 = vpop.f32.mrb[0].mxu0
          %1109 = vdwg.mxu0
          %v1110 = vld [vmem:[%s4] sm:$0x1]
          %v1112 = vlaneseq
          %v1113 = vshrl.u32 %v1112, 7
          %v1114 = vsub.s32 0, %v1113
          %v1115 = vrot.slane %v1110, %v1114
          %v1117 = vmul.f32 %v1104, %v1115
          %v1118 = vmul.f32 %v1107, %v1115
          %v1119 = vld [vmem:[%s5] sm:$0x1]
          %v1121 = vlaneseq
          %v1122 = vshrl.u32 %v1121, 7
          %v1123 = vsub.s32 0, %v1122
          %v1124 = vrot.slane %v1119, %v1123
          %v1126 = vadd.f32 %v1117, %v1124
          %v1127 = vadd.f32 %v1118, %v1124
          %v1128 = vmax.f32 %v1126, 0.0
          %v1129 = vmax.f32 %v1127, 0.0
          %v1130 = vpack.c.bf16 %v1129, %v1128
          %s1131 = scalar_lea.vmem [#allocation2], 136
          %1132 = vst [vmem:[%s1131] sm:$0xff] %v1130
        $region80: #{bottleneck_forward.1} parent=67 // pred_fallthru
          _
        // Predicated region
        $region81: #{bottleneck_forward.1} parent=67 // pred_check
          %p1133 = pneg %p1057
        $region82: #{bottleneck_forward.1} parent=67 // pred_check_branch
          %1135 = sbr.rel (%p1133) target = $region84
        $region83: #{bottleneck_forward.1} parent=67 // pred_region
          %s1136 = scalar_lea.vmem [#allocation2], 136
          %1137 = vst [vmem:[%s1136] sm:$0xff] 0
        $region84: #{bottleneck_forward.1} parent=67 // pred_fallthru
          _
        %v1138 = vld [vmem:[#allocation2] sm:$0xff]
        %v1139 = vld [vmem:[#allocation2 + $0x8] sm:$0xff]
        %v1140 = vld [vmem:[#allocation2 + $0x10] sm:$0xff]
        %v1141 = vld [vmem:[#allocation2 + $0x18] sm:$0xff]
        %v1142 = vld [vmem:[#allocation2 + $0x20] sm:$0xff]
        %v1143 = vld [vmem:[#allocation2 + $0x28] sm:$0xff]
        %v1144 = vld [vmem:[#allocation2 + $0x30] sm:$0xff]
        %v1145 = vld [vmem:[#allocation2 + $0x38] sm:$0xff]
        %v1146 = vld [vmem:[#allocation2 + $0x40] sm:$0xff]
        %v1147 = vld [vmem:[#allocation2 + $0x48] sm:$0xff]
        %v1148 = vld [vmem:[#allocation2 + $0x50] sm:$0xff]
        %v1149 = vld [vmem:[#allocation2 + $0x58] sm:$0xff]
        %v1150 = vld [vmem:[#allocation2 + $0x60] sm:$0xff]
        %v1151 = vld [vmem:[#allocation2 + $0x68] sm:$0xff]
        %v1152 = vld [vmem:[#allocation2 + $0x70] sm:$0xff]
        %v1153 = vld [vmem:[#allocation2 + $0x78] sm:$0xff]
        %v1154 = vld [vmem:[#allocation2 + $0x80] sm:$0xff]
        %v1155 = vld [vmem:[#allocation2 + $0x88] sm:$0xff]
        %v1157 = vshrl.u32 %v1138, 16
        %v1159 = vrot.slane %v1157, 7
        %v1160 = vshll.u32 %v1138, 16
        %v1162 = vor.u32 %v1159, %v1160
        %v1164 = vshrl.u32 %v1139, 16
        %v1166 = vrot.slane %v1164, 7
        %v1167 = vshll.u32 %v1139, 16
        %v1169 = vor.u32 %v1166, %v1167
        %v1171 = vshrl.u32 %v1140, 16
        %v1173 = vrot.slane %v1171, 7
        %v1174 = vshll.u32 %v1140, 16
        %v1176 = vor.u32 %v1173, %v1174
        %v1178 = vshrl.u32 %v1141, 16
        %v1180 = vrot.slane %v1178, 7
        %v1181 = vshll.u32 %v1141, 16
        %v1183 = vor.u32 %v1180, %v1181
        %v1185 = vshrl.u32 %v1142, 16
        %v1187 = vrot.slane %v1185, 7
        %v1188 = vshll.u32 %v1142, 16
        %v1190 = vor.u32 %v1187, %v1188
        %v1192 = vshrl.u32 %v1143, 16
        %v1194 = vrot.slane %v1192, 7
        %v1195 = vshll.u32 %v1143, 16
        %v1197 = vor.u32 %v1194, %v1195
        %v1199 = vshrl.u32 %v1144, 16
        %v1201 = vrot.slane %v1199, 7
        %v1202 = vshll.u32 %v1144, 16
        %v1204 = vor.u32 %v1201, %v1202
        %v1206 = vshrl.u32 %v1145, 16
        %v1208 = vrot.slane %v1206, 7
        %v1209 = vshll.u32 %v1145, 16
        %v1211 = vor.u32 %v1208, %v1209
        %v1213 = vshrl.u32 %v1146, 16
        %v1215 = vrot.slane %v1213, 7
        %v1216 = vshll.u32 %v1146, 16
        %v1218 = vor.u32 %v1215, %v1216
        %v1220 = vshrl.u32 %v1147, 16
        %v1222 = vrot.slane %v1220, 7
        %v1223 = vshll.u32 %v1147, 16
        %v1225 = vor.u32 %v1222, %v1223
        %v1227 = vshrl.u32 %v1148, 16
        %v1229 = vrot.slane %v1227, 7
        %v1230 = vshll.u32 %v1148, 16
        %v1232 = vor.u32 %v1229, %v1230
        %v1234 = vshrl.u32 %v1149, 16
        %v1236 = vrot.slane %v1234, 7
        %v1237 = vshll.u32 %v1149, 16
        %v1239 = vor.u32 %v1236, %v1237
        %v1241 = vshrl.u32 %v1150, 16
        %v1243 = vrot.slane %v1241, 7
        %v1244 = vshll.u32 %v1150, 16
        %v1246 = vor.u32 %v1243, %v1244
        %v1248 = vshrl.u32 %v1151, 16
        %v1250 = vrot.slane %v1248, 7
        %v1251 = vshll.u32 %v1151, 16
        %v1253 = vor.u32 %v1250, %v1251
        %v1255 = vshrl.u32 %v1152, 16
        %v1257 = vrot.slane %v1255, 7
        %v1258 = vshll.u32 %v1152, 16
        %v1260 = vor.u32 %v1257, %v1258
        %v1262 = vshrl.u32 %v1153, 16
        %v1264 = vrot.slane %v1262, 7
        %v1265 = vshll.u32 %v1153, 16
        %v1267 = vor.u32 %v1264, %v1265
        %v1269 = vshrl.u32 %v1154, 16
        %v1271 = vrot.slane %v1269, 7
        %v1272 = vshll.u32 %v1154, 16
        %v1274 = vor.u32 %v1271, %v1272
        %v1276 = vshrl.u32 %v1155, 16
        %v1278 = vrot.slane %v1276, 7
        %v1279 = vshll.u32 %v1155, 16
        %v1281 = vor.u32 %v1278, %v1279
        %vm1300 = vcmask 1040384
        %vm1301 = vsmask.f32 256
        %vm1302 = vmand %vm1300, %vm1301
        %v1303 = vsel %vm1302, 0, %v1162
        %v1304 = vsel %vm1302, 0, %v1169
        %v1305 = vsel %vm1302, 0, %v1176
        %v1306 = vsel %vm1302, 0, %v1183
        %v1307 = vsel %vm1302, 0, %v1190
        %v1308 = vsel %vm1302, 0, %v1197
        %v1309 = vsel %vm1302, 0, %v1204
        %v1310 = vsel %vm1302, 0, %v1211
        %v1311 = vsel %vm1302, 0, %v1218
        %v1312 = vsel %vm1302, 0, %v1225
        %v1313 = vsel %vm1302, 0, %v1232
        %v1314 = vsel %vm1302, 0, %v1239
        %v1315 = vsel %vm1302, 0, %v1246
        %v1316 = vsel %vm1302, 0, %v1253
        %v1317 = vsel %vm1302, 0, %v1260
        %v1318 = vsel %vm1302, 0, %v1267
        %v1319 = vsel %vm1302, 0, %v1274
        %v1320 = vsel %vm1302, 0, %v1281
        %v1321 = vrot.slane %v1160, 1
        %v1322 = vor.u32 %v1157, %v1321
        %v1323 = vrot.slane %v1167, 1
        %v1324 = vor.u32 %v1164, %v1323
        %v1325 = vrot.slane %v1174, 1
        %v1326 = vor.u32 %v1171, %v1325
        %v1327 = vrot.slane %v1181, 1
        %v1328 = vor.u32 %v1178, %v1327
        %v1329 = vrot.slane %v1188, 1
        %v1330 = vor.u32 %v1185, %v1329
        %v1331 = vrot.slane %v1195, 1
        %v1332 = vor.u32 %v1192, %v1331
        %v1333 = vrot.slane %v1202, 1
        %v1334 = vor.u32 %v1199, %v1333
        %v1335 = vrot.slane %v1209, 1
        %v1336 = vor.u32 %v1206, %v1335
        %v1337 = vrot.slane %v1216, 1
        %v1338 = vor.u32 %v1213, %v1337
        %v1339 = vrot.slane %v1223, 1
        %v1340 = vor.u32 %v1220, %v1339
        %v1341 = vrot.slane %v1230, 1
        %v1342 = vor.u32 %v1227, %v1341
        %v1343 = vrot.slane %v1237, 1
        %v1344 = vor.u32 %v1234, %v1343
        %v1345 = vrot.slane %v1244, 1
        %v1346 = vor.u32 %v1241, %v1345
        %v1347 = vrot.slane %v1251, 1
        %v1348 = vor.u32 %v1248, %v1347
        %v1349 = vrot.slane %v1258, 1
        %v1350 = vor.u32 %v1255, %v1349
        %v1351 = vrot.slane %v1265, 1
        %v1352 = vor.u32 %v1262, %v1351
        %v1353 = vrot.slane %v1272, 1
        %v1354 = vor.u32 %v1269, %v1353
        %v1355 = vrot.slane %v1279, 1
        %v1356 = vor.u32 %v1276, %v1355
        %vm1375 = vcmask 1047552
        %vm1376 = vsmask.f32 7424
        %vm1377 = vmand %vm1375, %vm1376
        %v1378 = vsel %vm1377, %v1322, 0
        %v1379 = vsel %vm1377, %v1324, 0
        %v1380 = vsel %vm1377, %v1326, 0
        %v1381 = vsel %vm1377, %v1328, 0
        %v1382 = vsel %vm1377, %v1330, 0
        %v1383 = vsel %vm1377, %v1332, 0
        %v1384 = vsel %vm1377, %v1334, 0
        %v1385 = vsel %vm1377, %v1336, 0
        %v1386 = vsel %vm1377, %v1338, 0
        %v1387 = vsel %vm1377, %v1340, 0
        %v1388 = vsel %vm1377, %v1342, 0
        %v1389 = vsel %vm1377, %v1344, 0
        %v1390 = vsel %vm1377, %v1346, 0
        %v1391 = vsel %vm1377, %v1348, 0
        %v1392 = vsel %vm1377, %v1350, 0
        %v1393 = vsel %vm1377, %v1352, 0
        %v1394 = vsel %vm1377, %v1354, 0
        %v1395 = vsel %vm1377, %v1356, 0
        %v1396 = vld [vmem:[%s6] sm:$0xf]
        %v1397 = vld [vmem:[%s6 + $0x4] sm:$0xf]
        %v1398 = vld [vmem:[%s6 + $0x8] sm:$0xf]
        %v1399 = vld [vmem:[%s6 + $0xc] sm:$0xf]
        %v1400 = vld [vmem:[%s6 + $0x10] sm:$0xf]
        %v1401 = vld [vmem:[%s6 + $0x14] sm:$0xf]
        %v1402 = vld [vmem:[%s6 + $0x18] sm:$0xf]
        %v1403 = vld [vmem:[%s6 + $0x1c] sm:$0xf]
        %v1404 = vld [vmem:[%s6 + $0x20] sm:$0xf]
        %v1405 = vld [vmem:[%s6 + $0x24] sm:$0xf]
        %v1406 = vld [vmem:[%s6 + $0x28] sm:$0xf]
        %v1407 = vld [vmem:[%s6 + $0x2c] sm:$0xf]
        %v1408 = vld [vmem:[%s6 + $0x30] sm:$0xf]
        %v1409 = vld [vmem:[%s6 + $0x34] sm:$0xf]
        %v1410 = vld [vmem:[%s6 + $0x38] sm:$0xf]
        %v1411 = vld [vmem:[%s6 + $0x3c] sm:$0xf]
        %v1412 = vld [vmem:[%s6 + $0x40] sm:$0xf]
        %v1413 = vld [vmem:[%s6 + $0x44] sm:$0xf]
        %v1414 = vld [vmem:[%s6 + $0x48] sm:$0xf]
        %v1415 = vld [vmem:[%s6 + $0x4c] sm:$0xf]
        %v1416 = vld [vmem:[%s6 + $0x50] sm:$0xf]
        %v1417 = vld [vmem:[%s6 + $0x54] sm:$0xf]
        %v1418 = vld [vmem:[%s6 + $0x58] sm:$0xf]
        %v1419 = vld [vmem:[%s6 + $0x5c] sm:$0xf]
        %v1420 = vld [vmem:[%s6 + $0x60] sm:$0xf]
        %v1421 = vld [vmem:[%s6 + $0x64] sm:$0xf]
        %v1422 = vld [vmem:[%s6 + $0x68] sm:$0xf]
        %v1423 = vld [vmem:[%s6 + $0x6c] sm:$0xf]
        %v1424 = vld [vmem:[%s6 + $0x70] sm:$0xf]
        %v1425 = vld [vmem:[%s6 + $0x74] sm:$0xf]
        %v1426 = vld [vmem:[%s6 + $0x78] sm:$0xf]
        %v1427 = vld [vmem:[%s6 + $0x7c] sm:$0xf]
        %v1428 = vld [vmem:[%s6 + $0x80] sm:$0xf]
        %v1429 = vld [vmem:[%s6 + $0x84] sm:$0xf]
        %v1430 = vld [vmem:[%s6 + $0x88] sm:$0xf]
        %v1431 = vld [vmem:[%s6 + $0x8c] sm:$0xf]
        %v1432 = vld [vmem:[%s6 + $0x90] sm:$0xf]
        %v1433 = vld [vmem:[%s6 + $0x94] sm:$0xf]
        %v1434 = vld [vmem:[%s6 + $0x98] sm:$0xf]
        %v1435 = vld [vmem:[%s6 + $0x9c] sm:$0xf]
        %v1436 = vld [vmem:[%s6 + $0xa0] sm:$0xf]
        %v1437 = vld [vmem:[%s6 + $0xa4] sm:$0xf]
        %v1438 = vld [vmem:[%s6 + $0xa8] sm:$0xf]
        %v1439 = vld [vmem:[%s6 + $0xac] sm:$0xf]
        %v1440 = vld [vmem:[%s6 + $0xb0] sm:$0xf]
        %v1441 = vld [vmem:[%s6 + $0xb4] sm:$0xf]
        %v1442 = vld [vmem:[%s6 + $0xb8] sm:$0xf]
        %v1443 = vld [vmem:[%s6 + $0xbc] sm:$0xf]
        %s1444 = scalar_lea.vmem %s6, 192
        %v1445 = vld [vmem:[%s1444] sm:$0xf]
        %v1446 = vld [vmem:[%s1444 + $0x4] sm:$0xf]
        %v1447 = vld [vmem:[%s1444 + $0x8] sm:$0xf]
        %v1448 = vld [vmem:[%s1444 + $0xc] sm:$0xf]
        %v1449 = vld [vmem:[%s1444 + $0x10] sm:$0xf]
        %v1450 = vld [vmem:[%s1444 + $0x14] sm:$0xf]
        %v1451 = vld [vmem:[%s1444 + $0x18] sm:$0xf]
        %v1452 = vld [vmem:[%s1444 + $0x1c] sm:$0xf]
        %v1453 = vld [vmem:[%s1444 + $0x20] sm:$0xf]
        %v1454 = vld [vmem:[%s1444 + $0x24] sm:$0xf]
        %v1455 = vld [vmem:[%s1444 + $0x28] sm:$0xf]
        %v1456 = vld [vmem:[%s1444 + $0x2c] sm:$0xf]
        %v1457 = vld [vmem:[%s1444 + $0x30] sm:$0xf]
        %v1458 = vld [vmem:[%s1444 + $0x34] sm:$0xf]
        %v1459 = vld [vmem:[%s1444 + $0x38] sm:$0xf]
        %v1460 = vld [vmem:[%s1444 + $0x3c] sm:$0xf]
        %v1461 = vld [vmem:[%s1444 + $0x40] sm:$0xf]
        %v1462 = vld [vmem:[%s1444 + $0x44] sm:$0xf]
        %v1463 = vld [vmem:[%s1444 + $0x48] sm:$0xf]
        %v1464 = vld [vmem:[%s1444 + $0x4c] sm:$0xf]
        %v1465 = vld [vmem:[%s1444 + $0x50] sm:$0xf]
        %v1466 = vld [vmem:[%s1444 + $0x54] sm:$0xf]
        %v1467 = vld [vmem:[%s1444 + $0x58] sm:$0xf]
        %v1468 = vld [vmem:[%s1444 + $0x5c] sm:$0xf]
        %v1469 = vld [vmem:[%s1444 + $0x60] sm:$0xf]
        %v1470 = vld [vmem:[%s1444 + $0x64] sm:$0xf]
        %v1471 = vld [vmem:[%s1444 + $0x68] sm:$0xf]
        %v1472 = vld [vmem:[%s1444 + $0x6c] sm:$0xf]
        %v1473 = vld [vmem:[%s1444 + $0x70] sm:$0xf]
        %v1474 = vld [vmem:[%s1444 + $0x74] sm:$0xf]
        %v1475 = vld [vmem:[%s1444 + $0x78] sm:$0xf]
        %v1476 = vld [vmem:[%s1444 + $0x7c] sm:$0xf]
        %v1477 = vld [vmem:[%s1444 + $0x80] sm:$0xf]
        %v1478 = vld [vmem:[%s1444 + $0x84] sm:$0xf]
        %v1479 = vld [vmem:[%s1444 + $0x88] sm:$0xf]
        %v1480 = vld [vmem:[%s1444 + $0x8c] sm:$0xf]
        %v1481 = vld [vmem:[%s1444 + $0x90] sm:$0xf]
        %v1482 = vld [vmem:[%s1444 + $0x94] sm:$0xf]
        %v1483 = vld [vmem:[%s1444 + $0x98] sm:$0xf]
        %v1484 = vld [vmem:[%s1444 + $0x9c] sm:$0xf]
        %v1485 = vld [vmem:[%s1444 + $0xa0] sm:$0xf]
        %v1486 = vld [vmem:[%s1444 + $0xa4] sm:$0xf]
        %v1487 = vld [vmem:[%s1444 + $0xa8] sm:$0xf]
        %v1488 = vld [vmem:[%s1444 + $0xac] sm:$0xf]
        %v1489 = vld [vmem:[%s1444 + $0xb0] sm:$0xf]
        %v1490 = vld [vmem:[%s1444 + $0xb4] sm:$0xf]
        %v1491 = vld [vmem:[%s1444 + $0xb8] sm:$0xf]
        %v1492 = vld [vmem:[%s1444 + $0xbc] sm:$0xf]
        %v1541 = vunpack.c.l.b16 %v1445
        %v1542 = vunpack.c.l.b16 %v1446
        %v1543 = vunpack.c.l.b16 %v1447
        %v1544 = vunpack.c.l.b16 %v1448
        %v1545 = vunpack.c.l.b16 %v1449
        %v1546 = vunpack.c.l.b16 %v1450
        %v1547 = vunpack.c.l.b16 %v1451
        %v1548 = vunpack.c.l.b16 %v1452
        %v1549 = vunpack.c.l.b16 %v1453
        %v1550 = vunpack.c.l.b16 %v1454
        %v1551 = vunpack.c.l.b16 %v1455
        %v1552 = vunpack.c.l.b16 %v1456
        %v1553 = vunpack.c.l.b16 %v1457
        %v1554 = vunpack.c.l.b16 %v1458
        %v1555 = vunpack.c.l.b16 %v1459
        %v1556 = vunpack.c.l.b16 %v1460
        %v1557 = vunpack.c.l.b16 %v1461
        %v1558 = vunpack.c.l.b16 %v1462
        %v1559 = vunpack.c.l.b16 %v1463
        %v1560 = vunpack.c.l.b16 %v1464
        %v1561 = vunpack.c.l.b16 %v1465
        %v1562 = vunpack.c.l.b16 %v1466
        %v1563 = vunpack.c.l.b16 %v1467
        %v1564 = vunpack.c.l.b16 %v1468
        %v1565 = vunpack.c.l.b16 %v1469
        %v1566 = vunpack.c.l.b16 %v1470
        %v1567 = vunpack.c.l.b16 %v1471
        %v1568 = vunpack.c.l.b16 %v1472
        %v1569 = vunpack.c.l.b16 %v1473
        %v1570 = vunpack.c.l.b16 %v1474
        %v1571 = vunpack.c.l.b16 %v1475
        %v1572 = vunpack.c.l.b16 %v1476
        %v1573 = vunpack.c.l.b16 %v1477
        %v1574 = vunpack.c.l.b16 %v1478
        %v1575 = vunpack.c.l.b16 %v1479
        %v1576 = vunpack.c.l.b16 %v1480
        %v1577 = vunpack.c.l.b16 %v1481
        %v1578 = vunpack.c.l.b16 %v1482
        %v1579 = vunpack.c.l.b16 %v1483
        %v1580 = vunpack.c.l.b16 %v1484
        %v1581 = vunpack.c.l.b16 %v1485
        %v1582 = vunpack.c.l.b16 %v1486
        %v1583 = vunpack.c.l.b16 %v1487
        %v1584 = vunpack.c.l.b16 %v1488
        %v1585 = vunpack.c.l.b16 %v1489
        %v1586 = vunpack.c.l.b16 %v1490
        %v1587 = vunpack.c.l.b16 %v1491
        %v1588 = vunpack.c.l.b16 %v1492
        %v1589 = vpack.c.b16 %v1542, %v1541
        %v1590 = vpack.c.b16 %v1544, %v1543
        %v1591 = vpack.c.b16 %v1546, %v1545
        %v1592 = vpack.c.b16 %v1548, %v1547
        %v1593 = vpack.c.b16 %v1550, %v1549
        %v1594 = vpack.c.b16 %v1552, %v1551
        %v1595 = vpack.c.b16 %v1554, %v1553
        %v1596 = vpack.c.b16 %v1556, %v1555
        %v1597 = vpack.c.b16 %v1558, %v1557
        %v1598 = vpack.c.b16 %v1560, %v1559
        %v1599 = vpack.c.b16 %v1562, %v1561
        %v1600 = vpack.c.b16 %v1564, %v1563
        %v1601 = vpack.c.b16 %v1566, %v1565
        %v1602 = vpack.c.b16 %v1568, %v1567
        %v1603 = vpack.c.b16 %v1570, %v1569
        %v1604 = vpack.c.b16 %v1572, %v1571
        %v1605 = vpack.c.b16 %v1574, %v1573
        %v1606 = vpack.c.b16 %v1576, %v1575
        %v1607 = vpack.c.b16 %v1578, %v1577
        %v1608 = vpack.c.b16 %v1580, %v1579
        %v1609 = vpack.c.b16 %v1582, %v1581
        %v1610 = vpack.c.b16 %v1584, %v1583
        %v1611 = vpack.c.b16 %v1586, %v1585
        %v1612 = vpack.c.b16 %v1588, %v1587
        %1637 = vmatprep.subr.bf16.mxu0 0
        %1638 = vmatpush1.bf16.msra.mxu0 %v1589
        %1639 = vmatprep.subr.bf16.mxu0 0
        %1640 = vmatpush1.bf16.msra.mxu0 %v1590
        %1641 = vmatprep.subr.bf16.mxu0 0
        %1642 = vmatpush1.bf16.msra.mxu0 %v1591
        %1643 = vmatprep.subr.bf16.mxu0 0
        %1644 = vmatpush1.bf16.msra.mxu0 %v1592
        %1645 = vmatprep.subr.bf16.mxu0 0
        %1646 = vmatpush1.bf16.msra.mxu0 %v1593
        %1647 = vmatprep.subr.bf16.mxu0 0
        %1648 = vmatpush1.bf16.msra.mxu0 %v1594
        %1649 = vmatprep.subr.bf16.mxu0 0
        %1650 = vmatpush1.bf16.msra.mxu0 %v1595
        %1651 = vmatprep.subr.bf16.mxu0 0
        %1652 = vmatpush1.bf16.msra.mxu0 %v1596
        %1653 = vmatprep.subr.bf16.mxu0 0
        %1654 = vmatpush1.bf16.msra.mxu0 %v1597
        %1655 = vmatprep.subr.bf16.mxu0 0
        %1656 = vmatpush1.bf16.msra.mxu0 %v1598
        %1657 = vmatprep.subr.bf16.mxu0 0
        %1658 = vmatpush1.bf16.msra.mxu0 %v1599
        %1659 = vmatprep.subr.bf16.mxu0 0
        %1660 = vmatpush1.bf16.msra.mxu0 %v1600
        %1661 = vmatprep.subr.bf16.mxu0 0
        %1662 = vmatpush1.bf16.msra.mxu0 %v1601
        %1663 = vmatprep.subr.bf16.mxu0 0
        %1664 = vmatpush1.bf16.msra.mxu0 %v1602
        %1665 = vmatprep.subr.bf16.mxu0 0
        %1666 = vmatpush1.bf16.msra.mxu0 %v1603
        %1667 = vmatprep.subr.bf16.mxu0 0
        %1668 = vmatpush1.bf16.msra.mxu0 %v1604
        %1669 = vmatprep.mubr.bf16.mxu0 %v1139
        %1670 = vmatmul.mubr.bf16.gmra.mrb[0].mxu0 %v1304
        %v1671 = vpop.f32.mrb[0].mxu0
        %v1672 = vadd.f32 0.0, %v1671
        %v1673 = vpop.f32.mrb[0].mxu0
        %v1674 = vpop.f32.mrb[0].mxu0
        %v1675 = vadd.f32 0.0, %v1674
        %v1676 = vpop.f32.mrb[0].mxu0
        %1677 = vmatprep.mubr.bf16.mxu0 %v1140
        %1678 = vmatmul.mubr.bf16.gmra.mrb[0].mxu0 %v1305
        %v1679 = vpop.f32.mrb[0].mxu0
        %v1680 = vadd.f32 0.0, %v1679
        %v1681 = vpop.f32.mrb[0].mxu0
        %v1682 = vpop.f32.mrb[0].mxu0
        %v1683 = vadd.f32 0.0, %v1682
        %v1684 = vpop.f32.mrb[0].mxu0
        %1685 = vmatprep.mubr.bf16.mxu0 %v1141
        %1686 = vmatmul.mubr.bf16.gmra.mrb[0].mxu0 %v1306
        %v1687 = vpop.f32.mrb[0].mxu0
        %v1688 = vadd.f32 0.0, %v1687
        %v1689 = vpop.f32.mrb[0].mxu0
        %v1690 = vpop.f32.mrb[0].mxu0
        %v1691 = vadd.f32 0.0, %v1690
        %v1692 = vpop.f32.mrb[0].mxu0
        %1693 = vmatprep.mubr.bf16.mxu0 %v1142
        %1694 = vmatmul.mubr.bf16.gmra.mrb[0].mxu0 %v1307
        %v1695 = vpop.f32.mrb[0].mxu0
        %v1696 = vadd.f32 0.0, %v1695
        %v1697 = vpop.f32.mrb[0].mxu0
        %v1698 = vpop.f32.mrb[0].mxu0
        %v1699 = vadd.f32 0.0, %v1698
        %v1700 = vpop.f32.mrb[0].mxu0
        %1701 = vmatprep.mubr.bf16.mxu0 %v1143
        %1702 = vmatmul.mubr.bf16.gmra.mrb[0].mxu0 %v1308
        %v1703 = vpop.f32.mrb[0].mxu0
        %v1704 = vadd.f32 0.0, %v1703
        %v1705 = vpop.f32.mrb[0].mxu0
        %v1706 = vpop.f32.mrb[0].mxu0
        %v1707 = vadd.f32 0.0, %v1706
        %v1708 = vpop.f32.mrb[0].mxu0
        %1709 = vmatprep.mubr.bf16.mxu0 %v1144
        %1710 = vmatmul.mubr.bf16.gmra.mrb[0].mxu0 %v1309
        %v1711 = vpop.f32.mrb[0].mxu0
        %v1712 = vadd.f32 0.0, %v1711
        %v1713 = vpop.f32.mrb[0].mxu0
        %v1714 = vpop.f32.mrb[0].mxu0
        %v1715 = vadd.f32 0.0, %v1714
        %v1716 = vpop.f32.mrb[0].mxu0
        %1717 = vmatprep.mubr.bf16.mxu0 %v1145
        %1718 = vmatmul.mubr.bf16.gmra.mrb[0].mxu0 %v1310
        %v1719 = vpop.f32.mrb[0].mxu0
        %v1720 = vadd.f32 0.0, %v1719
        %v1721 = vpop.f32.mrb[0].mxu0
        %v1722 = vpop.f32.mrb[0].mxu0
        %v1723 = vadd.f32 0.0, %v1722
        %v1724 = vpop.f32.mrb[0].mxu0
        %1725 = vmatprep.mubr.bf16.mxu0 %v1146
        %1726 = vmatmul.mubr.bf16.gmra.mrb[0].mxu0 %v1311
        %v1727 = vpop.f32.mrb[0].mxu0
        %v1728 = vadd.f32 0.0, %v1727
        %v1729 = vpop.f32.mrb[0].mxu0
        %v1730 = vpop.f32.mrb[0].mxu0
        %v1731 = vadd.f32 0.0, %v1730
        %v1732 = vpop.f32.mrb[0].mxu0
        %1733 = vmatprep.mubr.bf16.mxu0 %v1147
        %1734 = vmatmul.mubr.bf16.gmra.mrb[0].mxu0 %v1312
        %v1735 = vpop.f32.mrb[0].mxu0
        %v1736 = vadd.f32 0.0, %v1735
        %v1737 = vpop.f32.mrb[0].mxu0
        %v1738 = vpop.f32.mrb[0].mxu0
        %v1739 = vadd.f32 0.0, %v1738
        %v1740 = vpop.f32.mrb[0].mxu0
        %1741 = vmatprep.mubr.bf16.mxu0 %v1148
        %1742 = vmatmul.mubr.bf16.gmra.mrb[0].mxu0 %v1313
        %v1743 = vpop.f32.mrb[0].mxu0
        %v1744 = vadd.f32 0.0, %v1743
        %v1745 = vpop.f32.mrb[0].mxu0
        %v1746 = vpop.f32.mrb[0].mxu0
        %v1747 = vadd.f32 0.0, %v1746
        %v1748 = vpop.f32.mrb[0].mxu0
        %1749 = vmatprep.mubr.bf16.mxu0 %v1149
        %1750 = vmatmul.mubr.bf16.gmra.mrb[0].mxu0 %v1314
        %v1751 = vpop.f32.mrb[0].mxu0
        %v1752 = vadd.f32 0.0, %v1751
        %v1753 = vpop.f32.mrb[0].mxu0
        %v1754 = vpop.f32.mrb[0].mxu0
        %v1755 = vadd.f32 0.0, %v1754
        %v1756 = vpop.f32.mrb[0].mxu0
        %1757 = vmatprep.mubr.bf16.mxu0 %v1150
        %1758 = vmatmul.mubr.bf16.gmra.mrb[0].mxu0 %v1315
        %v1759 = vpop.f32.mrb[0].mxu0
        %v1760 = vadd.f32 0.0, %v1759
        %v1761 = vpop.f32.mrb[0].mxu0
        %v1762 = vpop.f32.mrb[0].mxu0
        %v1763 = vadd.f32 0.0, %v1762
        %v1764 = vpop.f32.mrb[0].mxu0
        %1765 = vmatprep.mubr.bf16.mxu0 %v1151
        %1766 = vmatmul.mubr.bf16.gmra.mrb[0].mxu0 %v1316
        %v1767 = vpop.f32.mrb[0].mxu0
        %v1768 = vadd.f32 0.0, %v1767
        %v1769 = vpop.f32.mrb[0].mxu0
        %v1770 = vpop.f32.mrb[0].mxu0
        %v1771 = vadd.f32 0.0, %v1770
        %v1772 = vpop.f32.mrb[0].mxu0
        %1773 = vmatprep.mubr.bf16.mxu0 %v1152
        %1774 = vmatmul.mubr.bf16.gmra.mrb[0].mxu0 %v1317
        %v1775 = vpop.f32.mrb[0].mxu0
        %v1776 = vadd.f32 0.0, %v1775
        %v1777 = vpop.f32.mrb[0].mxu0
        %v1778 = vpop.f32.mrb[0].mxu0
        %v1779 = vadd.f32 0.0, %v1778
        %v1780 = vpop.f32.mrb[0].mxu0
        %1781 = vmatprep.mubr.bf16.mxu0 %v1153
        %1782 = vmatmul.mubr.bf16.gmra.mrb[0].mxu0 %v1318
        %v1783 = vpop.f32.mrb[0].mxu0
        %v1784 = vadd.f32 0.0, %v1783
        %v1785 = vpop.f32.mrb[0].mxu0
        %v1786 = vpop.f32.mrb[0].mxu0
        %v1787 = vadd.f32 0.0, %v1786
        %v1788 = vpop.f32.mrb[0].mxu0
        %1789 = vmatprep.mubr.bf16.mxu0 %v1154
        %1790 = vmatmul.mubr.bf16.gmra.mrb[0].mxu0 %v1319
        %v1791 = vpop.f32.mrb[0].mxu0
        %v1792 = vadd.f32 0.0, %v1791
        %v1793 = vpop.f32.mrb[0].mxu0
        %v1794 = vpop.f32.mrb[0].mxu0
        %v1795 = vadd.f32 0.0, %v1794
        %v1796 = vpop.f32.mrb[0].mxu0
        %1797 = vdwg.mxu0
        %1798 = vmatprep.subr.bf16.mxu0 0
        %1799 = vmatpush1.bf16.msra.mxu0 %v1605
        %1800 = vmatprep.subr.bf16.mxu0 0
        %1801 = vmatpush1.bf16.msra.mxu0 %v1606
        %1802 = vmatprep.subr.bf16.mxu0 0
        %1803 = vmatpush1.bf16.msra.mxu0 %v1607
        %1804 = vmatprep.subr.bf16.mxu0 0
        %1805 = vmatpush1.bf16.msra.mxu0 %v1608
        %1806 = vmatprep.subr.bf16.mxu0 0
        %1807 = vmatpush1.bf16.msra.mxu0 %v1609
        %1808 = vmatprep.subr.bf16.mxu0 0
        %1809 = vmatpush1.bf16.msra.mxu0 %v1610
        %1810 = vmatprep.subr.bf16.mxu0 0
        %1811 = vmatpush1.bf16.msra.mxu0 %v1611
        %1812 = vmatprep.subr.bf16.mxu0 0
        %1813 = vmatpush1.bf16.msra.mxu0 %v1612
        %1814 = vmatprep.subr.bf16.mxu0 0
        %1815 = vmatpush1.bf16.msra.mxu0 0
        %1816 = vmatprep.subr.bf16.mxu0 0
        %1817 = vmatpush1.bf16.msra.mxu0 0
        %1818 = vmatprep.subr.bf16.mxu0 0
        %1819 = vmatpush1.bf16.msra.mxu0 0
        %1820 = vmatprep.subr.bf16.mxu0 0
        %1821 = vmatpush1.bf16.msra.mxu0 0
        %1822 = vmatprep.subr.bf16.mxu0 0
        %1823 = vmatpush1.bf16.msra.mxu0 0
        %1824 = vmatprep.subr.bf16.mxu0 0
        %1825 = vmatpush1.bf16.msra.mxu0 0
        %1826 = vmatprep.subr.bf16.mxu0 0
        %1827 = vmatpush1.bf16.msra.mxu0 0
        %1828 = vmatprep.subr.bf16.mxu0 0
        %1829 = vmatpush1.bf16.msra.mxu0 0
        %1830 = vmatprep.mubr.bf16.mxu0 0
        %1831 = vmatmul.mubr.bf16.gmra.mrb[0].mxu0 %v1379
        %v1832 = vpop.f32.mrb[0].mxu0
        %v1833 = vadd.f32 %v1672, %v1832
        %v1834 = vpop.f32.mrb[0].mxu0
        %v1835 = vpop.f32.mrb[0].mxu0
        %v1836 = vadd.f32 %v1675, %v1835
        %v1837 = vpop.f32.mrb[0].mxu0
        %1838 = vmatprep.mubr.bf16.mxu0 0
        %1839 = vmatmul.mubr.bf16.gmra.mrb[0].mxu0 %v1380
        %v1840 = vpop.f32.mrb[0].mxu0
        %v1841 = vadd.f32 %v1680, %v1840
        %v1842 = vpop.f32.mrb[0].mxu0
        %v1843 = vpop.f32.mrb[0].mxu0
        %v1844 = vadd.f32 %v1683, %v1843
        %v1845 = vpop.f32.mrb[0].mxu0
        %1846 = vmatprep.mubr.bf16.mxu0 0
        %1847 = vmatmul.mubr.bf16.gmra.mrb[0].mxu0 %v1381
        %v1848 = vpop.f32.mrb[0].mxu0
        %v1849 = vadd.f32 %v1688, %v1848
        %v1850 = vpop.f32.mrb[0].mxu0
        %v1851 = vpop.f32.mrb[0].mxu0
        %v1852 = vadd.f32 %v1691, %v1851
        %v1853 = vpop.f32.mrb[0].mxu0
        %1854 = vmatprep.mubr.bf16.mxu0 0
        %1855 = vmatmul.mubr.bf16.gmra.mrb[0].mxu0 %v1382
        %v1856 = vpop.f32.mrb[0].mxu0
        %v1857 = vadd.f32 %v1696, %v1856
        %v1858 = vpop.f32.mrb[0].mxu0
        %v1859 = vpop.f32.mrb[0].mxu0
        %v1860 = vadd.f32 %v1699, %v1859
        %v1861 = vpop.f32.mrb[0].mxu0
        %1862 = vmatprep.mubr.bf16.mxu0 0
        %1863 = vmatmul.mubr.bf16.gmra.mrb[0].mxu0 %v1383
        %v1864 = vpop.f32.mrb[0].mxu0
        %v1865 = vadd.f32 %v1704, %v1864
        %v1866 = vpop.f32.mrb[0].mxu0
        %v1867 = vpop.f32.mrb[0].mxu0
        %v1868 = vadd.f32 %v1707, %v1867
        %v1869 = vpop.f32.mrb[0].mxu0
        %1870 = vmatprep.mubr.bf16.mxu0 0
        %1871 = vmatmul.mubr.bf16.gmra.mrb[0].mxu0 %v1384
        %v1872 = vpop.f32.mrb[0].mxu0
        %v1873 = vadd.f32 %v1712, %v1872
        %v1874 = vpop.f32.mrb[0].mxu0
        %v1875 = vpop.f32.mrb[0].mxu0
        %v1876 = vadd.f32 %v1715, %v1875
        %v1877 = vpop.f32.mrb[0].mxu0
        %1878 = vmatprep.mubr.bf16.mxu0 0
        %1879 = vmatmul.mubr.bf16.gmra.mrb[0].mxu0 %v1385
        %v1880 = vpop.f32.mrb[0].mxu0
        %v1881 = vadd.f32 %v1720, %v1880
        %v1882 = vpop.f32.mrb[0].mxu0
        %v1883 = vpop.f32.mrb[0].mxu0
        %v1884 = vadd.f32 %v1723, %v1883
        %v1885 = vpop.f32.mrb[0].mxu0
        %1886 = vmatprep.mubr.bf16.mxu0 0
        %1887 = vmatmul.mubr.bf16.gmra.mrb[0].mxu0 %v1386
        %v1888 = vpop.f32.mrb[0].mxu0
        %v1889 = vadd.f32 %v1728, %v1888
        %v1890 = vpop.f32.mrb[0].mxu0
        %v1891 = vpop.f32.mrb[0].mxu0
        %v1892 = vadd.f32 %v1731, %v1891
        %v1893 = vpop.f32.mrb[0].mxu0
        %1894 = vmatprep.mubr.bf16.mxu0 0
        %1895 = vmatmul.mubr.bf16.gmra.mrb[0].mxu0 %v1387
        %v1896 = vpop.f32.mrb[0].mxu0
        %v1897 = vadd.f32 %v1736, %v1896
        %v1898 = vpop.f32.mrb[0].mxu0
        %v1899 = vpop.f32.mrb[0].mxu0
        %v1900 = vadd.f32 %v1739, %v1899
        %v1901 = vpop.f32.mrb[0].mxu0
        %1902 = vmatprep.mubr.bf16.mxu0 0
        %1903 = vmatmul.mubr.bf16.gmra.mrb[0].mxu0 %v1388
        %v1904 = vpop.f32.mrb[0].mxu0
        %v1905 = vadd.f32 %v1744, %v1904
        %v1906 = vpop.f32.mrb[0].mxu0
        %v1907 = vpop.f32.mrb[0].mxu0
        %v1908 = vadd.f32 %v1747, %v1907
        %v1909 = vpop.f32.mrb[0].mxu0
        %1910 = vmatprep.mubr.bf16.mxu0 0
        %1911 = vmatmul.mubr.bf16.gmra.mrb[0].mxu0 %v1389
        %v1912 = vpop.f32.mrb[0].mxu0
        %v1913 = vadd.f32 %v1752, %v1912
        %v1914 = vpop.f32.mrb[0].mxu0
        %v1915 = vpop.f32.mrb[0].mxu0
        %v1916 = vadd.f32 %v1755, %v1915
        %v1917 = vpop.f32.mrb[0].mxu0
        %1918 = vmatprep.mubr.bf16.mxu0 0
        %1919 = vmatmul.mubr.bf16.gmra.mrb[0].mxu0 %v1390
        %v1920 = vpop.f32.mrb[0].mxu0
        %v1921 = vadd.f32 %v1760, %v1920
        %v1922 = vpop.f32.mrb[0].mxu0
        %v1923 = vpop.f32.mrb[0].mxu0
        %v1924 = vadd.f32 %v1763, %v1923
        %v1925 = vpop.f32.mrb[0].mxu0
        %1926 = vmatprep.mubr.bf16.mxu0 0
        %1927 = vmatmul.mubr.bf16.gmra.mrb[0].mxu0 %v1391
        %v1928 = vpop.f32.mrb[0].mxu0
        %v1929 = vadd.f32 %v1768, %v1928
        %v1930 = vpop.f32.mrb[0].mxu0
        %v1931 = vpop.f32.mrb[0].mxu0
        %v1932 = vadd.f32 %v1771, %v1931
        %v1933 = vpop.f32.mrb[0].mxu0
        %1934 = vmatprep.mubr.bf16.mxu0 0
        %1935 = vmatmul.mubr.bf16.gmra.mrb[0].mxu0 %v1392
        %v1936 = vpop.f32.mrb[0].mxu0
        %v1937 = vadd.f32 %v1776, %v1936
        %v1938 = vpop.f32.mrb[0].mxu0
        %v1939 = vpop.f32.mrb[0].mxu0
        %v1940 = vadd.f32 %v1779, %v1939
        %v1941 = vpop.f32.mrb[0].mxu0
        %1942 = vmatprep.mubr.bf16.mxu0 0
        %1943 = vmatmul.mubr.bf16.gmra.mrb[0].mxu0 %v1393
        %v1944 = vpop.f32.mrb[0].mxu0
        %v1945 = vadd.f32 %v1784, %v1944
        %v1946 = vpop.f32.mrb[0].mxu0
        %v1947 = vpop.f32.mrb[0].mxu0
        %v1948 = vadd.f32 %v1787, %v1947
        %v1949 = vpop.f32.mrb[0].mxu0
        %1950 = vmatprep.mubr.bf16.mxu0 0
        %1951 = vmatmul.mubr.bf16.gmra.mrb[0].mxu0 %v1394
        %v1952 = vpop.f32.mrb[0].mxu0
        %v1953 = vadd.f32 %v1792, %v1952
        %v1954 = vpop.f32.mrb[0].mxu0
        %v1955 = vpop.f32.mrb[0].mxu0
        %v1956 = vadd.f32 %v1795, %v1955
        %v1957 = vpop.f32.mrb[0].mxu0
        %1958 = vdwg.mxu0
        %v2007 = vunpack.c.l.b16 %v1396
        %v2008 = vunpack.c.l.b16 %v1397
        %v2009 = vunpack.c.l.b16 %v1398
        %v2010 = vunpack.c.l.b16 %v1399
        %v2011 = vunpack.c.l.b16 %v1400
        %v2012 = vunpack.c.l.b16 %v1401
        %v2013 = vunpack.c.l.b16 %v1402
        %v2014 = vunpack.c.l.b16 %v1403
        %v2015 = vunpack.c.l.b16 %v1404
        %v2016 = vunpack.c.l.b16 %v1405
        %v2017 = vunpack.c.l.b16 %v1406
        %v2018 = vunpack.c.l.b16 %v1407
        %v2019 = vunpack.c.l.b16 %v1408
        %v2020 = vunpack.c.l.b16 %v1409
        %v2021 = vunpack.c.l.b16 %v1410
        %v2022 = vunpack.c.l.b16 %v1411
        %v2023 = vunpack.c.l.b16 %v1412
        %v2024 = vunpack.c.l.b16 %v1413
        %v2025 = vunpack.c.l.b16 %v1414
        %v2026 = vunpack.c.l.b16 %v1415
        %v2027 = vunpack.c.l.b16 %v1416
        %v2028 = vunpack.c.l.b16 %v1417
        %v2029 = vunpack.c.l.b16 %v1418
        %v2030 = vunpack.c.l.b16 %v1419
        %v2031 = vunpack.c.l.b16 %v1420
        %v2032 = vunpack.c.l.b16 %v1421
        %v2033 = vunpack.c.l.b16 %v1422
        %v2034 = vunpack.c.l.b16 %v1423
        %v2035 = vunpack.c.l.b16 %v1424
        %v2036 = vunpack.c.l.b16 %v1425
        %v2037 = vunpack.c.l.b16 %v1426
        %v2038 = vunpack.c.l.b16 %v1427
        %v2039 = vunpack.c.l.b16 %v1428
        %v2040 = vunpack.c.l.b16 %v1429
        %v2041 = vunpack.c.l.b16 %v1430
        %v2042 = vunpack.c.l.b16 %v1431
        %v2043 = vunpack.c.l.b16 %v1432
        %v2044 = vunpack.c.l.b16 %v1433
        %v2045 = vunpack.c.l.b16 %v1434
        %v2046 = vunpack.c.l.b16 %v1435
        %v2047 = vunpack.c.l.b16 %v1436
        %v2048 = vunpack.c.l.b16 %v1437
        %v2049 = vunpack.c.l.b16 %v1438
        %v2050 = vunpack.c.l.b16 %v1439
        %v2051 = vunpack.c.l.b16 %v1440
        %v2052 = vunpack.c.l.b16 %v1441
        %v2053 = vunpack.c.l.b16 %v1442
        %v2054 = vunpack.c.l.b16 %v1443
        %v2055 = vpack.c.b16 %v2008, %v2007
        %v2056 = vpack.c.b16 %v2010, %v2009
        %v2057 = vpack.c.b16 %v2012, %v2011
        %v2058 = vpack.c.b16 %v2014, %v2013
        %v2059 = vpack.c.b16 %v2016, %v2015
        %v2060 = vpack.c.b16 %v2018, %v2017
        %v2061 = vpack.c.b16 %v2020, %v2019
        %v2062 = vpack.c.b16 %v2022, %v2021
        %v2063 = vpack.c.b16 %v2024, %v2023
        %v2064 = vpack.c.b16 %v2026, %v2025
        %v2065 = vpack.c.b16 %v2028, %v2027
        %v2066 = vpack.c.b16 %v2030, %v2029
        %v2067 = vpack.c.b16 %v2032, %v2031
        %v2068 = vpack.c.b16 %v2034, %v2033
        %v2069 = vpack.c.b16 %v2036, %v2035
        %v2070 = vpack.c.b16 %v2038, %v2037
        %v2071 = vpack.c.b16 %v2040, %v2039
        %v2072 = vpack.c.b16 %v2042, %v2041
        %v2073 = vpack.c.b16 %v2044, %v2043
        %v2074 = vpack.c.b16 %v2046, %v2045
        %v2075 = vpack.c.b16 %v2048, %v2047
        %v2076 = vpack.c.b16 %v2050, %v2049
        %v2077 = vpack.c.b16 %v2052, %v2051
        %v2078 = vpack.c.b16 %v2054, %v2053
        %2103 = vmatprep.subr.bf16.mxu0 0
        %2104 = vmatpush1.bf16.msra.mxu0 %v2055
        %2105 = vmatprep.subr.bf16.mxu0 0
        %2106 = vmatpush1.bf16.msra.mxu0 %v2056
        %2107 = vmatprep.subr.bf16.mxu0 0
        %2108 = vmatpush1.bf16.msra.mxu0 %v2057
        %2109 = vmatprep.subr.bf16.mxu0 0
        %2110 = vmatpush1.bf16.msra.mxu0 %v2058
        %2111 = vmatprep.subr.bf16.mxu0 0
        %2112 = vmatpush1.bf16.msra.mxu0 %v2059
        %2113 = vmatprep.subr.bf16.mxu0 0
        %2114 = vmatpush1.bf16.msra.mxu0 %v2060
        %2115 = vmatprep.subr.bf16.mxu0 0
        %2116 = vmatpush1.bf16.msra.mxu0 %v2061
        %2117 = vmatprep.subr.bf16.mxu0 0
        %2118 = vmatpush1.bf16.msra.mxu0 %v2062
        %2119 = vmatprep.subr.bf16.mxu0 0
        %2120 = vmatpush1.bf16.msra.mxu0 %v2063
        %2121 = vmatprep.subr.bf16.mxu0 0
        %2122 = vmatpush1.bf16.msra.mxu0 %v2064
        %2123 = vmatprep.subr.bf16.mxu0 0
        %2124 = vmatpush1.bf16.msra.mxu0 %v2065
        %2125 = vmatprep.subr.bf16.mxu0 0
        %2126 = vmatpush1.bf16.msra.mxu0 %v2066
        %2127 = vmatprep.subr.bf16.mxu0 0
        %2128 = vmatpush1.bf16.msra.mxu0 %v2067
        %2129 = vmatprep.subr.bf16.mxu0 0
        %2130 = vmatpush1.bf16.msra.mxu0 %v2068
        %2131 = vmatprep.subr.bf16.mxu0 0
        %2132 = vmatpush1.bf16.msra.mxu0 %v2069
        %2133 = vmatprep.subr.bf16.mxu0 0
        %2134 = vmatpush1.bf16.msra.mxu0 %v2070
        %2135 = vmatprep.mubr.bf16.mxu0 %v1138
        %2136 = vmatmul.mubr.bf16.gmra.mrb[0].mxu0 %v1303
        %v2137 = vpop.f32.mrb[0].mxu0
        %v2138 = vadd.f32 %v1833, %v2137
        %v2139 = vpop.f32.mrb[0].mxu0
        %v2140 = vpop.f32.mrb[0].mxu0
        %v2141 = vadd.f32 %v1836, %v2140
        %v2142 = vpop.f32.mrb[0].mxu0
        %2143 = vmatprep.mubr.bf16.mxu0 %v1139
        %2144 = vmatmul.mubr.bf16.gmra.mrb[0].mxu0 %v1304
        %v2145 = vpop.f32.mrb[0].mxu0
        %v2146 = vadd.f32 %v1841, %v2145
        %v2147 = vpop.f32.mrb[0].mxu0
        %v2148 = vpop.f32.mrb[0].mxu0
        %v2149 = vadd.f32 %v1844, %v2148
        %v2150 = vpop.f32.mrb[0].mxu0
        %2151 = vmatprep.mubr.bf16.mxu0 %v1140
        %2152 = vmatmul.mubr.bf16.gmra.mrb[0].mxu0 %v1305
        %v2153 = vpop.f32.mrb[0].mxu0
        %v2154 = vadd.f32 %v1849, %v2153
        %v2155 = vpop.f32.mrb[0].mxu0
        %v2156 = vpop.f32.mrb[0].mxu0
        %v2157 = vadd.f32 %v1852, %v2156
        %v2158 = vpop.f32.mrb[0].mxu0
        %2159 = vmatprep.mubr.bf16.mxu0 %v1141
        %2160 = vmatmul.mubr.bf16.gmra.mrb[0].mxu0 %v1306
        %v2161 = vpop.f32.mrb[0].mxu0
        %v2162 = vadd.f32 %v1857, %v2161
        %v2163 = vpop.f32.mrb[0].mxu0
        %v2164 = vpop.f32.mrb[0].mxu0
        %v2165 = vadd.f32 %v1860, %v2164
        %v2166 = vpop.f32.mrb[0].mxu0
        %2167 = vmatprep.mubr.bf16.mxu0 %v1142
        %2168 = vmatmul.mubr.bf16.gmra.mrb[0].mxu0 %v1307
        %v2169 = vpop.f32.mrb[0].mxu0
        %v2170 = vadd.f32 %v1865, %v2169
        %v2171 = vpop.f32.mrb[0].mxu0
        %v2172 = vpop.f32.mrb[0].mxu0
        %v2173 = vadd.f32 %v1868, %v2172
        %v2174 = vpop.f32.mrb[0].mxu0
        %2175 = vmatprep.mubr.bf16.mxu0 %v1143
        %2176 = vmatmul.mubr.bf16.gmra.mrb[0].mxu0 %v1308
        %v2177 = vpop.f32.mrb[0].mxu0
        %v2178 = vadd.f32 %v1873, %v2177
        %v2179 = vpop.f32.mrb[0].mxu0
        %v2180 = vpop.f32.mrb[0].mxu0
        %v2181 = vadd.f32 %v1876, %v2180
        %v2182 = vpop.f32.mrb[0].mxu0
        %2183 = vmatprep.mubr.bf16.mxu0 %v1144
        %2184 = vmatmul.mubr.bf16.gmra.mrb[0].mxu0 %v1309
        %v2185 = vpop.f32.mrb[0].mxu0
        %v2186 = vadd.f32 %v1881, %v2185
        %v2187 = vpop.f32.mrb[0].mxu0
        %v2188 = vpop.f32.mrb[0].mxu0
        %v2189 = vadd.f32 %v1884, %v2188
        %v2190 = vpop.f32.mrb[0].mxu0
        %2191 = vmatprep.mubr.bf16.mxu0 %v1145
        %2192 = vmatmul.mubr.bf16.gmra.mrb[0].mxu0 %v1310
        %v2193 = vpop.f32.mrb[0].mxu0
        %v2194 = vadd.f32 %v1889, %v2193
        %v2195 = vpop.f32.mrb[0].mxu0
        %v2196 = vpop.f32.mrb[0].mxu0
        %v2197 = vadd.f32 %v1892, %v2196
        %v2198 = vpop.f32.mrb[0].mxu0
        %2199 = vmatprep.mubr.bf16.mxu0 %v1146
        %2200 = vmatmul.mubr.bf16.gmra.mrb[0].mxu0 %v1311
        %v2201 = vpop.f32.mrb[0].mxu0
        %v2202 = vadd.f32 %v1897, %v2201
        %v2203 = vpop.f32.mrb[0].mxu0
        %v2204 = vpop.f32.mrb[0].mxu0
        %v2205 = vadd.f32 %v1900, %v2204
        %v2206 = vpop.f32.mrb[0].mxu0
        %2207 = vmatprep.mubr.bf16.mxu0 %v1147
        %2208 = vmatmul.mubr.bf16.gmra.mrb[0].mxu0 %v1312
        %v2209 = vpop.f32.mrb[0].mxu0
        %v2210 = vadd.f32 %v1905, %v2209
        %v2211 = vpop.f32.mrb[0].mxu0
        %v2212 = vpop.f32.mrb[0].mxu0
        %v2213 = vadd.f32 %v1908, %v2212
        %v2214 = vpop.f32.mrb[0].mxu0
        %2215 = vmatprep.mubr.bf16.mxu0 %v1148
        %2216 = vmatmul.mubr.bf16.gmra.mrb[0].mxu0 %v1313
        %v2217 = vpop.f32.mrb[0].mxu0
        %v2218 = vadd.f32 %v1913, %v2217
        %v2219 = vpop.f32.mrb[0].mxu0
        %v2220 = vpop.f32.mrb[0].mxu0
        %v2221 = vadd.f32 %v1916, %v2220
        %v2222 = vpop.f32.mrb[0].mxu0
        %2223 = vmatprep.mubr.bf16.mxu0 %v1149
        %2224 = vmatmul.mubr.bf16.gmra.mrb[0].mxu0 %v1314
        %v2225 = vpop.f32.mrb[0].mxu0
        %v2226 = vadd.f32 %v1921, %v2225
        %v2227 = vpop.f32.mrb[0].mxu0
        %v2228 = vpop.f32.mrb[0].mxu0
        %v2229 = vadd.f32 %v1924, %v2228
        %v2230 = vpop.f32.mrb[0].mxu0
        %2231 = vmatprep.mubr.bf16.mxu0 %v1150
        %2232 = vmatmul.mubr.bf16.gmra.mrb[0].mxu0 %v1315
        %v2233 = vpop.f32.mrb[0].mxu0
        %v2234 = vadd.f32 %v1929, %v2233
        %v2235 = vpop.f32.mrb[0].mxu0
        %v2236 = vpop.f32.mrb[0].mxu0
        %v2237 = vadd.f32 %v1932, %v2236
        %v2238 = vpop.f32.mrb[0].mxu0
        %2239 = vmatprep.mubr.bf16.mxu0 %v1151
        %2240 = vmatmul.mubr.bf16.gmra.mrb[0].mxu0 %v1316
        %v2241 = vpop.f32.mrb[0].mxu0
        %v2242 = vadd.f32 %v1937, %v2241
        %v2243 = vpop.f32.mrb[0].mxu0
        %v2244 = vpop.f32.mrb[0].mxu0
        %v2245 = vadd.f32 %v1940, %v2244
        %v2246 = vpop.f32.mrb[0].mxu0
        %2247 = vmatprep.mubr.bf16.mxu0 %v1152
        %2248 = vmatmul.mubr.bf16.gmra.mrb[0].mxu0 %v1317
        %v2249 = vpop.f32.mrb[0].mxu0
        %v2250 = vadd.f32 %v1945, %v2249
        %v2251 = vpop.f32.mrb[0].mxu0
        %v2252 = vpop.f32.mrb[0].mxu0
        %v2253 = vadd.f32 %v1948, %v2252
        %v2254 = vpop.f32.mrb[0].mxu0
        %2255 = vmatprep.mubr.bf16.mxu0 %v1153
        %2256 = vmatmul.mubr.bf16.gmra.mrb[0].mxu0 %v1318
        %v2257 = vpop.f32.mrb[0].mxu0
        %v2258 = vadd.f32 %v1953, %v2257
        %v2259 = vpop.f32.mrb[0].mxu0
        %v2260 = vpop.f32.mrb[0].mxu0
        %v2261 = vadd.f32 %v1956, %v2260
        %v2262 = vpop.f32.mrb[0].mxu0
        %2263 = vdwg.mxu0
        %2264 = vmatprep.subr.bf16.mxu0 0
        %2265 = vmatpush1.bf16.msra.mxu0 %v2071
        %2266 = vmatprep.subr.bf16.mxu0 0
        %2267 = vmatpush1.bf16.msra.mxu0 %v2072
        %2268 = vmatprep.subr.bf16.mxu0 0
        %2269 = vmatpush1.bf16.msra.mxu0 %v2073
        %2270 = vmatprep.subr.bf16.mxu0 0
        %2271 = vmatpush1.bf16.msra.mxu0 %v2074
        %2272 = vmatprep.subr.bf16.mxu0 0
        %2273 = vmatpush1.bf16.msra.mxu0 %v2075
        %2274 = vmatprep.subr.bf16.mxu0 0
        %2275 = vmatpush1.bf16.msra.mxu0 %v2076
        %2276 = vmatprep.subr.bf16.mxu0 0
        %2277 = vmatpush1.bf16.msra.mxu0 %v2077
        %2278 = vmatprep.subr.bf16.mxu0 0
        %2279 = vmatpush1.bf16.msra.mxu0 %v2078
        %2280 = vmatprep.subr.bf16.mxu0 0
        %2281 = vmatpush1.bf16.msra.mxu0 0
        %2282 = vmatprep.subr.bf16.mxu0 0
        %2283 = vmatpush1.bf16.msra.mxu0 0
        %2284 = vmatprep.subr.bf16.mxu0 0
        %2285 = vmatpush1.bf16.msra.mxu0 0
        %2286 = vmatprep.subr.bf16.mxu0 0
        %2287 = vmatpush1.bf16.msra.mxu0 0
        %2288 = vmatprep.subr.bf16.mxu0 0
        %2289 = vmatpush1.bf16.msra.mxu0 0
        %2290 = vmatprep.subr.bf16.mxu0 0
        %2291 = vmatpush1.bf16.msra.mxu0 0
        %2292 = vmatprep.subr.bf16.mxu0 0
        %2293 = vmatpush1.bf16.msra.mxu0 0
        %2294 = vmatprep.subr.bf16.mxu0 0
        %2295 = vmatpush1.bf16.msra.mxu0 0
        %2296 = vmatprep.mubr.bf16.mxu0 0
        %2297 = vmatmul.mubr.bf16.gmra.mrb[0].mxu0 %v1378
        %v2298 = vpop.f32.mrb[0].mxu0
        %v2299 = vadd.f32 %v2138, %v2298
        %v2300 = vpop.f32.mrb[0].mxu0
        %v2301 = vpop.f32.mrb[0].mxu0
        %v2302 = vadd.f32 %v2141, %v2301
        %v2303 = vpop.f32.mrb[0].mxu0
        %2304 = vmatprep.mubr.bf16.mxu0 0
        %2305 = vmatmul.mubr.bf16.gmra.mrb[0].mxu0 %v1379
        %v2306 = vpop.f32.mrb[0].mxu0
        %v2307 = vadd.f32 %v2146, %v2306
        %v2308 = vpop.f32.mrb[0].mxu0
        %v2309 = vpop.f32.mrb[0].mxu0
        %v2310 = vadd.f32 %v2149, %v2309
        %v2311 = vpop.f32.mrb[0].mxu0
        %2312 = vmatprep.mubr.bf16.mxu0 0
        %2313 = vmatmul.mubr.bf16.gmra.mrb[0].mxu0 %v1380
        %v2314 = vpop.f32.mrb[0].mxu0
        %v2315 = vadd.f32 %v2154, %v2314
        %v2316 = vpop.f32.mrb[0].mxu0
        %v2317 = vpop.f32.mrb[0].mxu0
        %v2318 = vadd.f32 %v2157, %v2317
        %v2319 = vpop.f32.mrb[0].mxu0
        %2320 = vmatprep.mubr.bf16.mxu0 0
        %2321 = vmatmul.mubr.bf16.gmra.mrb[0].mxu0 %v1381
        %v2322 = vpop.f32.mrb[0].mxu0
        %v2323 = vadd.f32 %v2162, %v2322
        %v2324 = vpop.f32.mrb[0].mxu0
        %v2325 = vpop.f32.mrb[0].mxu0
        %v2326 = vadd.f32 %v2165, %v2325
        %v2327 = vpop.f32.mrb[0].mxu0
        %2328 = vmatprep.mubr.bf16.mxu0 0
        %2329 = vmatmul.mubr.bf16.gmra.mrb[0].mxu0 %v1382
        %v2330 = vpop.f32.mrb[0].mxu0
        %v2331 = vadd.f32 %v2170, %v2330
        %v2332 = vpop.f32.mrb[0].mxu0
        %v2333 = vpop.f32.mrb[0].mxu0
        %v2334 = vadd.f32 %v2173, %v2333
        %v2335 = vpop.f32.mrb[0].mxu0
        %2336 = vmatprep.mubr.bf16.mxu0 0
        %2337 = vmatmul.mubr.bf16.gmra.mrb[0].mxu0 %v1383
        %v2338 = vpop.f32.mrb[0].mxu0
        %v2339 = vadd.f32 %v2178, %v2338
        %v2340 = vpop.f32.mrb[0].mxu0
        %v2341 = vpop.f32.mrb[0].mxu0
        %v2342 = vadd.f32 %v2181, %v2341
        %v2343 = vpop.f32.mrb[0].mxu0
        %2344 = vmatprep.mubr.bf16.mxu0 0
        %2345 = vmatmul.mubr.bf16.gmra.mrb[0].mxu0 %v1384
        %v2346 = vpop.f32.mrb[0].mxu0
        %v2347 = vadd.f32 %v2186, %v2346
        %v2348 = vpop.f32.mrb[0].mxu0
        %v2349 = vpop.f32.mrb[0].mxu0
        %v2350 = vadd.f32 %v2189, %v2349
        %v2351 = vpop.f32.mrb[0].mxu0
        %2352 = vmatprep.mubr.bf16.mxu0 0
        %2353 = vmatmul.mubr.bf16.gmra.mrb[0].mxu0 %v1385
        %v2354 = vpop.f32.mrb[0].mxu0
        %v2355 = vadd.f32 %v2194, %v2354
        %v2356 = vpop.f32.mrb[0].mxu0
        %v2357 = vpop.f32.mrb[0].mxu0
        %v2358 = vadd.f32 %v2197, %v2357
        %v2359 = vpop.f32.mrb[0].mxu0
        %2360 = vmatprep.mubr.bf16.mxu0 0
        %2361 = vmatmul.mubr.bf16.gmra.mrb[0].mxu0 %v1386
        %v2362 = vpop.f32.mrb[0].mxu0
        %v2363 = vadd.f32 %v2202, %v2362
        %v2364 = vpop.f32.mrb[0].mxu0
        %v2365 = vpop.f32.mrb[0].mxu0
        %v2366 = vadd.f32 %v2205, %v2365
        %v2367 = vpop.f32.mrb[0].mxu0
        %2368 = vmatprep.mubr.bf16.mxu0 0
        %2369 = vmatmul.mubr.bf16.gmra.mrb[0].mxu0 %v1387
        %v2370 = vpop.f32.mrb[0].mxu0
        %v2371 = vadd.f32 %v2210, %v2370
        %v2372 = vpop.f32.mrb[0].mxu0
        %v2373 = vpop.f32.mrb[0].mxu0
        %v2374 = vadd.f32 %v2213, %v2373
        %v2375 = vpop.f32.mrb[0].mxu0
        %2376 = vmatprep.mubr.bf16.mxu0 0
        %2377 = vmatmul.mubr.bf16.gmra.mrb[0].mxu0 %v1388
        %v2378 = vpop.f32.mrb[0].mxu0
        %v2379 = vadd.f32 %v2218, %v2378
        %v2380 = vpop.f32.mrb[0].mxu0
        %v2381 = vpop.f32.mrb[0].mxu0
        %v2382 = vadd.f32 %v2221, %v2381
        %v2383 = vpop.f32.mrb[0].mxu0
        %2384 = vmatprep.mubr.bf16.mxu0 0
        %2385 = vmatmul.mubr.bf16.gmra.mrb[0].mxu0 %v1389
        %v2386 = vpop.f32.mrb[0].mxu0
        %v2387 = vadd.f32 %v2226, %v2386
        %v2388 = vpop.f32.mrb[0].mxu0
        %v2389 = vpop.f32.mrb[0].mxu0
        %v2390 = vadd.f32 %v2229, %v2389
        %v2391 = vpop.f32.mrb[0].mxu0
        %2392 = vmatprep.mubr.bf16.mxu0 0
        %2393 = vmatmul.mubr.bf16.gmra.mrb[0].mxu0 %v1390
        %v2394 = vpop.f32.mrb[0].mxu0
        %v2395 = vadd.f32 %v2234, %v2394
        %v2396 = vpop.f32.mrb[0].mxu0
        %v2397 = vpop.f32.mrb[0].mxu0
        %v2398 = vadd.f32 %v2237, %v2397
        %v2399 = vpop.f32.mrb[0].mxu0
        %2400 = vmatprep.mubr.bf16.mxu0 0
        %2401 = vmatmul.mubr.bf16.gmra.mrb[0].mxu0 %v1391
        %v2402 = vpop.f32.mrb[0].mxu0
        %v2403 = vadd.f32 %v2242, %v2402
        %v2404 = vpop.f32.mrb[0].mxu0
        %v2405 = vpop.f32.mrb[0].mxu0
        %v2406 = vadd.f32 %v2245, %v2405
        %v2407 = vpop.f32.mrb[0].mxu0
        %2408 = vmatprep.mubr.bf16.mxu0 0
        %2409 = vmatmul.mubr.bf16.gmra.mrb[0].mxu0 %v1392
        %v2410 = vpop.f32.mrb[0].mxu0
        %v2411 = vadd.f32 %v2250, %v2410
        %v2412 = vpop.f32.mrb[0].mxu0
        %v2413 = vpop.f32.mrb[0].mxu0
        %v2414 = vadd.f32 %v2253, %v2413
        %v2415 = vpop.f32.mrb[0].mxu0
        %2416 = vmatprep.mubr.bf16.mxu0 0
        %2417 = vmatmul.mubr.bf16.gmra.mrb[0].mxu0 %v1393
        %v2418 = vpop.f32.mrb[0].mxu0
        %v2419 = vadd.f32 %v2258, %v2418
        %v2420 = vpop.f32.mrb[0].mxu0
        %v2421 = vpop.f32.mrb[0].mxu0
        %v2422 = vadd.f32 %v2261, %v2421
        %v2423 = vpop.f32.mrb[0].mxu0
        %2424 = vdwg.mxu0
        %s2425 = scalar_lea.vmem %s6, 384
        %v2426 = vld [vmem:[%s2425] sm:$0xf]
        %v2427 = vld [vmem:[%s2425 + $0x4] sm:$0xf]
        %v2428 = vld [vmem:[%s2425 + $0x8] sm:$0xf]
        %v2429 = vld [vmem:[%s2425 + $0xc] sm:$0xf]
        %v2430 = vld [vmem:[%s2425 + $0x10] sm:$0xf]
        %v2431 = vld [vmem:[%s2425 + $0x14] sm:$0xf]
        %v2432 = vld [vmem:[%s2425 + $0x18] sm:$0xf]
        %v2433 = vld [vmem:[%s2425 + $0x1c] sm:$0xf]
        %v2434 = vld [vmem:[%s2425 + $0x20] sm:$0xf]
        %v2435 = vld [vmem:[%s2425 + $0x24] sm:$0xf]
        %v2436 = vld [vmem:[%s2425 + $0x28] sm:$0xf]
        %v2437 = vld [vmem:[%s2425 + $0x2c] sm:$0xf]
        %v2438 = vld [vmem:[%s2425 + $0x30] sm:$0xf]
        %v2439 = vld [vmem:[%s2425 + $0x34] sm:$0xf]
        %v2440 = vld [vmem:[%s2425 + $0x38] sm:$0xf]
        %v2441 = vld [vmem:[%s2425 + $0x3c] sm:$0xf]
        %v2442 = vld [vmem:[%s2425 + $0x40] sm:$0xf]
        %v2443 = vld [vmem:[%s2425 + $0x44] sm:$0xf]
        %v2444 = vld [vmem:[%s2425 + $0x48] sm:$0xf]
        %v2445 = vld [vmem:[%s2425 + $0x4c] sm:$0xf]
        %v2446 = vld [vmem:[%s2425 + $0x50] sm:$0xf]
        %v2447 = vld [vmem:[%s2425 + $0x54] sm:$0xf]
        %v2448 = vld [vmem:[%s2425 + $0x58] sm:$0xf]
        %v2449 = vld [vmem:[%s2425 + $0x5c] sm:$0xf]
        %v2450 = vld [vmem:[%s2425 + $0x60] sm:$0xf]
        %v2451 = vld [vmem:[%s2425 + $0x64] sm:$0xf]
        %v2452 = vld [vmem:[%s2425 + $0x68] sm:$0xf]
        %v2453 = vld [vmem:[%s2425 + $0x6c] sm:$0xf]
        %v2454 = vld [vmem:[%s2425 + $0x70] sm:$0xf]
        %v2455 = vld [vmem:[%s2425 + $0x74] sm:$0xf]
        %v2456 = vld [vmem:[%s2425 + $0x78] sm:$0xf]
        %v2457 = vld [vmem:[%s2425 + $0x7c] sm:$0xf]
        %v2458 = vld [vmem:[%s2425 + $0x80] sm:$0xf]
        %v2459 = vld [vmem:[%s2425 + $0x84] sm:$0xf]
        %v2460 = vld [vmem:[%s2425 + $0x88] sm:$0xf]
        %v2461 = vld [vmem:[%s2425 + $0x8c] sm:$0xf]
        %v2462 = vld [vmem:[%s2425 + $0x90] sm:$0xf]
        %v2463 = vld [vmem:[%s2425 + $0x94] sm:$0xf]
        %v2464 = vld [vmem:[%s2425 + $0x98] sm:$0xf]
        %v2465 = vld [vmem:[%s2425 + $0x9c] sm:$0xf]
        %v2466 = vld [vmem:[%s2425 + $0xa0] sm:$0xf]
        %v2467 = vld [vmem:[%s2425 + $0xa4] sm:$0xf]
        %v2468 = vld [vmem:[%s2425 + $0xa8] sm:$0xf]
        %v2469 = vld [vmem:[%s2425 + $0xac] sm:$0xf]
        %v2470 = vld [vmem:[%s2425 + $0xb0] sm:$0xf]
        %v2471 = vld [vmem:[%s2425 + $0xb4] sm:$0xf]
        %v2472 = vld [vmem:[%s2425 + $0xb8] sm:$0xf]
        %v2473 = vld [vmem:[%s2425 + $0xbc] sm:$0xf]
        %v2522 = vunpack.c.l.b16 %v2426
        %v2523 = vunpack.c.l.b16 %v2427
        %v2524 = vunpack.c.l.b16 %v2428
        %v2525 = vunpack.c.l.b16 %v2429
        %v2526 = vunpack.c.l.b16 %v2430
        %v2527 = vunpack.c.l.b16 %v2431
        %v2528 = vunpack.c.l.b16 %v2432
        %v2529 = vunpack.c.l.b16 %v2433
        %v2530 = vunpack.c.l.b16 %v2434
        %v2531 = vunpack.c.l.b16 %v2435
        %v2532 = vunpack.c.l.b16 %v2436
        %v2533 = vunpack.c.l.b16 %v2437
        %v2534 = vunpack.c.l.b16 %v2438
        %v2535 = vunpack.c.l.b16 %v2439
        %v2536 = vunpack.c.l.b16 %v2440
        %v2537 = vunpack.c.l.b16 %v2441
        %v2538 = vunpack.c.l.b16 %v2442
        %v2539 = vunpack.c.l.b16 %v2443
        %v2540 = vunpack.c.l.b16 %v2444
        %v2541 = vunpack.c.l.b16 %v2445
        %v2542 = vunpack.c.l.b16 %v2446
        %v2543 = vunpack.c.l.b16 %v2447
        %v2544 = vunpack.c.l.b16 %v2448
        %v2545 = vunpack.c.l.b16 %v2449
        %v2546 = vunpack.c.l.b16 %v2450
        %v2547 = vunpack.c.l.b16 %v2451
        %v2548 = vunpack.c.l.b16 %v2452
        %v2549 = vunpack.c.l.b16 %v2453
        %v2550 = vunpack.c.l.b16 %v2454
        %v2551 = vunpack.c.l.b16 %v2455
        %v2552 = vunpack.c.l.b16 %v2456
        %v2553 = vunpack.c.l.b16 %v2457
        %v2554 = vunpack.c.l.b16 %v2458
        %v2555 = vunpack.c.l.b16 %v2459
        %v2556 = vunpack.c.l.b16 %v2460
        %v2557 = vunpack.c.l.b16 %v2461
        %v2558 = vunpack.c.l.b16 %v2462
        %v2559 = vunpack.c.l.b16 %v2463
        %v2560 = vunpack.c.l.b16 %v2464
        %v2561 = vunpack.c.l.b16 %v2465
        %v2562 = vunpack.c.l.b16 %v2466
        %v2563 = vunpack.c.l.b16 %v2467
        %v2564 = vunpack.c.l.b16 %v2468
        %v2565 = vunpack.c.l.b16 %v2469
        %v2566 = vunpack.c.l.b16 %v2470
        %v2567 = vunpack.c.l.b16 %v2471
        %v2568 = vunpack.c.l.b16 %v2472
        %v2569 = vunpack.c.l.b16 %v2473
        %v2570 = vpack.c.b16 %v2523, %v2522
        %v2571 = vpack.c.b16 %v2525, %v2524
        %v2572 = vpack.c.b16 %v2527, %v2526
        %v2573 = vpack.c.b16 %v2529, %v2528
        %v2574 = vpack.c.b16 %v2531, %v2530
        %v2575 = vpack.c.b16 %v2533, %v2532
        %v2576 = vpack.c.b16 %v2535, %v2534
        %v2577 = vpack.c.b16 %v2537, %v2536
        %v2578 = vpack.c.b16 %v2539, %v2538
        %v2579 = vpack.c.b16 %v2541, %v2540
        %v2580 = vpack.c.b16 %v2543, %v2542
        %v2581 = vpack.c.b16 %v2545, %v2544
        %v2582 = vpack.c.b16 %v2547, %v2546
        %v2583 = vpack.c.b16 %v2549, %v2548
        %v2584 = vpack.c.b16 %v2551, %v2550
        %v2585 = vpack.c.b16 %v2553, %v2552
        %v2586 = vpack.c.b16 %v2555, %v2554
        %v2587 = vpack.c.b16 %v2557, %v2556
        %v2588 = vpack.c.b16 %v2559, %v2558
        %v2589 = vpack.c.b16 %v2561, %v2560
        %v2590 = vpack.c.b16 %v2563, %v2562
        %v2591 = vpack.c.b16 %v2565, %v2564
        %v2592 = vpack.c.b16 %v2567, %v2566
        %v2593 = vpack.c.b16 %v2569, %v2568
        %2618 = vmatprep.subr.bf16.mxu0 0
        %2619 = vmatpush1.bf16.msra.mxu0 %v2570
        %2620 = vmatprep.subr.bf16.mxu0 0
        %2621 = vmatpush1.bf16.msra.mxu0 %v2571
        %2622 = vmatprep.subr.bf16.mxu0 0
        %2623 = vmatpush1.bf16.msra.mxu0 %v2572
        %2624 = vmatprep.subr.bf16.mxu0 0
        %2625 = vmatpush1.bf16.msra.mxu0 %v2573
        %2626 = vmatprep.subr.bf16.mxu0 0
        %2627 = vmatpush1.bf16.msra.mxu0 %v2574
        %2628 = vmatprep.subr.bf16.mxu0 0
        %2629 = vmatpush1.bf16.msra.mxu0 %v2575
        %2630 = vmatprep.subr.bf16.mxu0 0
        %2631 = vmatpush1.bf16.msra.mxu0 %v2576
        %2632 = vmatprep.subr.bf16.mxu0 0
        %2633 = vmatpush1.bf16.msra.mxu0 %v2577
        %2634 = vmatprep.subr.bf16.mxu0 0
        %2635 = vmatpush1.bf16.msra.mxu0 %v2578
        %2636 = vmatprep.subr.bf16.mxu0 0
        %2637 = vmatpush1.bf16.msra.mxu0 %v2579
        %2638 = vmatprep.subr.bf16.mxu0 0
        %2639 = vmatpush1.bf16.msra.mxu0 %v2580
        %2640 = vmatprep.subr.bf16.mxu0 0
        %2641 = vmatpush1.bf16.msra.mxu0 %v2581
        %2642 = vmatprep.subr.bf16.mxu0 0
        %2643 = vmatpush1.bf16.msra.mxu0 %v2582
        %2644 = vmatprep.subr.bf16.mxu0 0
        %2645 = vmatpush1.bf16.msra.mxu0 %v2583
        %2646 = vmatprep.subr.bf16.mxu0 0
        %2647 = vmatpush1.bf16.msra.mxu0 %v2584
        %2648 = vmatprep.subr.bf16.mxu0 0
        %2649 = vmatpush1.bf16.msra.mxu0 %v2585
        %2650 = vmatprep.mubr.bf16.mxu0 %v1140
        %2651 = vmatmul.mubr.bf16.gmra.mrb[0].mxu0 %v1305
        %v2652 = vpop.f32.mrb[0].mxu0
        %v2653 = vadd.f32 0.0, %v2652
        %v2654 = vpop.f32.mrb[0].mxu0
        %v2655 = vpop.f32.mrb[0].mxu0
        %v2656 = vadd.f32 0.0, %v2655
        %v2657 = vpop.f32.mrb[0].mxu0
        %2658 = vmatprep.mubr.bf16.mxu0 %v1141
        %2659 = vmatmul.mubr.bf16.gmra.mrb[0].mxu0 %v1306
        %v2660 = vpop.f32.mrb[0].mxu0
        %v2661 = vadd.f32 0.0, %v2660
        %v2662 = vpop.f32.mrb[0].mxu0
        %v2663 = vpop.f32.mrb[0].mxu0
        %v2664 = vadd.f32 0.0, %v2663
        %v2665 = vpop.f32.mrb[0].mxu0
        %2666 = vmatprep.mubr.bf16.mxu0 %v1142
        %2667 = vmatmul.mubr.bf16.gmra.mrb[0].mxu0 %v1307
        %v2668 = vpop.f32.mrb[0].mxu0
        %v2669 = vadd.f32 0.0, %v2668
        %v2670 = vpop.f32.mrb[0].mxu0
        %v2671 = vpop.f32.mrb[0].mxu0
        %v2672 = vadd.f32 0.0, %v2671
        %v2673 = vpop.f32.mrb[0].mxu0
        %2674 = vmatprep.mubr.bf16.mxu0 %v1143
        %2675 = vmatmul.mubr.bf16.gmra.mrb[0].mxu0 %v1308
        %v2676 = vpop.f32.mrb[0].mxu0
        %v2677 = vadd.f32 0.0, %v2676
        %v2678 = vpop.f32.mrb[0].mxu0
        %v2679 = vpop.f32.mrb[0].mxu0
        %v2680 = vadd.f32 0.0, %v2679
        %v2681 = vpop.f32.mrb[0].mxu0
        %2682 = vmatprep.mubr.bf16.mxu0 %v1144
        %2683 = vmatmul.mubr.bf16.gmra.mrb[0].mxu0 %v1309
        %v2684 = vpop.f32.mrb[0].mxu0
        %v2685 = vadd.f32 0.0, %v2684
        %v2686 = vpop.f32.mrb[0].mxu0
        %v2687 = vpop.f32.mrb[0].mxu0
        %v2688 = vadd.f32 0.0, %v2687
        %v2689 = vpop.f32.mrb[0].mxu0
        %2690 = vmatprep.mubr.bf16.mxu0 %v1145
        %2691 = vmatmul.mubr.bf16.gmra.mrb[0].mxu0 %v1310
        %v2692 = vpop.f32.mrb[0].mxu0
        %v2693 = vadd.f32 0.0, %v2692
        %v2694 = vpop.f32.mrb[0].mxu0
        %v2695 = vpop.f32.mrb[0].mxu0
        %v2696 = vadd.f32 0.0, %v2695
        %v2697 = vpop.f32.mrb[0].mxu0
        %2698 = vmatprep.mubr.bf16.mxu0 %v1146
        %2699 = vmatmul.mubr.bf16.gmra.mrb[0].mxu0 %v1311
        %v2700 = vpop.f32.mrb[0].mxu0
        %v2701 = vadd.f32 0.0, %v2700
        %v2702 = vpop.f32.mrb[0].mxu0
        %v2703 = vpop.f32.mrb[0].mxu0
        %v2704 = vadd.f32 0.0, %v2703
        %v2705 = vpop.f32.mrb[0].mxu0
        %2706 = vmatprep.mubr.bf16.mxu0 %v1147
        %2707 = vmatmul.mubr.bf16.gmra.mrb[0].mxu0 %v1312
        %v2708 = vpop.f32.mrb[0].mxu0
        %v2709 = vadd.f32 0.0, %v2708
        %v2710 = vpop.f32.mrb[0].mxu0
        %v2711 = vpop.f32.mrb[0].mxu0
        %v2712 = vadd.f32 0.0, %v2711
        %v2713 = vpop.f32.mrb[0].mxu0
        %2714 = vmatprep.mubr.bf16.mxu0 %v1148
        %2715 = vmatmul.mubr.bf16.gmra.mrb[0].mxu0 %v1313
        %v2716 = vpop.f32.mrb[0].mxu0
        %v2717 = vadd.f32 0.0, %v2716
        %v2718 = vpop.f32.mrb[0].mxu0
        %v2719 = vpop.f32.mrb[0].mxu0
        %v2720 = vadd.f32 0.0, %v2719
        %v2721 = vpop.f32.mrb[0].mxu0
        %2722 = vmatprep.mubr.bf16.mxu0 %v1149
        %2723 = vmatmul.mubr.bf16.gmra.mrb[0].mxu0 %v1314
        %v2724 = vpop.f32.mrb[0].mxu0
        %v2725 = vadd.f32 0.0, %v2724
        %v2726 = vpop.f32.mrb[0].mxu0
        %v2727 = vpop.f32.mrb[0].mxu0
        %v2728 = vadd.f32 0.0, %v2727
        %v2729 = vpop.f32.mrb[0].mxu0
        %2730 = vmatprep.mubr.bf16.mxu0 %v1150
        %2731 = vmatmul.mubr.bf16.gmra.mrb[0].mxu0 %v1315
        %v2732 = vpop.f32.mrb[0].mxu0
        %v2733 = vadd.f32 0.0, %v2732
        %v2734 = vpop.f32.mrb[0].mxu0
        %v2735 = vpop.f32.mrb[0].mxu0
        %v2736 = vadd.f32 0.0, %v2735
        %v2737 = vpop.f32.mrb[0].mxu0
        %2738 = vmatprep.mubr.bf16.mxu0 %v1151
        %2739 = vmatmul.mubr.bf16.gmra.mrb[0].mxu0 %v1316
        %v2740 = vpop.f32.mrb[0].mxu0
        %v2741 = vadd.f32 0.0, %v2740
        %v2742 = vpop.f32.mrb[0].mxu0
        %v2743 = vpop.f32.mrb[0].mxu0
        %v2744 = vadd.f32 0.0, %v2743
        %v2745 = vpop.f32.mrb[0].mxu0
        %2746 = vmatprep.mubr.bf16.mxu0 %v1152
        %2747 = vmatmul.mubr.bf16.gmra.mrb[0].mxu0 %v1317
        %v2748 = vpop.f32.mrb[0].mxu0
        %v2749 = vadd.f32 0.0, %v2748
        %v2750 = vpop.f32.mrb[0].mxu0
        %v2751 = vpop.f32.mrb[0].mxu0
        %v2752 = vadd.f32 0.0, %v2751
        %v2753 = vpop.f32.mrb[0].mxu0
        %2754 = vmatprep.mubr.bf16.mxu0 %v1153
        %2755 = vmatmul.mubr.bf16.gmra.mrb[0].mxu0 %v1318
        %v2756 = vpop.f32.mrb[0].mxu0
        %v2757 = vadd.f32 0.0, %v2756
        %v2758 = vpop.f32.mrb[0].mxu0
        %v2759 = vpop.f32.mrb[0].mxu0
        %v2760 = vadd.f32 0.0, %v2759
        %v2761 = vpop.f32.mrb[0].mxu0
        %2762 = vmatprep.mubr.bf16.mxu0 %v1154
        %2763 = vmatmul.mubr.bf16.gmra.mrb[0].mxu0 %v1319
        %v2764 = vpop.f32.mrb[0].mxu0
        %v2765 = vadd.f32 0.0, %v2764
        %v2766 = vpop.f32.mrb[0].mxu0
        %v2767 = vpop.f32.mrb[0].mxu0
        %v2768 = vadd.f32 0.0, %v2767
        %v2769 = vpop.f32.mrb[0].mxu0
        %2770 = vmatprep.mubr.bf16.mxu0 %v1155
        %2771 = vmatmul.mubr.bf16.gmra.mrb[0].mxu0 %v1320
        %v2772 = vpop.f32.mrb[0].mxu0
        %v2773 = vadd.f32 0.0, %v2772
        %v2774 = vpop.f32.mrb[0].mxu0
        %v2775 = vpop.f32.mrb[0].mxu0
        %v2776 = vadd.f32 0.0, %v2775
        %v2777 = vpop.f32.mrb[0].mxu0
        %2778 = vdwg.mxu0
        %2779 = vmatprep.subr.bf16.mxu0 0
        %2780 = vmatpush1.bf16.msra.mxu0 %v2586
        %2781 = vmatprep.subr.bf16.mxu0 0
        %2782 = vmatpush1.bf16.msra.mxu0 %v2587
        %2783 = vmatprep.subr.bf16.mxu0 0
        %2784 = vmatpush1.bf16.msra.mxu0 %v2588
        %2785 = vmatprep.subr.bf16.mxu0 0
        %2786 = vmatpush1.bf16.msra.mxu0 %v2589
        %2787 = vmatprep.subr.bf16.mxu0 0
        %2788 = vmatpush1.bf16.msra.mxu0 %v2590
        %2789 = vmatprep.subr.bf16.mxu0 0
        %2790 = vmatpush1.bf16.msra.mxu0 %v2591
        %2791 = vmatprep.subr.bf16.mxu0 0
        %2792 = vmatpush1.bf16.msra.mxu0 %v2592
        %2793 = vmatprep.subr.bf16.mxu0 0
        %2794 = vmatpush1.bf16.msra.mxu0 %v2593
        %2795 = vmatprep.subr.bf16.mxu0 0
        %2796 = vmatpush1.bf16.msra.mxu0 0
        %2797 = vmatprep.subr.bf16.mxu0 0
        %2798 = vmatpush1.bf16.msra.mxu0 0
        %2799 = vmatprep.subr.bf16.mxu0 0
        %2800 = vmatpush1.bf16.msra.mxu0 0
        %2801 = vmatprep.subr.bf16.mxu0 0
        %2802 = vmatpush1.bf16.msra.mxu0 0
        %2803 = vmatprep.subr.bf16.mxu0 0
        %2804 = vmatpush1.bf16.msra.mxu0 0
        %2805 = vmatprep.subr.bf16.mxu0 0
        %2806 = vmatpush1.bf16.msra.mxu0 0
        %2807 = vmatprep.subr.bf16.mxu0 0
        %2808 = vmatpush1.bf16.msra.mxu0 0
        %2809 = vmatprep.subr.bf16.mxu0 0
        %2810 = vmatpush1.bf16.msra.mxu0 0
        %2811 = vmatprep.mubr.bf16.mxu0 0
        %2812 = vmatmul.mubr.bf16.gmra.mrb[0].mxu0 %v1380
        %v2813 = vpop.f32.mrb[0].mxu0
        %v2814 = vadd.f32 %v2653, %v2813
        %v2815 = vpop.f32.mrb[0].mxu0
        %v2816 = vpop.f32.mrb[0].mxu0
        %v2817 = vadd.f32 %v2656, %v2816
        %v2818 = vpop.f32.mrb[0].mxu0
        %2819 = vmatprep.mubr.bf16.mxu0 0
        %2820 = vmatmul.mubr.bf16.gmra.mrb[0].mxu0 %v1381
        %v2821 = vpop.f32.mrb[0].mxu0
        %v2822 = vadd.f32 %v2661, %v2821
        %v2823 = vpop.f32.mrb[0].mxu0
        %v2824 = vpop.f32.mrb[0].mxu0
        %v2825 = vadd.f32 %v2664, %v2824
        %v2826 = vpop.f32.mrb[0].mxu0
        %2827 = vmatprep.mubr.bf16.mxu0 0
        %2828 = vmatmul.mubr.bf16.gmra.mrb[0].mxu0 %v1382
        %v2829 = vpop.f32.mrb[0].mxu0
        %v2830 = vadd.f32 %v2669, %v2829
        %v2831 = vpop.f32.mrb[0].mxu0
        %v2832 = vpop.f32.mrb[0].mxu0
        %v2833 = vadd.f32 %v2672, %v2832
        %v2834 = vpop.f32.mrb[0].mxu0
        %2835 = vmatprep.mubr.bf16.mxu0 0
        %2836 = vmatmul.mubr.bf16.gmra.mrb[0].mxu0 %v1383
        %v2837 = vpop.f32.mrb[0].mxu0
        %v2838 = vadd.f32 %v2677, %v2837
        %v2839 = vpop.f32.mrb[0].mxu0
        %v2840 = vpop.f32.mrb[0].mxu0
        %v2841 = vadd.f32 %v2680, %v2840
        %v2842 = vpop.f32.mrb[0].mxu0
        %2843 = vmatprep.mubr.bf16.mxu0 0
        %2844 = vmatmul.mubr.bf16.gmra.mrb[0].mxu0 %v1384
        %v2845 = vpop.f32.mrb[0].mxu0
        %v2846 = vadd.f32 %v2685, %v2845
        %v2847 = vpop.f32.mrb[0].mxu0
        %v2848 = vpop.f32.mrb[0].mxu0
        %v2849 = vadd.f32 %v2688, %v2848
        %v2850 = vpop.f32.mrb[0].mxu0
        %2851 = vmatprep.mubr.bf16.mxu0 0
        %2852 = vmatmul.mubr.bf16.gmra.mrb[0].mxu0 %v1385
        %v2853 = vpop.f32.mrb[0].mxu0
        %v2854 = vadd.f32 %v2693, %v2853
        %v2855 = vpop.f32.mrb[0].mxu0
        %v2856 = vpop.f32.mrb[0].mxu0
        %v2857 = vadd.f32 %v2696, %v2856
        %v2858 = vpop.f32.mrb[0].mxu0
        %2859 = vmatprep.mubr.bf16.mxu0 0
        %2860 = vmatmul.mubr.bf16.gmra.mrb[0].mxu0 %v1386
        %v2861 = vpop.f32.mrb[0].mxu0
        %v2862 = vadd.f32 %v2701, %v2861
        %v2863 = vpop.f32.mrb[0].mxu0
        %v2864 = vpop.f32.mrb[0].mxu0
        %v2865 = vadd.f32 %v2704, %v2864
        %v2866 = vpop.f32.mrb[0].mxu0
        %2867 = vmatprep.mubr.bf16.mxu0 0
        %2868 = vmatmul.mubr.bf16.gmra.mrb[0].mxu0 %v1387
        %v2869 = vpop.f32.mrb[0].mxu0
        %v2870 = vadd.f32 %v2709, %v2869
        %v2871 = vpop.f32.mrb[0].mxu0
        %v2872 = vpop.f32.mrb[0].mxu0
        %v2873 = vadd.f32 %v2712, %v2872
        %v2874 = vpop.f32.mrb[0].mxu0
        %2875 = vmatprep.mubr.bf16.mxu0 0
        %2876 = vmatmul.mubr.bf16.gmra.mrb[0].mxu0 %v1388
        %v2877 = vpop.f32.mrb[0].mxu0
        %v2878 = vadd.f32 %v2717, %v2877
        %v2879 = vpop.f32.mrb[0].mxu0
        %v2880 = vpop.f32.mrb[0].mxu0
        %v2881 = vadd.f32 %v2720, %v2880
        %v2882 = vpop.f32.mrb[0].mxu0
        %2883 = vmatprep.mubr.bf16.mxu0 0
        %2884 = vmatmul.mubr.bf16.gmra.mrb[0].mxu0 %v1389
        %v2885 = vpop.f32.mrb[0].mxu0
        %v2886 = vadd.f32 %v2725, %v2885
        %v2887 = vpop.f32.mrb[0].mxu0
        %v2888 = vpop.f32.mrb[0].mxu0
        %v2889 = vadd.f32 %v2728, %v2888
        %v2890 = vpop.f32.mrb[0].mxu0
        %2891 = vmatprep.mubr.bf16.mxu0 0
        %2892 = vmatmul.mubr.bf16.gmra.mrb[0].mxu0 %v1390
        %v2893 = vpop.f32.mrb[0].mxu0
        %v2894 = vadd.f32 %v2733, %v2893
        %v2895 = vpop.f32.mrb[0].mxu0
        %v2896 = vpop.f32.mrb[0].mxu0
        %v2897 = vadd.f32 %v2736, %v2896
        %v2898 = vpop.f32.mrb[0].mxu0
        %2899 = vmatprep.mubr.bf16.mxu0 0
        %2900 = vmatmul.mubr.bf16.gmra.mrb[0].mxu0 %v1391
        %v2901 = vpop.f32.mrb[0].mxu0
        %v2902 = vadd.f32 %v2741, %v2901
        %v2903 = vpop.f32.mrb[0].mxu0
        %v2904 = vpop.f32.mrb[0].mxu0
        %v2905 = vadd.f32 %v2744, %v2904
        %v2906 = vpop.f32.mrb[0].mxu0
        %2907 = vmatprep.mubr.bf16.mxu0 0
        %2908 = vmatmul.mubr.bf16.gmra.mrb[0].mxu0 %v1392
        %v2909 = vpop.f32.mrb[0].mxu0
        %v2910 = vadd.f32 %v2749, %v2909
        %v2911 = vpop.f32.mrb[0].mxu0
        %v2912 = vpop.f32.mrb[0].mxu0
        %v2913 = vadd.f32 %v2752, %v2912
        %v2914 = vpop.f32.mrb[0].mxu0
        %2915 = vmatprep.mubr.bf16.mxu0 0
        %2916 = vmatmul.mubr.bf16.gmra.mrb[0].mxu0 %v1393
        %v2917 = vpop.f32.mrb[0].mxu0
        %v2918 = vadd.f32 %v2757, %v2917
        %v2919 = vpop.f32.mrb[0].mxu0
        %v2920 = vpop.f32.mrb[0].mxu0
        %v2921 = vadd.f32 %v2760, %v2920
        %v2922 = vpop.f32.mrb[0].mxu0
        %2923 = vmatprep.mubr.bf16.mxu0 0
        %2924 = vmatmul.mubr.bf16.gmra.mrb[0].mxu0 %v1394
        %v2925 = vpop.f32.mrb[0].mxu0
        %v2926 = vadd.f32 %v2765, %v2925
        %v2927 = vpop.f32.mrb[0].mxu0
        %v2928 = vpop.f32.mrb[0].mxu0
        %v2929 = vadd.f32 %v2768, %v2928
        %v2930 = vpop.f32.mrb[0].mxu0
        %2931 = vmatprep.mubr.bf16.mxu0 0
        %2932 = vmatmul.mubr.bf16.gmra.mrb[0].mxu0 %v1395
        %v2933 = vpop.f32.mrb[0].mxu0
        %v2934 = vadd.f32 %v2773, %v2933
        %v2935 = vpop.f32.mrb[0].mxu0
        %v2936 = vpop.f32.mrb[0].mxu0
        %v2937 = vadd.f32 %v2776, %v2936
        %v2938 = vpop.f32.mrb[0].mxu0
        %2939 = vdwg.mxu0
        %v2940 = vadd.f32 %v2299, %v2814
        %v2941 = vadd.f32 %v2302, %v2817
        %v2942 = vadd.f32 %v2307, %v2822
        %v2943 = vadd.f32 %v2310, %v2825
        %v2944 = vadd.f32 %v2315, %v2830
        %v2945 = vadd.f32 %v2318, %v2833
        %v2946 = vadd.f32 %v2323, %v2838
        %v2947 = vadd.f32 %v2326, %v2841
        %v2948 = vadd.f32 %v2331, %v2846
        %v2949 = vadd.f32 %v2334, %v2849
        %v2950 = vadd.f32 %v2339, %v2854
        %v2951 = vadd.f32 %v2342, %v2857
        %v2952 = vadd.f32 %v2347, %v2862
        %v2953 = vadd.f32 %v2350, %v2865
        %v2954 = vadd.f32 %v2355, %v2870
        %v2955 = vadd.f32 %v2358, %v2873
        %v2956 = vadd.f32 %v2363, %v2878
        %v2957 = vadd.f32 %v2366, %v2881
        %v2958 = vadd.f32 %v2371, %v2886
        %v2959 = vadd.f32 %v2374, %v2889
        %v2960 = vadd.f32 %v2379, %v2894
        %v2961 = vadd.f32 %v2382, %v2897
        %v2962 = vadd.f32 %v2387, %v2902
        %v2963 = vadd.f32 %v2390, %v2905
        %v2964 = vadd.f32 %v2395, %v2910
        %v2965 = vadd.f32 %v2398, %v2913
        %v2966 = vadd.f32 %v2403, %v2918
        %v2967 = vadd.f32 %v2406, %v2921
        %v2968 = vadd.f32 %v2411, %v2926
        %v2969 = vadd.f32 %v2414, %v2929
        %v2970 = vadd.f32 %v2419, %v2934
        %v2971 = vadd.f32 %v2422, %v2937
        %v2972 = vld [vmem:[%s7] sm:$0x1]
        %v2974 = vlaneseq
        %v2975 = vshrl.u32 %v2974, 7
        %v2976 = vsub.s32 0, %v2975
        %v2977 = vrot.slane %v2972, %v2976
        %v2979 = vmul.f32 %v2940, %v2977
        %v2980 = vmul.f32 %v2941, %v2977
        %v2981 = vmul.f32 %v2942, %v2977
        %v2982 = vmul.f32 %v2943, %v2977
        %v2983 = vmul.f32 %v2944, %v2977
        %v2984 = vmul.f32 %v2945, %v2977
        %v2985 = vmul.f32 %v2946, %v2977
        %v2986 = vmul.f32 %v2947, %v2977
        %v2987 = vmul.f32 %v2948, %v2977
        %v2988 = vmul.f32 %v2949, %v2977
        %v2989 = vmul.f32 %v2950, %v2977
        %v2990 = vmul.f32 %v2951, %v2977
        %v2991 = vmul.f32 %v2952, %v2977
        %v2992 = vmul.f32 %v2953, %v2977
        %v2993 = vmul.f32 %v2954, %v2977
        %v2994 = vmul.f32 %v2955, %v2977
        %v2995 = vmul.f32 %v2956, %v2977
        %v2996 = vmul.f32 %v2957, %v2977
        %v2997 = vmul.f32 %v2958, %v2977
        %v2998 = vmul.f32 %v2959, %v2977
        %v2999 = vmul.f32 %v2960, %v2977
        %v3000 = vmul.f32 %v2961, %v2977
        %v3001 = vmul.f32 %v2962, %v2977
        %v3002 = vmul.f32 %v2963, %v2977
        %v3003 = vmul.f32 %v2964, %v2977
        %v3004 = vmul.f32 %v2965, %v2977
        %v3005 = vmul.f32 %v2966, %v2977
        %v3006 = vmul.f32 %v2967, %v2977
        %v3007 = vmul.f32 %v2968, %v2977
        %v3008 = vmul.f32 %v2969, %v2977
        %v3009 = vmul.f32 %v2970, %v2977
        %v3010 = vmul.f32 %v2971, %v2977
        %v3011 = vld [vmem:[%s8] sm:$0x1]
        %v3013 = vlaneseq
        %v3014 = vshrl.u32 %v3013, 7
        %v3015 = vsub.s32 0, %v3014
        %v3016 = vrot.slane %v3011, %v3015
        %v3018 = vadd.f32 %v2979, %v3016
        %v3019 = vadd.f32 %v2980, %v3016
        %v3020 = vadd.f32 %v2981, %v3016
        %v3021 = vadd.f32 %v2982, %v3016
        %v3022 = vadd.f32 %v2983, %v3016
        %v3023 = vadd.f32 %v2984, %v3016
        %v3024 = vadd.f32 %v2985, %v3016
        %v3025 = vadd.f32 %v2986, %v3016
        %v3026 = vadd.f32 %v2987, %v3016
        %v3027 = vadd.f32 %v2988, %v3016
        %v3028 = vadd.f32 %v2989, %v3016
        %v3029 = vadd.f32 %v2990, %v3016
        %v3030 = vadd.f32 %v2991, %v3016
        %v3031 = vadd.f32 %v2992, %v3016
        %v3032 = vadd.f32 %v2993, %v3016
        %v3033 = vadd.f32 %v2994, %v3016
        %v3034 = vadd.f32 %v2995, %v3016
        %v3035 = vadd.f32 %v2996, %v3016
        %v3036 = vadd.f32 %v2997, %v3016
        %v3037 = vadd.f32 %v2998, %v3016
        %v3038 = vadd.f32 %v2999, %v3016
        %v3039 = vadd.f32 %v3000, %v3016
        %v3040 = vadd.f32 %v3001, %v3016
        %v3041 = vadd.f32 %v3002, %v3016
        %v3042 = vadd.f32 %v3003, %v3016
        %v3043 = vadd.f32 %v3004, %v3016
        %v3044 = vadd.f32 %v3005, %v3016
        %v3045 = vadd.f32 %v3006, %v3016
        %v3046 = vadd.f32 %v3007, %v3016
        %v3047 = vadd.f32 %v3008, %v3016
        %v3048 = vadd.f32 %v3009, %v3016
        %v3049 = vadd.f32 %v3010, %v3016
        %v3050 = vmax.f32 %v3018, 0.0
        %v3051 = vmax.f32 %v3019, 0.0
        %v3052 = vmax.f32 %v3020, 0.0
        %v3053 = vmax.f32 %v3021, 0.0
        %v3054 = vmax.f32 %v3022, 0.0
        %v3055 = vmax.f32 %v3023, 0.0
        %v3056 = vmax.f32 %v3024, 0.0
        %v3057 = vmax.f32 %v3025, 0.0
        %v3058 = vmax.f32 %v3026, 0.0
        %v3059 = vmax.f32 %v3027, 0.0
        %v3060 = vmax.f32 %v3028, 0.0
        %v3061 = vmax.f32 %v3029, 0.0
        %v3062 = vmax.f32 %v3030, 0.0
        %v3063 = vmax.f32 %v3031, 0.0
        %v3064 = vmax.f32 %v3032, 0.0
        %v3065 = vmax.f32 %v3033, 0.0
        %v3066 = vmax.f32 %v3034, 0.0
        %v3067 = vmax.f32 %v3035, 0.0
        %v3068 = vmax.f32 %v3036, 0.0
        %v3069 = vmax.f32 %v3037, 0.0
        %v3070 = vmax.f32 %v3038, 0.0
        %v3071 = vmax.f32 %v3039, 0.0
        %v3072 = vmax.f32 %v3040, 0.0
        %v3073 = vmax.f32 %v3041, 0.0
        %v3074 = vmax.f32 %v3042, 0.0
        %v3075 = vmax.f32 %v3043, 0.0
        %v3076 = vmax.f32 %v3044, 0.0
        %v3077 = vmax.f32 %v3045, 0.0
        %v3078 = vmax.f32 %v3046, 0.0
        %v3079 = vmax.f32 %v3047, 0.0
        %v3080 = vmax.f32 %v3048, 0.0
        %v3081 = vmax.f32 %v3049, 0.0
        %v3082 = vpack.c.bf16 %v3051, %v3050
        %v3083 = vpack.c.bf16 %v3053, %v3052
        %v3084 = vpack.c.bf16 %v3055, %v3054
        %v3085 = vpack.c.bf16 %v3057, %v3056
        %v3086 = vpack.c.bf16 %v3059, %v3058
        %v3087 = vpack.c.bf16 %v3061, %v3060
        %v3088 = vpack.c.bf16 %v3063, %v3062
        %v3089 = vpack.c.bf16 %v3065, %v3064
        %v3090 = vpack.c.bf16 %v3067, %v3066
        %v3091 = vpack.c.bf16 %v3069, %v3068
        %v3092 = vpack.c.bf16 %v3071, %v3070
        %v3093 = vpack.c.bf16 %v3073, %v3072
        %v3094 = vpack.c.bf16 %v3075, %v3074
        %v3095 = vpack.c.bf16 %v3077, %v3076
        %v3096 = vpack.c.bf16 %v3079, %v3078
        %v3097 = vpack.c.bf16 %v3081, %v3080
        %v3098 = vld [vmem:[%s9] sm:$0xf]
        %v3099 = vld [vmem:[%s9 + $0x4] sm:$0xf]
        %v3100 = vld [vmem:[%s9 + $0x8] sm:$0xf]
        %v3101 = vld [vmem:[%s9 + $0xc] sm:$0xf]
        %v3102 = vld [vmem:[%s9 + $0x10] sm:$0xf]
        %v3103 = vld [vmem:[%s9 + $0x14] sm:$0xf]
        %v3104 = vld [vmem:[%s9 + $0x18] sm:$0xf]
        %v3105 = vld [vmem:[%s9 + $0x1c] sm:$0xf]
        %v3106 = vld [vmem:[%s9 + $0x20] sm:$0xf]
        %v3107 = vld [vmem:[%s9 + $0x24] sm:$0xf]
        %v3108 = vld [vmem:[%s9 + $0x28] sm:$0xf]
        %v3109 = vld [vmem:[%s9 + $0x2c] sm:$0xf]
        %v3110 = vld [vmem:[%s9 + $0x30] sm:$0xf]
        %v3111 = vld [vmem:[%s9 + $0x34] sm:$0xf]
        %v3112 = vld [vmem:[%s9 + $0x38] sm:$0xf]
        %v3113 = vld [vmem:[%s9 + $0x3c] sm:$0xf]
        %v3130 = vunpack.c.l.b16 %v3098
        %v3131 = vunpack.c.l.b16 %v3099
        %v3132 = vunpack.c.l.b16 %v3100
        %v3133 = vunpack.c.l.b16 %v3101
        %v3134 = vunpack.c.l.b16 %v3102
        %v3135 = vunpack.c.l.b16 %v3103
        %v3136 = vunpack.c.l.b16 %v3104
        %v3137 = vunpack.c.l.b16 %v3105
        %v3138 = vunpack.c.l.b16 %v3106
        %v3139 = vunpack.c.l.b16 %v3107
        %v3140 = vunpack.c.l.b16 %v3108
        %v3141 = vunpack.c.l.b16 %v3109
        %v3142 = vunpack.c.l.b16 %v3110
        %v3143 = vunpack.c.l.b16 %v3111
        %v3144 = vunpack.c.l.b16 %v3112
        %v3145 = vunpack.c.l.b16 %v3113
        %v3146 = vpack.c.b16 %v3131, %v3130
        %v3147 = vpack.c.b16 %v3133, %v3132
        %v3148 = vpack.c.b16 %v3135, %v3134
        %v3149 = vpack.c.b16 %v3137, %v3136
        %v3150 = vpack.c.b16 %v3139, %v3138
        %v3151 = vpack.c.b16 %v3141, %v3140
        %v3152 = vpack.c.b16 %v3143, %v3142
        %v3153 = vpack.c.b16 %v3145, %v3144
        %3162 = vmatprep.subr.bf16.mxu0 0
        %3163 = vmatpush1.bf16.msra.mxu0 %v3146
        %3164 = vmatprep.subr.bf16.mxu0 0
        %3165 = vmatpush1.bf16.msra.mxu0 %v3147
        %3166 = vmatprep.subr.bf16.mxu0 0
        %3167 = vmatpush1.bf16.msra.mxu0 %v3148
        %3168 = vmatprep.subr.bf16.mxu0 0
        %3169 = vmatpush1.bf16.msra.mxu0 %v3149
        %3170 = vmatprep.subr.bf16.mxu0 0
        %3171 = vmatpush1.bf16.msra.mxu0 %v3150
        %3172 = vmatprep.subr.bf16.mxu0 0
        %3173 = vmatpush1.bf16.msra.mxu0 %v3151
        %3174 = vmatprep.subr.bf16.mxu0 0
        %3175 = vmatpush1.bf16.msra.mxu0 %v3152
        %3176 = vmatprep.subr.bf16.mxu0 0
        %3177 = vmatpush1.bf16.msra.mxu0 %v3153
        %3178 = vmatprep.subr.bf16.mxu0 0
        %3179 = vmatpush1.bf16.msra.mxu0 0
        %3180 = vmatprep.subr.bf16.mxu0 0
        %3181 = vmatpush1.bf16.msra.mxu0 0
        %3182 = vmatprep.subr.bf16.mxu0 0
        %3183 = vmatpush1.bf16.msra.mxu0 0
        %3184 = vmatprep.subr.bf16.mxu0 0
        %3185 = vmatpush1.bf16.msra.mxu0 0
        %3186 = vmatprep.subr.bf16.mxu0 0
        %3187 = vmatpush1.bf16.msra.mxu0 0
        %3188 = vmatprep.subr.bf16.mxu0 0
        %3189 = vmatpush1.bf16.msra.mxu0 0
        %3190 = vmatprep.subr.bf16.mxu0 0
        %3191 = vmatpush1.bf16.msra.mxu0 0
        %3192 = vmatprep.subr.bf16.mxu0 0
        %3193 = vmatpush1.bf16.msra.mxu0 0
        %3194 = vmatprep.mubr.bf16.mxu0 0
        %3195 = vmatmul.mubr.bf16.gmra.mrb[0].mxu0 %v3082
        %v3196 = vpop.f32.mrb[0].mxu0
        %v3197 = vadd.f32 0.0, %v3196
        %v3198 = vpop.f32.mrb[0].mxu0
        %v3199 = vpop.f32.mrb[0].mxu0
        %v3200 = vadd.f32 0.0, %v3199
        %v3201 = vpop.f32.mrb[0].mxu0
        %3202 = vmatprep.mubr.bf16.mxu0 0
        %3203 = vmatmul.mubr.bf16.gmra.mrb[0].mxu0 %v3083
        %v3204 = vpop.f32.mrb[0].mxu0
        %v3205 = vadd.f32 0.0, %v3204
        %v3206 = vpop.f32.mrb[0].mxu0
        %v3207 = vpop.f32.mrb[0].mxu0
        %v3208 = vadd.f32 0.0, %v3207
        %v3209 = vpop.f32.mrb[0].mxu0
        %3210 = vmatprep.mubr.bf16.mxu0 0
        %3211 = vmatmul.mubr.bf16.gmra.mrb[0].mxu0 %v3084
        %v3212 = vpop.f32.mrb[0].mxu0
        %v3213 = vadd.f32 0.0, %v3212
        %v3214 = vpop.f32.mrb[0].mxu0
        %v3215 = vpop.f32.mrb[0].mxu0
        %v3216 = vadd.f32 0.0, %v3215
        %v3217 = vpop.f32.mrb[0].mxu0
        %3218 = vmatprep.mubr.bf16.mxu0 0
        %3219 = vmatmul.mubr.bf16.gmra.mrb[0].mxu0 %v3085
        %v3220 = vpop.f32.mrb[0].mxu0
        %v3221 = vadd.f32 0.0, %v3220
        %v3222 = vpop.f32.mrb[0].mxu0
        %v3223 = vpop.f32.mrb[0].mxu0
        %v3224 = vadd.f32 0.0, %v3223
        %v3225 = vpop.f32.mrb[0].mxu0
        %3226 = vmatprep.mubr.bf16.mxu0 0
        %3227 = vmatmul.mubr.bf16.gmra.mrb[0].mxu0 %v3086
        %v3228 = vpop.f32.mrb[0].mxu0
        %v3229 = vadd.f32 0.0, %v3228
        %v3230 = vpop.f32.mrb[0].mxu0
        %v3231 = vpop.f32.mrb[0].mxu0
        %v3232 = vadd.f32 0.0, %v3231
        %v3233 = vpop.f32.mrb[0].mxu0
        %3234 = vmatprep.mubr.bf16.mxu0 0
        %3235 = vmatmul.mubr.bf16.gmra.mrb[0].mxu0 %v3087
        %v3236 = vpop.f32.mrb[0].mxu0
        %v3237 = vadd.f32 0.0, %v3236
        %v3238 = vpop.f32.mrb[0].mxu0
        %v3239 = vpop.f32.mrb[0].mxu0
        %v3240 = vadd.f32 0.0, %v3239
        %v3241 = vpop.f32.mrb[0].mxu0
        %3242 = vmatprep.mubr.bf16.mxu0 0
        %3243 = vmatmul.mubr.bf16.gmra.mrb[0].mxu0 %v3088
        %v3244 = vpop.f32.mrb[0].mxu0
        %v3245 = vadd.f32 0.0, %v3244
        %v3246 = vpop.f32.mrb[0].mxu0
        %v3247 = vpop.f32.mrb[0].mxu0
        %v3248 = vadd.f32 0.0, %v3247
        %v3249 = vpop.f32.mrb[0].mxu0
        %3250 = vmatprep.mubr.bf16.mxu0 0
        %3251 = vmatmul.mubr.bf16.gmra.mrb[0].mxu0 %v3089
        %v3252 = vpop.f32.mrb[0].mxu0
        %v3253 = vadd.f32 0.0, %v3252
        %v3254 = vpop.f32.mrb[0].mxu0
        %v3255 = vpop.f32.mrb[0].mxu0
        %v3256 = vadd.f32 0.0, %v3255
        %v3257 = vpop.f32.mrb[0].mxu0
        %3258 = vmatprep.mubr.bf16.mxu0 0
        %3259 = vmatmul.mubr.bf16.gmra.mrb[0].mxu0 %v3090
        %v3260 = vpop.f32.mrb[0].mxu0
        %v3261 = vadd.f32 0.0, %v3260
        %v3262 = vpop.f32.mrb[0].mxu0
        %v3263 = vpop.f32.mrb[0].mxu0
        %v3264 = vadd.f32 0.0, %v3263
        %v3265 = vpop.f32.mrb[0].mxu0
        %3266 = vmatprep.mubr.bf16.mxu0 0
        %3267 = vmatmul.mubr.bf16.gmra.mrb[0].mxu0 %v3091
        %v3268 = vpop.f32.mrb[0].mxu0
        %v3269 = vadd.f32 0.0, %v3268
        %v3270 = vpop.f32.mrb[0].mxu0
        %v3271 = vpop.f32.mrb[0].mxu0
        %v3272 = vadd.f32 0.0, %v3271
        %v3273 = vpop.f32.mrb[0].mxu0
        %3274 = vmatprep.mubr.bf16.mxu0 0
        %3275 = vmatmul.mubr.bf16.gmra.mrb[0].mxu0 %v3092
        %v3276 = vpop.f32.mrb[0].mxu0
        %v3277 = vadd.f32 0.0, %v3276
        %v3278 = vpop.f32.mrb[0].mxu0
        %v3279 = vpop.f32.mrb[0].mxu0
        %v3280 = vadd.f32 0.0, %v3279
        %v3281 = vpop.f32.mrb[0].mxu0
        %3282 = vmatprep.mubr.bf16.mxu0 0
        %3283 = vmatmul.mubr.bf16.gmra.mrb[0].mxu0 %v3093
        %v3284 = vpop.f32.mrb[0].mxu0
        %v3285 = vadd.f32 0.0, %v3284
        %v3286 = vpop.f32.mrb[0].mxu0
        %v3287 = vpop.f32.mrb[0].mxu0
        %v3288 = vadd.f32 0.0, %v3287
        %v3289 = vpop.f32.mrb[0].mxu0
        %3290 = vmatprep.mubr.bf16.mxu0 0
        %3291 = vmatmul.mubr.bf16.gmra.mrb[0].mxu0 %v3094
        %v3292 = vpop.f32.mrb[0].mxu0
        %v3293 = vadd.f32 0.0, %v3292
        %v3294 = vpop.f32.mrb[0].mxu0
        %v3295 = vpop.f32.mrb[0].mxu0
        %v3296 = vadd.f32 0.0, %v3295
        %v3297 = vpop.f32.mrb[0].mxu0
        %3298 = vmatprep.mubr.bf16.mxu0 0
        %3299 = vmatmul.mubr.bf16.gmra.mrb[0].mxu0 %v3095
        %v3300 = vpop.f32.mrb[0].mxu0
        %v3301 = vadd.f32 0.0, %v3300
        %v3302 = vpop.f32.mrb[0].mxu0
        %v3303 = vpop.f32.mrb[0].mxu0
        %v3304 = vadd.f32 0.0, %v3303
        %v3305 = vpop.f32.mrb[0].mxu0
        %3306 = vmatprep.mubr.bf16.mxu0 0
        %3307 = vmatmul.mubr.bf16.gmra.mrb[0].mxu0 %v3096
        %v3308 = vpop.f32.mrb[0].mxu0
        %v3309 = vadd.f32 0.0, %v3308
        %v3310 = vpop.f32.mrb[0].mxu0
        %v3311 = vpop.f32.mrb[0].mxu0
        %v3312 = vadd.f32 0.0, %v3311
        %v3313 = vpop.f32.mrb[0].mxu0
        %3314 = vmatprep.mubr.bf16.mxu0 0
        %3315 = vmatmul.mubr.bf16.gmra.mrb[0].mxu0 %v3097
        %v3316 = vpop.f32.mrb[0].mxu0
        %v3317 = vadd.f32 0.0, %v3316
        %v3318 = vpop.f32.mrb[0].mxu0
        %v3319 = vpop.f32.mrb[0].mxu0
        %v3320 = vadd.f32 0.0, %v3319
        %v3321 = vpop.f32.mrb[0].mxu0
        %3322 = vdwg.mxu0
        %v3323 = vld [vmem:[%s10] sm:$0x1]
        %v3325 = vlaneseq
        %v3326 = vshrl.u32 %v3325, 7
        %v3327 = vsub.s32 0, %v3326
        %v3328 = vrot.slane %v3323, %v3327
        %v3330 = vmul.f32 %v3197, %v3328
        %v3331 = vmul.f32 %v3200, %v3328
        %v3332 = vmul.f32 %v3205, %v3328
        %v3333 = vmul.f32 %v3208, %v3328
        %v3334 = vmul.f32 %v3213, %v3328
        %v3335 = vmul.f32 %v3216, %v3328
        %v3336 = vmul.f32 %v3221, %v3328
        %v3337 = vmul.f32 %v3224, %v3328
        %v3338 = vmul.f32 %v3229, %v3328
        %v3339 = vmul.f32 %v3232, %v3328
        %v3340 = vmul.f32 %v3237, %v3328
        %v3341 = vmul.f32 %v3240, %v3328
        %v3342 = vmul.f32 %v3245, %v3328
        %v3343 = vmul.f32 %v3248, %v3328
        %v3344 = vmul.f32 %v3253, %v3328
        %v3345 = vmul.f32 %v3256, %v3328
        %v3346 = vmul.f32 %v3261, %v3328
        %v3347 = vmul.f32 %v3264, %v3328
        %v3348 = vmul.f32 %v3269, %v3328
        %v3349 = vmul.f32 %v3272, %v3328
        %v3350 = vmul.f32 %v3277, %v3328
        %v3351 = vmul.f32 %v3280, %v3328
        %v3352 = vmul.f32 %v3285, %v3328
        %v3353 = vmul.f32 %v3288, %v3328
        %v3354 = vmul.f32 %v3293, %v3328
        %v3355 = vmul.f32 %v3296, %v3328
        %v3356 = vmul.f32 %v3301, %v3328
        %v3357 = vmul.f32 %v3304, %v3328
        %v3358 = vmul.f32 %v3309, %v3328
        %v3359 = vmul.f32 %v3312, %v3328
        %v3360 = vmul.f32 %v3317, %v3328
        %v3361 = vmul.f32 %v3320, %v3328
        %v3362 = vld [vmem:[%s11] sm:$0x1]
        %v3364 = vlaneseq
        %v3365 = vshrl.u32 %v3364, 7
        %v3366 = vsub.s32 0, %v3365
        %v3367 = vrot.slane %v3362, %v3366
        %v3369 = vadd.f32 %v3330, %v3367
        %v3370 = vadd.f32 %v3331, %v3367
        %v3371 = vadd.f32 %v3332, %v3367
        %v3372 = vadd.f32 %v3333, %v3367
        %v3373 = vadd.f32 %v3334, %v3367
        %v3374 = vadd.f32 %v3335, %v3367
        %v3375 = vadd.f32 %v3336, %v3367
        %v3376 = vadd.f32 %v3337, %v3367
        %v3377 = vadd.f32 %v3338, %v3367
        %v3378 = vadd.f32 %v3339, %v3367
        %v3379 = vadd.f32 %v3340, %v3367
        %v3380 = vadd.f32 %v3341, %v3367
        %v3381 = vadd.f32 %v3342, %v3367
        %v3382 = vadd.f32 %v3343, %v3367
        %v3383 = vadd.f32 %v3344, %v3367
        %v3384 = vadd.f32 %v3345, %v3367
        %v3385 = vadd.f32 %v3346, %v3367
        %v3386 = vadd.f32 %v3347, %v3367
        %v3387 = vadd.f32 %v3348, %v3367
        %v3388 = vadd.f32 %v3349, %v3367
        %v3389 = vadd.f32 %v3350, %v3367
        %v3390 = vadd.f32 %v3351, %v3367
        %v3391 = vadd.f32 %v3352, %v3367
        %v3392 = vadd.f32 %v3353, %v3367
        %v3393 = vadd.f32 %v3354, %v3367
        %v3394 = vadd.f32 %v3355, %v3367
        %v3395 = vadd.f32 %v3356, %v3367
        %v3396 = vadd.f32 %v3357, %v3367
        %v3397 = vadd.f32 %v3358, %v3367
        %v3398 = vadd.f32 %v3359, %v3367
        %v3399 = vadd.f32 %v3360, %v3367
        %v3400 = vadd.f32 %v3361, %v3367
        %v3401 = vadd.f32 %v3369, %v587
        %v3402 = vadd.f32 %v3370, %v588
        %v3403 = vadd.f32 %v3371, %v589
        %v3404 = vadd.f32 %v3372, %v590
        %v3405 = vadd.f32 %v3373, %v591
        %v3406 = vadd.f32 %v3374, %v592
        %v3407 = vadd.f32 %v3375, %v593
        %v3408 = vadd.f32 %v3376, %v594
        %v3409 = vadd.f32 %v3377, %v595
        %v3410 = vadd.f32 %v3378, %v596
        %v3411 = vadd.f32 %v3379, %v597
        %v3412 = vadd.f32 %v3380, %v598
        %v3413 = vadd.f32 %v3381, %v599
        %v3414 = vadd.f32 %v3382, %v600
        %v3415 = vadd.f32 %v3383, %v601
        %v3416 = vadd.f32 %v3384, %v602
        %v3417 = vadd.f32 %v3385, %v603
        %v3418 = vadd.f32 %v3386, %v604
        %v3419 = vadd.f32 %v3387, %v605
        %v3420 = vadd.f32 %v3388, %v606
        %v3421 = vadd.f32 %v3389, %v607
        %v3422 = vadd.f32 %v3390, %v608
        %v3423 = vadd.f32 %v3391, %v609
        %v3424 = vadd.f32 %v3392, %v610
        %v3425 = vadd.f32 %v3393, %v611
        %v3426 = vadd.f32 %v3394, %v612
        %v3427 = vadd.f32 %v3395, %v613
        %v3428 = vadd.f32 %v3396, %v614
        %v3429 = vadd.f32 %v3397, %v615
        %v3430 = vadd.f32 %v3398, %v616
        %v3431 = vadd.f32 %v3399, %v617
        %v3432 = vadd.f32 %v3400, %v618
        %v3433 = vmax.f32 %v3401, 0.0
        %v3434 = vmax.f32 %v3402, 0.0
        %v3435 = vmax.f32 %v3403, 0.0
        %v3436 = vmax.f32 %v3404, 0.0
        %v3437 = vmax.f32 %v3405, 0.0
        %v3438 = vmax.f32 %v3406, 0.0
        %v3439 = vmax.f32 %v3407, 0.0
        %v3440 = vmax.f32 %v3408, 0.0
        %v3441 = vmax.f32 %v3409, 0.0
        %v3442 = vmax.f32 %v3410, 0.0
        %v3443 = vmax.f32 %v3411, 0.0
        %v3444 = vmax.f32 %v3412, 0.0
        %v3445 = vmax.f32 %v3413, 0.0
        %v3446 = vmax.f32 %v3414, 0.0
        %v3447 = vmax.f32 %v3415, 0.0
        %v3448 = vmax.f32 %v3416, 0.0
        %v3449 = vmax.f32 %v3417, 0.0
        %v3450 = vmax.f32 %v3418, 0.0
        %v3451 = vmax.f32 %v3419, 0.0
        %v3452 = vmax.f32 %v3420, 0.0
        %v3453 = vmax.f32 %v3421, 0.0
        %v3454 = vmax.f32 %v3422, 0.0
        %v3455 = vmax.f32 %v3423, 0.0
        %v3456 = vmax.f32 %v3424, 0.0
        %v3457 = vmax.f32 %v3425, 0.0
        %v3458 = vmax.f32 %v3426, 0.0
        %v3459 = vmax.f32 %v3427, 0.0
        %v3460 = vmax.f32 %v3428, 0.0
        %v3461 = vmax.f32 %v3429, 0.0
        %v3462 = vmax.f32 %v3430, 0.0
        %v3463 = vmax.f32 %v3431, 0.0
        %v3464 = vmax.f32 %v3432, 0.0
        %3465 = vst [vmem:[%s523] sm:$0xff] %v3433
        %3466 = vst [vmem:[%s523 + $0x8] sm:$0xff] %v3434
        %3467 = vst [vmem:[%s523 + $0x10] sm:$0xff] %v3435
        %3468 = vst [vmem:[%s523 + $0x18] sm:$0xff] %v3436
        %3469 = vst [vmem:[%s523 + $0x20] sm:$0xff] %v3437
        %3470 = vst [vmem:[%s523 + $0x28] sm:$0xff] %v3438
        %3471 = vst [vmem:[%s523 + $0x30] sm:$0xff] %v3439
        %3472 = vst [vmem:[%s523 + $0x38] sm:$0xff] %v3440
        %3473 = vst [vmem:[%s523 + $0x40] sm:$0xff] %v3441
        %3474 = vst [vmem:[%s523 + $0x48] sm:$0xff] %v3442
        %3475 = vst [vmem:[%s523 + $0x50] sm:$0xff] %v3443
        %3476 = vst [vmem:[%s523 + $0x58] sm:$0xff] %v3444
        %3477 = vst [vmem:[%s523 + $0x60] sm:$0xff] %v3445
        %3478 = vst [vmem:[%s523 + $0x68] sm:$0xff] %v3446
        %3479 = vst [vmem:[%s523 + $0x70] sm:$0xff] %v3447
        %3480 = vst [vmem:[%s523 + $0x78] sm:$0xff] %v3448
        %3481 = vst [vmem:[%s523 + $0x80] sm:$0xff] %v3449
        %3482 = vst [vmem:[%s523 + $0x88] sm:$0xff] %v3450
        %3483 = vst [vmem:[%s523 + $0x90] sm:$0xff] %v3451
        %3484 = vst [vmem:[%s523 + $0x98] sm:$0xff] %v3452
        %3485 = vst [vmem:[%s523 + $0xa0] sm:$0xff] %v3453
        %3486 = vst [vmem:[%s523 + $0xa8] sm:$0xff] %v3454
        %3487 = vst [vmem:[%s523 + $0xb0] sm:$0xff] %v3455
        %3488 = vst [vmem:[%s523 + $0xb8] sm:$0xff] %v3456
        %3489 = vst [vmem:[%s523 + $0xc0] sm:$0xff] %v3457
        %3490 = vst [vmem:[%s523 + $0xc8] sm:$0xff] %v3458
        %3491 = vst [vmem:[%s523 + $0xd0] sm:$0xff] %v3459
        %3492 = vst [vmem:[%s523 + $0xd8] sm:$0xff] %v3460
        %3493 = vst [vmem:[%s523 + $0xe0] sm:$0xff] %v3461
        %3494 = vst [vmem:[%s523 + $0xe8] sm:$0xff] %v3462
        %3495 = vst [vmem:[%s523 + $0xf0] sm:$0xff] %v3463
        %3496 = vst [vmem:[%s523 + $0xf8] sm:$0xff] %v3464
        %s3497 = sand.u32 %s337, 1
        %s3498 = scalar_lea.sflag [#allocation4], %s3497
        %s3499 = sand.u32 %s337, 1
        %s3500 = smul.addr %s3499, 256
        %s3501 = scalar_lea.vmem [#allocation3], %s3500
        // Predicated region
        $region85: #{bottleneck_forward.1} parent=67 // pred_check
          %p3502 = pneg %p347
        $region86: #{bottleneck_forward.1} parent=67 // pred_check_branch
          %3504 = sbr.rel (%p3502) target = $region88
        $region87: #{bottleneck_forward.1} parent=67 // pred_region
          %s3505 = smul.u32 16, %s31
          %s3507 = ssub.s32 4096, 4096
          %3508 = vsyncadd %s3498, %s3507
          %s3509 = smul.addr %s3505, 2
          %s3510 = smul.addr %s30, 32
          %s3511 = sadd.s32 %s3509, %s3510
          %s3512 = smul.addr %s3511, 128
          %s3513 = scalar_lea.hbm %s12, %s3512
          %s3514 = sshll.u32 %s3501, 4
          %s3515 = int_to_ptr.vmem [resolvable:$true] %s3514
          %3520 = dma.vmem_to_hbm [thread:$0]  %s3515, 4096, %s3513, %s3498, 128, 128, 8
        $region88: #{bottleneck_forward.1} parent=67 // pred_fallthru
          _
      $region68: #{bottleneck_forward.1} parent=5 // pred_fallthru
        _
      %p3521 = scmp.le.s32.totalorder 2, %s21
      // Predicated region
      $region89: #{bottleneck_forward.1} parent=5 // pred_check
        %p3522 = pneg %p3521
      $region90: #{bottleneck_forward.1} parent=5 // pred_check_branch
        %3524 = sbr.rel (%p3522) target = $region92
      $region91: #{bottleneck_forward.1} parent=5 // pred_region
        %s3525 = ssub.s32 %s21, 2
        // Predicated region
        $region93: #{bottleneck_forward.1} parent=91 // pred_check
          %p3526 = pneg %p353
        $region94: #{bottleneck_forward.1} parent=91 // pred_check_branch
          %3528 = sbr.rel (%p3526) target = $region96
        $region95: #{bottleneck_forward.1} parent=91 // pred_region
          %s3529 = sand.u32 %s338, 1
          %s3530 = scalar_lea.sflag [#allocation4], %s3529
          %s3531 = sand.u32 %s338, 1
          %s3532 = smul.addr %s3531, 256
          %s3533 = scalar_lea.vmem [#allocation3], %s3532
          %3534 = dma.done %s3530, 4096
        $region96: #{bottleneck_forward.1} parent=91 // pred_fallthru
          _
      $region92: #{bottleneck_forward.1} parent=5 // pred_fallthru
        _
    $region6: #{bottleneck_forward.1} parent=1 // loop_footer
      %s25 = sadd.s32 1, %s21
    $region7: #{bottleneck_forward.1} parent=1 // loop_footer_branch
      %20 = sbr.rel target = $region3
    $region8: #{bottleneck_forward.1} parent=1 // loop_exit
      _
    %3535 = vsyncpa [#allocation4], 1
    %s3536 = scalar_lea.sflag [#allocation4], 1
    %3537 = vsyncpa %s3536, 1

</llo_original>
